<compile_context>
chip_gen: v6e
topology: v6e:2x2x1
jax: 0.10.0
libtpu: 0.0.40
codegen_flags: <defaults>
</compile_context>

<pallas_src>
import jax
import jax.numpy as jnp
from jax.experimental import pallas as pl
from jax.experimental.pallas import tpu as pltpu

N_FEATURE = 26
TILE_B = 512  # batch tile (multiple of 8 sublanes; review suggests 512+)


def _round_up(n, m):
    return ((n + m - 1) // m) * m


def _mish(x):
    # mish(x) = x * tanh(softplus(x)) = x * t / (t + 2),  t = e*(e+2), e = exp(x)
    # 1 EUP exp + 1 approx reciprocal instead of exp + log1p + tanh.
    e = jnp.exp(x)
    t = e * (e + 2.0)
    y = x * t * pl.reciprocal(t + 2.0, approx=True)
    # Guard: for large x, t -> inf and y -> inf*0 = NaN; mish(x) ~= x there.
    return jnp.where(x > 20.0, x, y)


def dnn_kernel(x_ref,
               w1_ref, b1_ref,
               w2_ref, b2_ref,
               w3_ref, b3_ref,
               w4_ref, b4_ref,
               wc1_ref, bc1_ref,
               wc2_ref, bc2_ref,
               out_ref):
    f32 = jnp.float32
    bf16 = jnp.bfloat16

    x = x_ref[...].astype(bf16)

    # fc_reconstruct (Dropouts are eval-mode identities)
    h = jnp.dot(x, w1_ref[...], preferred_element_type=f32) + b1_ref[...]
    h = _mish(h)                                                     # Mish
    h = jnp.dot(h.astype(bf16), w2_ref[...], preferred_element_type=f32) + b2_ref[...]
    h = jnp.maximum(h, 0.0)                                          # ReLU
    h = jnp.dot(h.astype(bf16), w3_ref[...], preferred_element_type=f32) + b3_ref[...]
    h = jnp.maximum(h, 0.0)                                          # ReLU
    h = jnp.dot(h.astype(bf16), w4_ref[...], preferred_element_type=f32) + b4_ref[...]
    feature = _mish(h)                                               # Mish

    # classifier
    c = jnp.dot(feature.astype(bf16), wc1_ref[...], preferred_element_type=f32) + bc1_ref[...]
    c = _mish(c)                                                     # Mish

    # classifier.2 (16 -> 1): VPU multiply + sublane reduce instead of a tiny
    # N=1 MXU matmul; result laid out lane-dense (batch along lanes).
    ct = c.T                                                # (16, TB)
    w = wc2_ref[...].astype(f32)                            # (16, 1)
    row = jnp.sum(ct * w, axis=0, keepdims=True) + bc2_ref[...]   # (1, TB)

    out_ref[0] = row.astype(out_ref.dtype)                  # out block: (1, 1, TB)


def dnn_forward(x, params, tile_b=TILE_B):
    """x: (B, N_FEATURE) float32.  params: dict of (in,out) weights and (1,out) biases."""
    B = x.shape[0]
    TB = min(tile_b, _round_up(max(B, 1), 8))
    B_pad = _round_up(B, TB)
    if B_pad != B:
        x = jnp.pad(x, ((0, B_pad - B), (0, 0)))
    num_tiles = B_pad // TB

    bf16 = jnp.bfloat16
    args = (
        x,
        params["w1"].astype(bf16), params["b1"],
        params["w2"].astype(bf16), params["b2"],
        params["w3"].astype(bf16), params["b3"],
        params["w4"].astype(bf16), params["b4"],
        params["wc1"].astype(bf16), params["bc1"],
        params["wc2"].astype(bf16), params["bc2"],
    )

    def resident_spec(shape):
        # Whole array, same block every grid step -> stays resident in VMEM.
        return pl.BlockSpec(shape, lambda i: (0, 0))

    in_specs = [pl.BlockSpec((TB, N_FEATURE), lambda i: (i, 0))]
    in_specs += [resident_spec(a.shape) for a in args[1:]]

    out = pl.pallas_call(
        dnn_kernel,
        out_shape=jax.ShapeDtypeStruct((num_tiles, 1, TB), jnp.float32),
        grid_spec=pltpu.PrefetchScalarGridSpec(
            num_scalar_prefetch=0,
            grid=(num_tiles,),
            in_specs=in_specs,
            out_specs=pl.BlockSpec((1, 1, TB), lambda i: (i, 0, 0)),
        ),
        compiler_params=pltpu.CompilerParams(
            dimension_semantics=("parallel",)),
    )(*args)

    return out.reshape(B_pad, 1)[:B]


def init_params(key, n_feature=N_FEATURE):
    """Deterministic init mimicking PyTorch Linear (uniform +/- 1/sqrt(fan_in))."""
    dims = [
        ("1", n_feature, 128),
        ("2", 128, 64),
        ("3", 64, 32),
        ("4", 32, n_feature),
        ("c1", n_feature, 16),
        ("c2", 16, 1),
    ]
    params = {}
    for name, fan_in, fan_out in dims:
        key, kw, kb = jax.random.split(key, 3)
        bound = 1.0 / jnp.sqrt(fan_in)
        params[f"w{name}"] = jax.random.uniform(
            kw, (fan_in, fan_out), jnp.float32, -bound, bound)
        params[f"b{name}"] = jax.random.uniform(
            kb, (1, fan_out), jnp.float32, -bound, bound)
    return params


def dnn_forward_ref(x, params):
    """Pure-JAX f32 reference (PyTorch semantics) for correctness checking."""
    def mish(v):
        return v * jnp.tanh(jnp.log1p(jnp.exp(v)))
    h = mish(x @ params["w1"] + params["b1"])
    h = jnp.maximum(h @ params["w2"] + params["b2"], 0.0)
    h = jnp.maximum(h @ params["w3"] + params["b3"], 0.0)
    feat = mish(h @ params["w4"] + params["b4"])
    c = mish(feat @ params["wc1"] + params["bc1"])
    return c @ params["wc2"] + params["bc2"]


if __name__ == "__main__":
    key = jax.random.PRNGKey(0)
    key, kx = jax.random.split(key)
    B = 1000  # not a multiple of the tile -> exercises padding + 2 grid steps
    x = jax.random.normal(kx, (B, N_FEATURE), jnp.float32)
    params = init_params(key)

    out = dnn_forward(x, params)
    out = jax.block_until_ready(out)

    ref = dnn_forward_ref(x, params)
    assert out.shape == (B, 1), out.shape
    # Tolerance accounts for bf16 matmul inputs + approximate reciprocal in Mish.
    assert jnp.allclose(out, ref, atol=3e-2, rtol=3e-2), (
        f"max abs err {jnp.max(jnp.abs(out - ref))}")
    print("KERNEL_OK")
</pallas_src>

<mosaic_0001>
module attributes {stable_mosaic.version = 11 : i64} {
  func.func @dnn_kernel(%arg0: i32, %arg1: memref<512x26xf32, #tpu.memory_space<vmem>>, %arg2: memref<26x128xbf16, #tpu.memory_space<vmem>>, %arg3: memref<1x128xf32, #tpu.memory_space<vmem>>, %arg4: memref<128x64xbf16, #tpu.memory_space<vmem>>, %arg5: memref<1x64xf32, #tpu.memory_space<vmem>>, %arg6: memref<64x32xbf16, #tpu.memory_space<vmem>>, %arg7: memref<1x32xf32, #tpu.memory_space<vmem>>, %arg8: memref<32x26xbf16, #tpu.memory_space<vmem>>, %arg9: memref<1x26xf32, #tpu.memory_space<vmem>>, %arg10: memref<26x16xbf16, #tpu.memory_space<vmem>>, %arg11: memref<1x16xf32, #tpu.memory_space<vmem>>, %arg12: memref<16x1xbf16, #tpu.memory_space<vmem>>, %arg13: memref<1x1xf32, #tpu.memory_space<vmem>>, %arg14: memref<1x1x512xf32, #tpu.memory_space<vmem>>) attributes {dimension_semantics = [#tpu.dimension_semantics<parallel>], iteration_bounds = array<i64: 2>, scalar_prefetch = 0 : i64, scratch_operands = 0 : i64, tpu.core_type = #tpu.core_type<tc>, window_params = [{transform_indices = @transform_0, window_bounds = array<i64: 512, 26>}, {pipeline_mode = #tpu.pipeline_mode<synchronous>, transform_indices = @transform_1, window_bounds = array<i64: 26, 128>}, {pipeline_mode = #tpu.pipeline_mode<synchronous>, transform_indices = @transform_2, window_bounds = array<i64: 1, 128>}, {pipeline_mode = #tpu.pipeline_mode<synchronous>, transform_indices = @transform_3, window_bounds = array<i64: 128, 64>}, {pipeline_mode = #tpu.pipeline_mode<synchronous>, transform_indices = @transform_4, window_bounds = array<i64: 1, 64>}, {pipeline_mode = #tpu.pipeline_mode<synchronous>, transform_indices = @transform_5, window_bounds = array<i64: 64, 32>}, {pipeline_mode = #tpu.pipeline_mode<synchronous>, transform_indices = @transform_6, window_bounds = array<i64: 1, 32>}, {pipeline_mode = #tpu.pipeline_mode<synchronous>, transform_indices = @transform_7, window_bounds = array<i64: 32, 26>}, {pipeline_mode = #tpu.pipeline_mode<synchronous>, transform_indices = @transform_8, window_bounds = array<i64: 1, 26>}, {pipeline_mode = #tpu.pipeline_mode<synchronous>, transform_indices = @transform_9, window_bounds = array<i64: 26, 16>}, {pipeline_mode = #tpu.pipeline_mode<synchronous>, transform_indices = @transform_10, window_bounds = array<i64: 1, 16>}, {pipeline_mode = #tpu.pipeline_mode<synchronous>, transform_indices = @transform_11, window_bounds = array<i64: 16, 1>}, {pipeline_mode = #tpu.pipeline_mode<synchronous>, transform_indices = @transform_12, window_bounds = array<i64: 1, 1>}, {transform_indices = @transform_13, window_bounds = array<i64: 1, 1, 512>}]} {
    %c0 = arith.constant 0 : index
    %c0_0 = arith.constant 0 : index
    %0 = vector.load %arg1[%c0, %c0_0] : memref<512x26xf32, #tpu.memory_space<vmem>>, vector<512x26xf32>
    %1 = arith.truncf %0 : vector<512x26xf32> to vector<512x26xbf16>
    %c0_1 = arith.constant 0 : index
    %c0_2 = arith.constant 0 : index
    %2 = vector.load %arg2[%c0_1, %c0_2] : memref<26x128xbf16, #tpu.memory_space<vmem>>, vector<26x128xbf16>
    %cst = arith.constant dense<0.000000e+00> : vector<512x128xf32>
    %3 = tpu.matmul %1, %2, %cst {dimension_numbers = #tpu.dot_dimension_numbers<[1], [0], [0], [1], [0, 0, 1, 1], [], []>} : vector<512x26xbf16>, vector<26x128xbf16>, vector<512x128xf32> -> vector<512x128xf32>
    %c0_3 = arith.constant 0 : index
    %c0_4 = arith.constant 0 : index
    %4 = vector.load %arg3[%c0_3, %c0_4] : memref<1x128xf32, #tpu.memory_space<vmem>>, vector<1x128xf32>
    %5 = vector.broadcast %4 : vector<1x128xf32> to vector<512x128xf32>
    %6 = arith.addf %3, %5 : vector<512x128xf32>
    %7 = math.exp %6 : vector<512x128xf32>
    %cst_5 = arith.constant 2.000000e+00 : f32
    %8 = vector.broadcast %cst_5 : f32 to vector<512x128xf32>
    %9 = arith.addf %7, %8 : vector<512x128xf32>
    %10 = arith.mulf %7, %9 : vector<512x128xf32>
    %11 = arith.mulf %6, %10 : vector<512x128xf32>
    %cst_6 = arith.constant 2.000000e+00 : f32
    %12 = vector.broadcast %cst_6 : f32 to vector<512x128xf32>
    %13 = arith.addf %10, %12 : vector<512x128xf32>
    %14 = tpu.reciprocal %13 {approx = true} : vector<512x128xf32> -> vector<512x128xf32>
    %15 = arith.mulf %11, %14 : vector<512x128xf32>
    %cst_7 = arith.constant 2.000000e+01 : f32
    %16 = vector.broadcast %cst_7 : f32 to vector<512x128xf32>
    %17 = arith.cmpf ogt, %6, %16 : vector<512x128xf32>
    %18 = arith.select %17, %6, %15 : vector<512x128xi1>, vector<512x128xf32>
    %19 = arith.truncf %18 : vector<512x128xf32> to vector<512x128xbf16>
    %c0_8 = arith.constant 0 : index
    %c0_9 = arith.constant 0 : index
    %20 = vector.load %arg4[%c0_8, %c0_9] : memref<128x64xbf16, #tpu.memory_space<vmem>>, vector<128x64xbf16>
    %cst_10 = arith.constant dense<0.000000e+00> : vector<512x64xf32>
    %21 = tpu.matmul %19, %20, %cst_10 {dimension_numbers = #tpu.dot_dimension_numbers<[1], [0], [0], [1], [0, 0, 1, 1], [], []>} : vector<512x128xbf16>, vector<128x64xbf16>, vector<512x64xf32> -> vector<512x64xf32>
    %c0_11 = arith.constant 0 : index
    %c0_12 = arith.constant 0 : index
    %22 = vector.load %arg5[%c0_11, %c0_12] : memref<1x64xf32, #tpu.memory_space<vmem>>, vector<1x64xf32>
    %23 = vector.broadcast %22 : vector<1x64xf32> to vector<512x64xf32>
    %24 = arith.addf %21, %23 : vector<512x64xf32>
    %cst_13 = arith.constant 0.000000e+00 : f32
    %25 = vector.broadcast %cst_13 : f32 to vector<512x64xf32>
    %26 = arith.maximumf %24, %25 : vector<512x64xf32>
    %27 = arith.truncf %26 : vector<512x64xf32> to vector<512x64xbf16>
    %c0_14 = arith.constant 0 : index
    %c0_15 = arith.constant 0 : index
    %28 = vector.load %arg6[%c0_14, %c0_15] : memref<64x32xbf16, #tpu.memory_space<vmem>>, vector<64x32xbf16>
    %cst_16 = arith.constant dense<0.000000e+00> : vector<512x32xf32>
    %29 = tpu.matmul %27, %28, %cst_16 {dimension_numbers = #tpu.dot_dimension_numbers<[1], [0], [0], [1], [0, 0, 1, 1], [], []>} : vector<512x64xbf16>, vector<64x32xbf16>, vector<512x32xf32> -> vector<512x32xf32>
    %c0_17 = arith.constant 0 : index
    %c0_18 = arith.constant 0 : index
    %30 = vector.load %arg7[%c0_17, %c0_18] : memref<1x32xf32, #tpu.memory_space<vmem>>, vector<1x32xf32>
    %31 = vector.broadcast %30 : vector<1x32xf32> to vector<512x32xf32>
    %32 = arith.addf %29, %31 : vector<512x32xf32>
    %cst_19 = arith.constant 0.000000e+00 : f32
    %33 = vector.broadcast %cst_19 : f32 to vector<512x32xf32>
    %34 = arith.maximumf %32, %33 : vector<512x32xf32>
    %35 = arith.truncf %34 : vector<512x32xf32> to vector<512x32xbf16>
    %c0_20 = arith.constant 0 : index
    %c0_21 = arith.constant 0 : index
    %36 = vector.load %arg8[%c0_20, %c0_21] : memref<32x26xbf16, #tpu.memory_space<vmem>>, vector<32x26xbf16>
    %cst_22 = arith.constant dense<0.000000e+00> : vector<512x26xf32>
    %37 = tpu.matmul %35, %36, %cst_22 {dimension_numbers = #tpu.dot_dimension_numbers<[1], [0], [0], [1], [0, 0, 1, 1], [], []>} : vector<512x32xbf16>, vector<32x26xbf16>, vector<512x26xf32> -> vector<512x26xf32>
    %c0_23 = arith.constant 0 : index
    %c0_24 = arith.constant 0 : index
    %38 = vector.load %arg9[%c0_23, %c0_24] : memref<1x26xf32, #tpu.memory_space<vmem>>, vector<1x26xf32>
    %39 = vector.broadcast %38 : vector<1x26xf32> to vector<512x26xf32>
    %40 = arith.addf %37, %39 : vector<512x26xf32>
    %41 = math.exp %40 : vector<512x26xf32>
    %cst_25 = arith.constant 2.000000e+00 : f32
    %42 = vector.broadcast %cst_25 : f32 to vector<512x26xf32>
    %43 = arith.addf %41, %42 : vector<512x26xf32>
    %44 = arith.mulf %41, %43 : vector<512x26xf32>
    %45 = arith.mulf %40, %44 : vector<512x26xf32>
    %cst_26 = arith.constant 2.000000e+00 : f32
    %46 = vector.broadcast %cst_26 : f32 to vector<512x26xf32>
    %47 = arith.addf %44, %46 : vector<512x26xf32>
    %48 = tpu.reciprocal %47 {approx = true} : vector<512x26xf32> -> vector<512x26xf32>
    %49 = arith.mulf %45, %48 : vector<512x26xf32>
    %cst_27 = arith.constant 2.000000e+01 : f32
    %50 = vector.broadcast %cst_27 : f32 to vector<512x26xf32>
    %51 = arith.cmpf ogt, %40, %50 : vector<512x26xf32>
    %52 = arith.select %51, %40, %49 : vector<512x26xi1>, vector<512x26xf32>
    %53 = arith.truncf %52 : vector<512x26xf32> to vector<512x26xbf16>
    %c0_28 = arith.constant 0 : index
    %c0_29 = arith.constant 0 : index
    %54 = vector.load %arg10[%c0_28, %c0_29] : memref<26x16xbf16, #tpu.memory_space<vmem>>, vector<26x16xbf16>
    %cst_30 = arith.constant dense<0.000000e+00> : vector<512x16xf32>
    %55 = tpu.matmul %53, %54, %cst_30 {dimension_numbers = #tpu.dot_dimension_numbers<[1], [0], [0], [1], [0, 0, 1, 1], [], []>} : vector<512x26xbf16>, vector<26x16xbf16>, vector<512x16xf32> -> vector<512x16xf32>
    %c0_31 = arith.constant 0 : index
    %c0_32 = arith.constant 0 : index
    %56 = vector.load %arg11[%c0_31, %c0_32] : memref<1x16xf32, #tpu.memory_space<vmem>>, vector<1x16xf32>
    %57 = vector.broadcast %56 : vector<1x16xf32> to vector<512x16xf32>
    %58 = arith.addf %55, %57 : vector<512x16xf32>
    %59 = math.exp %58 : vector<512x16xf32>
    %cst_33 = arith.constant 2.000000e+00 : f32
    %60 = vector.broadcast %cst_33 : f32 to vector<512x16xf32>
    %61 = arith.addf %59, %60 : vector<512x16xf32>
    %62 = arith.mulf %59, %61 : vector<512x16xf32>
    %63 = arith.mulf %58, %62 : vector<512x16xf32>
    %cst_34 = arith.constant 2.000000e+00 : f32
    %64 = vector.broadcast %cst_34 : f32 to vector<512x16xf32>
    %65 = arith.addf %62, %64 : vector<512x16xf32>
    %66 = tpu.reciprocal %65 {approx = true} : vector<512x16xf32> -> vector<512x16xf32>
    %67 = arith.mulf %63, %66 : vector<512x16xf32>
    %cst_35 = arith.constant 2.000000e+01 : f32
    %68 = vector.broadcast %cst_35 : f32 to vector<512x16xf32>
    %69 = arith.cmpf ogt, %58, %68 : vector<512x16xf32>
    %70 = arith.select %69, %58, %67 : vector<512x16xi1>, vector<512x16xf32>
    %71 = tpu.transpose %70, [1, 0] : vector<512x16xf32> -> vector<16x512xf32>
    %c0_36 = arith.constant 0 : index
    %c0_37 = arith.constant 0 : index
    %72 = vector.load %arg12[%c0_36, %c0_37] : memref<16x1xbf16, #tpu.memory_space<vmem>>, vector<16x1xbf16>
    %73 = arith.extf %72 : vector<16x1xbf16> to vector<16x1xf32>
    %74 = vector.broadcast %73 : vector<16x1xf32> to vector<16x512xf32>
    %75 = arith.mulf %71, %74 : vector<16x512xf32>
    %cst_38 = arith.constant dense<0.000000e+00> : vector<512xf32>
    %76 = vector.multi_reduction <add>, %75, %cst_38 [0] : vector<16x512xf32> to vector<512xf32>
    %77 = vector.shape_cast %76 : vector<512xf32> to vector<1x512xf32>
    %c0_39 = arith.constant 0 : index
    %c0_40 = arith.constant 0 : index
    %78 = vector.load %arg13[%c0_39, %c0_40] : memref<1x1xf32, #tpu.memory_space<vmem>>, vector<1x1xf32>
    %79 = vector.broadcast %78 : vector<1x1xf32> to vector<1x512xf32>
    %80 = arith.addf %77, %79 : vector<1x512xf32>
    %c0_41 = arith.constant 0 : index
    %c0_42 = arith.constant 0 : index
    %c0_43 = arith.constant 0 : index
    %81 = vector.load %arg14[%c0_41, %c0_42, %c0_43] : memref<1x1x512xf32, #tpu.memory_space<vmem>>, vector<1x1x512xf32>
    %82 = vector.shape_cast %81 : vector<1x1x512xf32> to vector<1x512xf32>
    %83 = vector.shape_cast %80 : vector<1x512xf32> to vector<1x1x512xf32>
    tpu.vector_store %arg14[%c0_41, %c0_42, %c0_43], %83 {strides = array<i32>} : memref<1x1x512xf32, #tpu.memory_space<vmem>>, vector<1x1x512xf32>,
    return
  }
  func.func @transform_0(%arg0: i32) -> (i32, i32) {
    %c0_i32 = arith.constant 0 : i32
    %c0_i32_0 = arith.constant 0 : i32
    return %arg0, %c0_i32 : i32, i32
  }
  func.func @transform_1(%arg0: i32) -> (i32, i32) {
    %c0_i32 = arith.constant 0 : i32
    %c0_i32_0 = arith.constant 0 : i32
    %c0_i32_1 = arith.constant 0 : i32
    return %c0_i32, %c0_i32_0 : i32, i32
  }
  func.func @transform_2(%arg0: i32) -> (i32, i32) {
    %c0_i32 = arith.constant 0 : i32
    %c0_i32_0 = arith.constant 0 : i32
    %c0_i32_1 = arith.constant 0 : i32
    return %c0_i32, %c0_i32_0 : i32, i32
  }
  func.func @transform_3(%arg0: i32) -> (i32, i32) {
    %c0_i32 = arith.constant 0 : i32
    %c0_i32_0 = arith.constant 0 : i32
    %c0_i32_1 = arith.constant 0 : i32
    return %c0_i32, %c0_i32_0 : i32, i32
  }
  func.func @transform_4(%arg0: i32) -> (i32, i32) {
    %c0_i32 = arith.constant 0 : i32
    %c0_i32_0 = arith.constant 0 : i32
    %c0_i32_1 = arith.constant 0 : i32
    return %c0_i32, %c0_i32_0 : i32, i32
  }
  func.func @transform_5(%arg0: i32) -> (i32, i32) {
    %c0_i32 = arith.constant 0 : i32
    %c0_i32_0 = arith.constant 0 : i32
    %c0_i32_1 = arith.constant 0 : i32
    return %c0_i32, %c0_i32_0 : i32, i32
  }
  func.func @transform_6(%arg0: i32) -> (i32, i32) {
    %c0_i32 = arith.constant 0 : i32
    %c0_i32_0 = arith.constant 0 : i32
    %c0_i32_1 = arith.constant 0 : i32
    return %c0_i32, %c0_i32_0 : i32, i32
  }
  func.func @transform_7(%arg0: i32) -> (i32, i32) {
    %c0_i32 = arith.constant 0 : i32
    %c0_i32_0 = arith.constant 0 : i32
    %c0_i32_1 = arith.constant 0 : i32
    return %c0_i32, %c0_i32_0 : i32, i32
  }
  func.func @transform_8(%arg0: i32) -> (i32, i32) {
    %c0_i32 = arith.constant 0 : i32
    %c0_i32_0 = arith.constant 0 : i32
    %c0_i32_1 = arith.constant 0 : i32
    return %c0_i32, %c0_i32_0 : i32, i32
  }
  func.func @transform_9(%arg0: i32) -> (i32, i32) {
    %c0_i32 = arith.constant 0 : i32
    %c0_i32_0 = arith.constant 0 : i32
    %c0_i32_1 = arith.constant 0 : i32
    return %c0_i32, %c0_i32_0 : i32, i32
  }
  func.func @transform_10(%arg0: i32) -> (i32, i32) {
    %c0_i32 = arith.constant 0 : i32
    %c0_i32_0 = arith.constant 0 : i32
    %c0_i32_1 = arith.constant 0 : i32
    return %c0_i32, %c0_i32_0 : i32, i32
  }
  func.func @transform_11(%arg0: i32) -> (i32, i32) {
    %c0_i32 = arith.constant 0 : i32
    %c0_i32_0 = arith.constant 0 : i32
    %c0_i32_1 = arith.constant 0 : i32
    return %c0_i32, %c0_i32_0 : i32, i32
  }
  func.func @transform_12(%arg0: i32) -> (i32, i32) {
    %c0_i32 = arith.constant 0 : i32
    %c0_i32_0 = arith.constant 0 : i32
    %c0_i32_1 = arith.constant 0 : i32
    return %c0_i32, %c0_i32_0 : i32, i32
  }
  func.func @transform_13(%arg0: i32) -> (i32, i32, i32) {
    %c0_i32 = arith.constant 0 : i32
    %c0_i32_0 = arith.constant 0 : i32
    %c0_i32_1 = arith.constant 0 : i32
    return %arg0, %c0_i32, %c0_i32_0 : i32, i32, i32
  }
}

</mosaic_0001>

<llo_original>
// kernel: tpu_custom_call.1
$region0: #{tpu_custom_call.1}
  #allocation0 [shape = 'u32[]', space=smem, size = 0x4, offset = 0x4, fixed_abs, tag = 'smem constant byte address 0x4 - core index']
  #allocation1 [shape = 'u32[144,128]{1,0:T(1,128)}', space=vmem, size = 0x12000, scoped, tag = 'internal scratch']
  #allocation2 [shape = 'f32[1,1]{1,0:T(1,128)S(1)}', space=vmem, size = 0x200, scoped, tag = 'scoped memory for tpu_custom_call.1']
  %s0 = inlined_call_operand.vmem [shape: f32[1024,26], index: 0, kind: input, shape index: {}]
  %s1 = inlined_call_operand.vmem [shape: bf16[26,128], index: 1, kind: input, shape index: {}]
  %s2 = inlined_call_operand.vmem [shape: f32[1,128], index: 2, kind: input, shape index: {}]
  %s3 = inlined_call_operand.vmem [shape: bf16[128,64], index: 3, kind: input, shape index: {}]
  %s4 = inlined_call_operand.vmem [shape: f32[1,64], index: 4, kind: input, shape index: {}]
  %s5 = inlined_call_operand.vmem [shape: bf16[64,32], index: 5, kind: input, shape index: {}]
  %s6 = inlined_call_operand.vmem [shape: f32[1,32], index: 6, kind: input, shape index: {}]
  %s7 = inlined_call_operand.vmem [shape: bf16[32,26], index: 7, kind: input, shape index: {}]
  %s8 = inlined_call_operand.vmem [shape: f32[1,26], index: 8, kind: input, shape index: {}]
  %s9 = inlined_call_operand.vmem [shape: bf16[26,16], index: 9, kind: input, shape index: {}]
  %s10 = inlined_call_operand.vmem [shape: f32[1,16], index: 10, kind: input, shape index: {}]
  %s11 = inlined_call_operand.vmem [shape: bf16[16,1], index: 11, kind: input, shape index: {}]
  %s12 = inlined_call_operand.<no memory space> [shape: f32[1,1], index: 12, kind: input, shape index: {}]
  %s13 = inlined_call_operand.hbm [shape: f32[2,1,512], index: 13, kind: output, shape index: {}]
  %s14 = sld [smem:[#allocation0]]
  $region85: #{tpu_custom_call.1} parent=0
    _
  %s16 = ssub.s32 1, %s14
  %s17 = scalar_select 0, %s16, %s14
  %v18 = vstv %s12
  %19 = vst [vmem:[#allocation2] sm:$0x1] %v18
  $region1: #{tpu_custom_call.1} parent=0
    #allocation3 [shape = 'u8[4096]{0}', space=vmem, size = 0x1000, scoped, tag = 'output window, operand 0']
    #allocation4 [shape = 's32[2]{0}', space=sflag, size = 0x8, scoped, tag = 'scoped memory for tpu_custom_call.1']
    %20 = vsyncpa [#allocation4], 0
    %s21 = scalar_lea.sflag [#allocation4], 1
    %22 = vsyncpa %s21, 0
    loop: start=0, step=1, limit=4
    $region2: #{tpu_custom_call.1} parent=1 // loop_pre_header
      _
    $region3: #{tpu_custom_call.1} parent=1 // loop_header
      %s24 = sphi 0, %s28
      %p25 = scmp.ge.s32.totalorder %s24, 4
      %s34 = sphi 0, %s36
      %s37 = sphi 0, %s34
      %s38 = sphi 0, %s37
      %s54 = sphi 0, %s38
      %s58 = sphi 0, %s58
      %s60 = sphi 0, %s58
      %s61 = sphi 0, %s60
      %s75 = sphi 0, %s61
      %s79 = sphi 0, %s79
      %s81 = sphi 0, %s79
      %s82 = sphi 0, %s81
      %s96 = sphi 0, %s82
      %s100 = sphi 0, %s100
      %s102 = sphi 0, %s100
      %s103 = sphi 0, %s102
      %s117 = sphi 0, %s103
      %s121 = sphi 0, %s121
      %s123 = sphi 0, %s121
      %s124 = sphi 0, %s123
      %s138 = sphi 0, %s124
      %s142 = sphi 0, %s142
      %s144 = sphi 0, %s142
      %s145 = sphi 0, %s144
      %s159 = sphi 0, %s145
      %s163 = sphi 0, %s163
      %s165 = sphi 0, %s163
      %s166 = sphi 0, %s165
      %s180 = sphi 0, %s166
      %s184 = sphi 0, %s184
      %s186 = sphi 0, %s184
      %s187 = sphi 0, %s186
      %s201 = sphi 0, %s187
      %s205 = sphi 0, %s205
      %s207 = sphi 0, %s205
      %s208 = sphi 0, %s207
      %s222 = sphi 0, %s208
      %s226 = sphi 0, %s226
      %s228 = sphi 0, %s226
      %s229 = sphi 0, %s228
      %s243 = sphi 0, %s229
      %s247 = sphi 0, %s247
      %s249 = sphi 0, %s247
      %s250 = sphi 0, %s249
      %s264 = sphi 0, %s250
      %s268 = sphi 0, %s268
      %s270 = sphi 0, %s268
      %s271 = sphi 0, %s270
      %s285 = sphi 0, %s271
      %s289 = sphi 0, %s289
      %s291 = sphi 0, %s289
      %s292 = sphi 0, %s291
      %s306 = sphi 0, %s292
      %s312 = sphi 0, %s314
      %s315 = sphi 0, %s312
      %s316 = sphi 0, %s315
      %s332 = sphi 0, %s316
    $region4: #{tpu_custom_call.1} parent=1 // loop_header_branch
      %27 = sbr.rel (%p25) target = $region8
    $region5: #{tpu_custom_call.1} parent=1 // loop_body
      %s29 = ssub.s32 %s24, 1
      %s30 = ssub.s32 %s24, 2
      %s31 = sadd.s32 %s24, 1
      %s32 = ssub.s32 %s24, %s31
      %p33 = scmp.eq.s32.totalorder %s32, 0
      %s35 = sadd.s32 %s34, 1
      %s36 = scalar_select %p33, %s34, %s35
      %p39 = pneg %p33
      %p40 = scmp.eq.s32.totalorder %s24, 1
      %p41 = por %p39, %p40
      %p42 = scmp.ne.s32.totalorder %s34, %s37
      %p43 = scmp.eq.s32.totalorder %s24, 0
      %p44 = por %p42, %p43
      %p45 = scmp.ne.s32.totalorder %s34, %s37
      %p46 = scmp.eq.s32.totalorder %s29, 1
      %p47 = por %p45, %p46
      %p48 = scmp.ne.s32.totalorder %s37, %s38
      %p49 = scmp.eq.s32.totalorder %s29, 0
      %p50 = por %p48, %p49
      %p51 = scmp.ne.s32.totalorder %s37, %s38
      %p52 = scmp.eq.s32.totalorder %s30, 1
      %p53 = por %p51, %p52
      %p55 = scmp.ne.s32.totalorder %s38, %s54
      %p56 = scmp.eq.s32.totalorder %s30, 0
      %p57 = por %p55, %p56
      %s59 = sadd.s32 %s58, 1
      %p62 = scmp.eq.s32.totalorder %s24, 1
      %p63 = scmp.ne.s32.totalorder %s58, %s60
      %p64 = scmp.eq.s32.totalorder %s24, 0
      %p65 = por %p63, %p64
      %p66 = scmp.ne.s32.totalorder %s58, %s60
      %p67 = scmp.eq.s32.totalorder %s29, 1
      %p68 = por %p66, %p67
      %p69 = scmp.ne.s32.totalorder %s60, %s61
      %p70 = scmp.eq.s32.totalorder %s29, 0
      %p71 = por %p69, %p70
      %p72 = scmp.ne.s32.totalorder %s60, %s61
      %p73 = scmp.eq.s32.totalorder %s30, 1
      %p74 = por %p72, %p73
      %p76 = scmp.ne.s32.totalorder %s61, %s75
      %p77 = scmp.eq.s32.totalorder %s30, 0
      %p78 = por %p76, %p77
      %s80 = sadd.s32 %s79, 1
      %p83 = scmp.eq.s32.totalorder %s24, 1
      %p84 = scmp.ne.s32.totalorder %s79, %s81
      %p85 = scmp.eq.s32.totalorder %s24, 0
      %p86 = por %p84, %p85
      %p87 = scmp.ne.s32.totalorder %s79, %s81
      %p88 = scmp.eq.s32.totalorder %s29, 1
      %p89 = por %p87, %p88
      %p90 = scmp.ne.s32.totalorder %s81, %s82
      %p91 = scmp.eq.s32.totalorder %s29, 0
      %p92 = por %p90, %p91
      %p93 = scmp.ne.s32.totalorder %s81, %s82
      %p94 = scmp.eq.s32.totalorder %s30, 1
      %p95 = por %p93, %p94
      %p97 = scmp.ne.s32.totalorder %s82, %s96
      %p98 = scmp.eq.s32.totalorder %s30, 0
      %p99 = por %p97, %p98
      %s101 = sadd.s32 %s100, 1
      %p104 = scmp.eq.s32.totalorder %s24, 1
      %p105 = scmp.ne.s32.totalorder %s100, %s102
      %p106 = scmp.eq.s32.totalorder %s24, 0
      %p107 = por %p105, %p106
      %p108 = scmp.ne.s32.totalorder %s100, %s102
      %p109 = scmp.eq.s32.totalorder %s29, 1
      %p110 = por %p108, %p109
      %p111 = scmp.ne.s32.totalorder %s102, %s103
      %p112 = scmp.eq.s32.totalorder %s29, 0
      %p113 = por %p111, %p112
      %p114 = scmp.ne.s32.totalorder %s102, %s103
      %p115 = scmp.eq.s32.totalorder %s30, 1
      %p116 = por %p114, %p115
      %p118 = scmp.ne.s32.totalorder %s103, %s117
      %p119 = scmp.eq.s32.totalorder %s30, 0
      %p120 = por %p118, %p119
      %s122 = sadd.s32 %s121, 1
      %p125 = scmp.eq.s32.totalorder %s24, 1
      %p126 = scmp.ne.s32.totalorder %s121, %s123
      %p127 = scmp.eq.s32.totalorder %s24, 0
      %p128 = por %p126, %p127
      %p129 = scmp.ne.s32.totalorder %s121, %s123
      %p130 = scmp.eq.s32.totalorder %s29, 1
      %p131 = por %p129, %p130
      %p132 = scmp.ne.s32.totalorder %s123, %s124
      %p133 = scmp.eq.s32.totalorder %s29, 0
      %p134 = por %p132, %p133
      %p135 = scmp.ne.s32.totalorder %s123, %s124
      %p136 = scmp.eq.s32.totalorder %s30, 1
      %p137 = por %p135, %p136
      %p139 = scmp.ne.s32.totalorder %s124, %s138
      %p140 = scmp.eq.s32.totalorder %s30, 0
      %p141 = por %p139, %p140
      %s143 = sadd.s32 %s142, 1
      %p146 = scmp.eq.s32.totalorder %s24, 1
      %p147 = scmp.ne.s32.totalorder %s142, %s144
      %p148 = scmp.eq.s32.totalorder %s24, 0
      %p149 = por %p147, %p148
      %p150 = scmp.ne.s32.totalorder %s142, %s144
      %p151 = scmp.eq.s32.totalorder %s29, 1
      %p152 = por %p150, %p151
      %p153 = scmp.ne.s32.totalorder %s144, %s145
      %p154 = scmp.eq.s32.totalorder %s29, 0
      %p155 = por %p153, %p154
      %p156 = scmp.ne.s32.totalorder %s144, %s145
      %p157 = scmp.eq.s32.totalorder %s30, 1
      %p158 = por %p156, %p157
      %p160 = scmp.ne.s32.totalorder %s145, %s159
      %p161 = scmp.eq.s32.totalorder %s30, 0
      %p162 = por %p160, %p161
      %s164 = sadd.s32 %s163, 1
      %p167 = scmp.eq.s32.totalorder %s24, 1
      %p168 = scmp.ne.s32.totalorder %s163, %s165
      %p169 = scmp.eq.s32.totalorder %s24, 0
      %p170 = por %p168, %p169
      %p171 = scmp.ne.s32.totalorder %s163, %s165
      %p172 = scmp.eq.s32.totalorder %s29, 1
      %p173 = por %p171, %p172
      %p174 = scmp.ne.s32.totalorder %s165, %s166
      %p175 = scmp.eq.s32.totalorder %s29, 0
      %p176 = por %p174, %p175
      %p177 = scmp.ne.s32.totalorder %s165, %s166
      %p178 = scmp.eq.s32.totalorder %s30, 1
      %p179 = por %p177, %p178
      %p181 = scmp.ne.s32.totalorder %s166, %s180
      %p182 = scmp.eq.s32.totalorder %s30, 0
      %p183 = por %p181, %p182
      %s185 = sadd.s32 %s184, 1
      %p188 = scmp.eq.s32.totalorder %s24, 1
      %p189 = scmp.ne.s32.totalorder %s184, %s186
      %p190 = scmp.eq.s32.totalorder %s24, 0
      %p191 = por %p189, %p190
      %p192 = scmp.ne.s32.totalorder %s184, %s186
      %p193 = scmp.eq.s32.totalorder %s29, 1
      %p194 = por %p192, %p193
      %p195 = scmp.ne.s32.totalorder %s186, %s187
      %p196 = scmp.eq.s32.totalorder %s29, 0
      %p197 = por %p195, %p196
      %p198 = scmp.ne.s32.totalorder %s186, %s187
      %p199 = scmp.eq.s32.totalorder %s30, 1
      %p200 = por %p198, %p199
      %p202 = scmp.ne.s32.totalorder %s187, %s201
      %p203 = scmp.eq.s32.totalorder %s30, 0
      %p204 = por %p202, %p203
      %s206 = sadd.s32 %s205, 1
      %p209 = scmp.eq.s32.totalorder %s24, 1
      %p210 = scmp.ne.s32.totalorder %s205, %s207
      %p211 = scmp.eq.s32.totalorder %s24, 0
      %p212 = por %p210, %p211
      %p213 = scmp.ne.s32.totalorder %s205, %s207
      %p214 = scmp.eq.s32.totalorder %s29, 1
      %p215 = por %p213, %p214
      %p216 = scmp.ne.s32.totalorder %s207, %s208
      %p217 = scmp.eq.s32.totalorder %s29, 0
      %p218 = por %p216, %p217
      %p219 = scmp.ne.s32.totalorder %s207, %s208
      %p220 = scmp.eq.s32.totalorder %s30, 1
      %p221 = por %p219, %p220
      %p223 = scmp.ne.s32.totalorder %s208, %s222
      %p224 = scmp.eq.s32.totalorder %s30, 0
      %p225 = por %p223, %p224
      %s227 = sadd.s32 %s226, 1
      %p230 = scmp.eq.s32.totalorder %s24, 1
      %p231 = scmp.ne.s32.totalorder %s226, %s228
      %p232 = scmp.eq.s32.totalorder %s24, 0
      %p233 = por %p231, %p232
      %p234 = scmp.ne.s32.totalorder %s226, %s228
      %p235 = scmp.eq.s32.totalorder %s29, 1
      %p236 = por %p234, %p235
      %p237 = scmp.ne.s32.totalorder %s228, %s229
      %p238 = scmp.eq.s32.totalorder %s29, 0
      %p239 = por %p237, %p238
      %p240 = scmp.ne.s32.totalorder %s228, %s229
      %p241 = scmp.eq.s32.totalorder %s30, 1
      %p242 = por %p240, %p241
      %p244 = scmp.ne.s32.totalorder %s229, %s243
      %p245 = scmp.eq.s32.totalorder %s30, 0
      %p246 = por %p244, %p245
      %s248 = sadd.s32 %s247, 1
      %p251 = scmp.eq.s32.totalorder %s24, 1
      %p252 = scmp.ne.s32.totalorder %s247, %s249
      %p253 = scmp.eq.s32.totalorder %s24, 0
      %p254 = por %p252, %p253
      %p255 = scmp.ne.s32.totalorder %s247, %s249
      %p256 = scmp.eq.s32.totalorder %s29, 1
      %p257 = por %p255, %p256
      %p258 = scmp.ne.s32.totalorder %s249, %s250
      %p259 = scmp.eq.s32.totalorder %s29, 0
      %p260 = por %p258, %p259
      %p261 = scmp.ne.s32.totalorder %s249, %s250
      %p262 = scmp.eq.s32.totalorder %s30, 1
      %p263 = por %p261, %p262
      %p265 = scmp.ne.s32.totalorder %s250, %s264
      %p266 = scmp.eq.s32.totalorder %s30, 0
      %p267 = por %p265, %p266
      %s269 = sadd.s32 %s268, 1
      %p272 = scmp.eq.s32.totalorder %s24, 1
      %p273 = scmp.ne.s32.totalorder %s268, %s270
      %p274 = scmp.eq.s32.totalorder %s24, 0
      %p275 = por %p273, %p274
      %p276 = scmp.ne.s32.totalorder %s268, %s270
      %p277 = scmp.eq.s32.totalorder %s29, 1
      %p278 = por %p276, %p277
      %p279 = scmp.ne.s32.totalorder %s270, %s271
      %p280 = scmp.eq.s32.totalorder %s29, 0
      %p281 = por %p279, %p280
      %p282 = scmp.ne.s32.totalorder %s270, %s271
      %p283 = scmp.eq.s32.totalorder %s30, 1
      %p284 = por %p282, %p283
      %p286 = scmp.ne.s32.totalorder %s271, %s285
      %p287 = scmp.eq.s32.totalorder %s30, 0
      %p288 = por %p286, %p287
      %s290 = sadd.s32 %s289, 1
      %p293 = scmp.eq.s32.totalorder %s24, 1
      %p294 = scmp.ne.s32.totalorder %s289, %s291
      %p295 = scmp.eq.s32.totalorder %s24, 0
      %p296 = por %p294, %p295
      %p297 = scmp.ne.s32.totalorder %s289, %s291
      %p298 = scmp.eq.s32.totalorder %s29, 1
      %p299 = por %p297, %p298
      %p300 = scmp.ne.s32.totalorder %s291, %s292
      %p301 = scmp.eq.s32.totalorder %s29, 0
      %p302 = por %p300, %p301
      %p303 = scmp.ne.s32.totalorder %s291, %s292
      %p304 = scmp.eq.s32.totalorder %s30, 1
      %p305 = por %p303, %p304
      %p307 = scmp.ne.s32.totalorder %s292, %s306
      %p308 = scmp.eq.s32.totalorder %s30, 0
      %p309 = por %p307, %p308
      %s310 = ssub.s32 %s24, %s31
      %p311 = scmp.eq.s32.totalorder %s310, 0
      %s313 = sadd.s32 %s312, 1
      %s314 = scalar_select %p311, %s312, %s313
      %p317 = pneg %p311
      %p318 = scmp.eq.s32.totalorder %s24, 1
      %p319 = por %p317, %p318
      %p320 = scmp.ne.s32.totalorder %s312, %s315
      %p321 = scmp.eq.s32.totalorder %s24, 0
      %p322 = por %p320, %p321
      %p323 = scmp.ne.s32.totalorder %s312, %s315
      %p324 = scmp.eq.s32.totalorder %s29, 1
      %p325 = por %p323, %p324
      %p326 = scmp.ne.s32.totalorder %s315, %s316
      %p327 = scmp.eq.s32.totalorder %s29, 0
      %p328 = por %p326, %p327
      %p329 = scmp.ne.s32.totalorder %s315, %s316
      %p330 = scmp.eq.s32.totalorder %s30, 1
      %p331 = por %p329, %p330
      %p333 = scmp.ne.s32.totalorder %s316, %s332
      %p334 = scmp.eq.s32.totalorder %s30, 0
      %p335 = por %p333, %p334
      %p336 = scmp.le.s32.totalorder 1, %s24
      %p337 = scmp.lt.s32.totalorder %s24, 3
      %p338 = pnand %p336, %p337
      %p339 = pneg %p338
      // Predicated region
      $region9: #{tpu_custom_call.1} parent=5 // pred_check
        _
      $region10: #{tpu_custom_call.1} parent=5 // pred_check_branch
        %341 = sbr.rel (%p338) target = $region12
      $region11: #{tpu_custom_call.1} parent=5 // pred_region
        %s342 = ssub.s32 %s24, 1
        // Predicated region
        $region13: #{tpu_custom_call.1} parent=11 // pred_check
          %p343 = pneg %p71
        $region14: #{tpu_custom_call.1} parent=11 // pred_check_branch
          %345 = sbr.rel (%p343) target = $region16
        $region15: #{tpu_custom_call.1} parent=11 // pred_region
          _
        $region16: #{tpu_custom_call.1} parent=11 // pred_fallthru
          _
        // Predicated region
        $region17: #{tpu_custom_call.1} parent=11 // pred_check
          %p346 = pneg %p92
        $region18: #{tpu_custom_call.1} parent=11 // pred_check_branch
          %348 = sbr.rel (%p346) target = $region20
        $region19: #{tpu_custom_call.1} parent=11 // pred_region
          _
        $region20: #{tpu_custom_call.1} parent=11 // pred_fallthru
          _
        // Predicated region
        $region21: #{tpu_custom_call.1} parent=11 // pred_check
          %p349 = pneg %p113
        $region22: #{tpu_custom_call.1} parent=11 // pred_check_branch
          %351 = sbr.rel (%p349) target = $region24
        $region23: #{tpu_custom_call.1} parent=11 // pred_region
          _
        $region24: #{tpu_custom_call.1} parent=11 // pred_fallthru
          _
        // Predicated region
        $region25: #{tpu_custom_call.1} parent=11 // pred_check
          %p352 = pneg %p134
        $region26: #{tpu_custom_call.1} parent=11 // pred_check_branch
          %354 = sbr.rel (%p352) target = $region28
        $region27: #{tpu_custom_call.1} parent=11 // pred_region
          _
        $region28: #{tpu_custom_call.1} parent=11 // pred_fallthru
          _
        // Predicated region
        $region29: #{tpu_custom_call.1} parent=11 // pred_check
          %p355 = pneg %p155
        $region30: #{tpu_custom_call.1} parent=11 // pred_check_branch
          %357 = sbr.rel (%p355) target = $region32
        $region31: #{tpu_custom_call.1} parent=11 // pred_region
          _
        $region32: #{tpu_custom_call.1} parent=11 // pred_fallthru
          _
        // Predicated region
        $region33: #{tpu_custom_call.1} parent=11 // pred_check
          %p358 = pneg %p176
        $region34: #{tpu_custom_call.1} parent=11 // pred_check_branch
          %360 = sbr.rel (%p358) target = $region36
        $region35: #{tpu_custom_call.1} parent=11 // pred_region
          _
        $region36: #{tpu_custom_call.1} parent=11 // pred_fallthru
          _
        // Predicated region
        $region37: #{tpu_custom_call.1} parent=11 // pred_check
          %p361 = pneg %p197
        $region38: #{tpu_custom_call.1} parent=11 // pred_check_branch
          %363 = sbr.rel (%p361) target = $region40
        $region39: #{tpu_custom_call.1} parent=11 // pred_region
          _
        $region40: #{tpu_custom_call.1} parent=11 // pred_fallthru
          _
        // Predicated region
        $region41: #{tpu_custom_call.1} parent=11 // pred_check
          %p364 = pneg %p218
        $region42: #{tpu_custom_call.1} parent=11 // pred_check_branch
          %366 = sbr.rel (%p364) target = $region44
        $region43: #{tpu_custom_call.1} parent=11 // pred_region
          _
        $region44: #{tpu_custom_call.1} parent=11 // pred_fallthru
          _
        // Predicated region
        $region45: #{tpu_custom_call.1} parent=11 // pred_check
          %p367 = pneg %p239
        $region46: #{tpu_custom_call.1} parent=11 // pred_check_branch
          %369 = sbr.rel (%p367) target = $region48
        $region47: #{tpu_custom_call.1} parent=11 // pred_region
          _
        $region48: #{tpu_custom_call.1} parent=11 // pred_fallthru
          _
        // Predicated region
        $region49: #{tpu_custom_call.1} parent=11 // pred_check
          %p370 = pneg %p260
        $region50: #{tpu_custom_call.1} parent=11 // pred_check_branch
          %372 = sbr.rel (%p370) target = $region52
        $region51: #{tpu_custom_call.1} parent=11 // pred_region
          _
        $region52: #{tpu_custom_call.1} parent=11 // pred_fallthru
          _
        // Predicated region
        $region53: #{tpu_custom_call.1} parent=11 // pred_check
          %p373 = pneg %p281
        $region54: #{tpu_custom_call.1} parent=11 // pred_check_branch
          %375 = sbr.rel (%p373) target = $region56
        $region55: #{tpu_custom_call.1} parent=11 // pred_region
          _
        $region56: #{tpu_custom_call.1} parent=11 // pred_fallthru
          _
        // Predicated region
        $region57: #{tpu_custom_call.1} parent=11 // pred_check
          %p376 = pneg %p302
        $region58: #{tpu_custom_call.1} parent=11 // pred_check_branch
          %378 = sbr.rel (%p376) target = $region60
        $region59: #{tpu_custom_call.1} parent=11 // pred_region
          _
        $region60: #{tpu_custom_call.1} parent=11 // pred_fallthru
          _
      $region12: #{tpu_custom_call.1} parent=5 // pred_fallthru
        _
      %p379 = scmp.lt.s32.totalorder %s24, 2
      // Predicated region
      $region61: #{tpu_custom_call.1} parent=5 // pred_check
        %p380 = pneg %p379
      $region62: #{tpu_custom_call.1} parent=5 // pred_check_branch
        %382 = sbr.rel (%p380) target = $region64
      $region63: #{tpu_custom_call.1} parent=5 // pred_region
        // Predicated region
        $region65: #{tpu_custom_call.1} parent=63 // pred_check
          %p383 = pneg %p44
        $region66: #{tpu_custom_call.1} parent=63 // pred_check_branch
          %385 = sbr.rel (%p383) target = $region68
        $region67: #{tpu_custom_call.1} parent=63 // pred_region
          %s386 = smul.u32 64, %s24
          %p387 = scmp.lt.s32.totalorder %s386, 127
          %s388 = scalar_select %p387, %s386, 127
          %s389 = smul.addr %s388, 8
          %s390 = scalar_lea.vmem %s0, %s389
          %s391 = smul.u32 64, %s24
        $region68: #{tpu_custom_call.1} parent=63 // pred_fallthru
          _
      $region64: #{tpu_custom_call.1} parent=5 // pred_fallthru
        _
      %p392 = scmp.le.s32.totalorder 1, %s24
      %p393 = scmp.lt.s32.totalorder %s24, 3
      %p394 = pnand %p392, %p393
      %p395 = pneg %p394
      // Predicated region
      $region69: #{tpu_custom_call.1} parent=5 // pred_check
        _
      $region70: #{tpu_custom_call.1} parent=5 // pred_check_branch
        %397 = sbr.rel (%p394) target = $region72
      $region71: #{tpu_custom_call.1} parent=5 // pred_region
        %s398 = ssub.s32 %s24, 1
        %s399 = smul.u32 64, %s29
        %p400 = scmp.lt.s32.totalorder %s399, 127
        %s401 = scalar_select %p400, %s399, 127
        %s402 = smul.addr %s401, 8
        %s403 = scalar_lea.vmem %s0, %s402
        %p404 = pneg %p50
        %p405 = pneg %p47
        %p406 = pneg %p71
        %p407 = pneg %p68
        %p408 = pneg %p92
        %p409 = pneg %p89
        %p410 = pneg %p113
        %p411 = pneg %p110
        %p412 = pneg %p134
        %p413 = pneg %p131
        %p414 = pneg %p155
        %p415 = pneg %p152
        %p416 = pneg %p176
        %p417 = pneg %p173
        %p418 = pneg %p197
        %p419 = pneg %p194
        %p420 = pneg %p218
        %p421 = pneg %p215
        %p422 = pneg %p239
        %p423 = pneg %p236
        %p424 = pneg %p260
        %p425 = pneg %p257
        %p426 = pneg %p281
        %p427 = pneg %p278
        %p428 = pneg %p302
        %p429 = pneg %p299
        %p430 = pneg %p328
        %p431 = pneg %p325
        %s432 = sand.u32 %s315, 1
        %s433 = scalar_lea.sflag [#allocation4], %s432
        %s434 = sand.u32 %s315, 1
        %s435 = smul.addr %s434, 4
        %s436 = scalar_lea.vmem [#allocation3], %s435
        %s437 = smul.u32 64, %s29
        %p438 = scmp.lt.s32.totalorder %s437, 127
        %s439 = scalar_select %p438, %s437, 127
        %s440 = smul.addr %s439, 8
        %s441 = scalar_lea.vmem %s0, %s440
        %s442 = smul.u32 64, %s29
        %v444 = vld [vmem:[%s441] sm:$0xff]
        %v445 = vld [vmem:[%s441 + $0x8] sm:$0xff]
        %v446 = vld [vmem:[%s441 + $0x10] sm:$0xff]
        %v447 = vld [vmem:[%s441 + $0x18] sm:$0xff]
        %v448 = vld [vmem:[%s441 + $0x20] sm:$0xff]
        %v449 = vld [vmem:[%s441 + $0x28] sm:$0xff]
        %v450 = vld [vmem:[%s441 + $0x30] sm:$0xff]
        %v451 = vld [vmem:[%s441 + $0x38] sm:$0xff]
        %v452 = vld [vmem:[%s441 + $0x40] sm:$0xff]
        %v453 = vld [vmem:[%s441 + $0x48] sm:$0xff]
        %v454 = vld [vmem:[%s441 + $0x50] sm:$0xff]
        %v455 = vld [vmem:[%s441 + $0x58] sm:$0xff]
        %v456 = vld [vmem:[%s441 + $0x60] sm:$0xff]
        %v457 = vld [vmem:[%s441 + $0x68] sm:$0xff]
        %v458 = vld [vmem:[%s441 + $0x70] sm:$0xff]
        %v459 = vld [vmem:[%s441 + $0x78] sm:$0xff]
        %v460 = vld [vmem:[%s441 + $0x80] sm:$0xff]
        %v461 = vld [vmem:[%s441 + $0x88] sm:$0xff]
        %v462 = vld [vmem:[%s441 + $0x90] sm:$0xff]
        %v463 = vld [vmem:[%s441 + $0x98] sm:$0xff]
        %v464 = vld [vmem:[%s441 + $0xa0] sm:$0xff]
        %v465 = vld [vmem:[%s441 + $0xa8] sm:$0xff]
        %v466 = vld [vmem:[%s441 + $0xb0] sm:$0xff]
        %v467 = vld [vmem:[%s441 + $0xb8] sm:$0xff]
        %v468 = vld [vmem:[%s441 + $0xc0] sm:$0xff]
        %v469 = vld [vmem:[%s441 + $0xc8] sm:$0xff]
        %v470 = vld [vmem:[%s441 + $0xd0] sm:$0xff]
        %v471 = vld [vmem:[%s441 + $0xd8] sm:$0xff]
        %v472 = vld [vmem:[%s441 + $0xe0] sm:$0xff]
        %v473 = vld [vmem:[%s441 + $0xe8] sm:$0xff]
        %v474 = vld [vmem:[%s441 + $0xf0] sm:$0xff]
        %v475 = vld [vmem:[%s441 + $0xf8] sm:$0xff]
        %v476 = vld [vmem:[%s441 + $0x100] sm:$0xff]
        %v477 = vld [vmem:[%s441 + $0x108] sm:$0xff]
        %v478 = vld [vmem:[%s441 + $0x110] sm:$0xff]
        %v479 = vld [vmem:[%s441 + $0x118] sm:$0xff]
        %v480 = vld [vmem:[%s441 + $0x120] sm:$0xff]
        %v481 = vld [vmem:[%s441 + $0x128] sm:$0xff]
        %v482 = vld [vmem:[%s441 + $0x130] sm:$0xff]
        %v483 = vld [vmem:[%s441 + $0x138] sm:$0xff]
        %v484 = vld [vmem:[%s441 + $0x140] sm:$0xff]
        %v485 = vld [vmem:[%s441 + $0x148] sm:$0xff]
        %v486 = vld [vmem:[%s441 + $0x150] sm:$0xff]
        %v487 = vld [vmem:[%s441 + $0x158] sm:$0xff]
        %v488 = vld [vmem:[%s441 + $0x160] sm:$0xff]
        %v489 = vld [vmem:[%s441 + $0x168] sm:$0xff]
        %v490 = vld [vmem:[%s441 + $0x170] sm:$0xff]
        %v491 = vld [vmem:[%s441 + $0x178] sm:$0xff]
        %v492 = vld [vmem:[%s441 + $0x180] sm:$0xff]
        %v493 = vld [vmem:[%s441 + $0x188] sm:$0xff]
        %v494 = vld [vmem:[%s441 + $0x190] sm:$0xff]
        %v495 = vld [vmem:[%s441 + $0x198] sm:$0xff]
        %v496 = vld [vmem:[%s441 + $0x1a0] sm:$0xff]
        %v497 = vld [vmem:[%s441 + $0x1a8] sm:$0xff]
        %v498 = vld [vmem:[%s441 + $0x1b0] sm:$0xff]
        %v499 = vld [vmem:[%s441 + $0x1b8] sm:$0xff]
        %v500 = vld [vmem:[%s441 + $0x1c0] sm:$0xff]
        %v501 = vld [vmem:[%s441 + $0x1c8] sm:$0xff]
        %v502 = vld [vmem:[%s441 + $0x1d0] sm:$0xff]
        %v503 = vld [vmem:[%s441 + $0x1d8] sm:$0xff]
        %v504 = vld [vmem:[%s441 + $0x1e0] sm:$0xff]
        %v505 = vld [vmem:[%s441 + $0x1e8] sm:$0xff]
        %v506 = vld [vmem:[%s441 + $0x1f0] sm:$0xff]
        %v507 = vld [vmem:[%s441 + $0x1f8] sm:$0xff]
        %v508 = vpack.c.bf16 %v445, %v444
        %v509 = vpack.c.bf16 %v447, %v446
        %v510 = vpack.c.bf16 %v449, %v448
        %v511 = vpack.c.bf16 %v451, %v450
        %v512 = vpack.c.bf16 %v453, %v452
        %v513 = vpack.c.bf16 %v455, %v454
        %v514 = vpack.c.bf16 %v457, %v456
        %v515 = vpack.c.bf16 %v459, %v458
        %v516 = vpack.c.bf16 %v461, %v460
        %v517 = vpack.c.bf16 %v463, %v462
        %v518 = vpack.c.bf16 %v465, %v464
        %v519 = vpack.c.bf16 %v467, %v466
        %v520 = vpack.c.bf16 %v469, %v468
        %v521 = vpack.c.bf16 %v471, %v470
        %v522 = vpack.c.bf16 %v473, %v472
        %v523 = vpack.c.bf16 %v475, %v474
        %v524 = vpack.c.bf16 %v477, %v476
        %v525 = vpack.c.bf16 %v479, %v478
        %v526 = vpack.c.bf16 %v481, %v480
        %v527 = vpack.c.bf16 %v483, %v482
        %v528 = vpack.c.bf16 %v485, %v484
        %v529 = vpack.c.bf16 %v487, %v486
        %v530 = vpack.c.bf16 %v489, %v488
        %v531 = vpack.c.bf16 %v491, %v490
        %v532 = vpack.c.bf16 %v493, %v492
        %v533 = vpack.c.bf16 %v495, %v494
        %v534 = vpack.c.bf16 %v497, %v496
        %v535 = vpack.c.bf16 %v499, %v498
        %v536 = vpack.c.bf16 %v501, %v500
        %v537 = vpack.c.bf16 %v503, %v502
        %v538 = vpack.c.bf16 %v505, %v504
        %v539 = vpack.c.bf16 %v507, %v506
        %v540 = vld [vmem:[%s1] sm:$0xf]
        %v541 = vld [vmem:[%s1 + $0x4] sm:$0xf]
        %v542 = vld [vmem:[%s1 + $0x8] sm:$0xf]
        %v543 = vld [vmem:[%s1 + $0xc] sm:$0x1]
        %v544 = vld [vmem:[%s2] sm:$0x1]
        %v546 = vlaneseq
        %v547 = vshrl.u32 %v546, 7
        %v548 = vsub.s32 0, %v547
        %v549 = vrot.slane %v544, %v548
        %v555 = vunpack.c.l.b16 %v540
        %v556 = vunpack.c.l.b16 %v541
        %v557 = vunpack.c.l.b16 %v542
        %v558 = vunpack.c.l.b16 %v543
        %v559 = vpack.c.b16 %v556, %v555
        %v560 = vpack.c.b16 %v558, %v557
        %vm562 = vcmask 211968
        %v564 = vsel %vm562, %v508, 0
        %v567 = vsel %vm562, %v509, 0
        %v570 = vsel %vm562, %v510, 0
        %v573 = vsel %vm562, %v511, 0
        %v576 = vsel %vm562, %v512, 0
        %v579 = vsel %vm562, %v513, 0
        %v582 = vsel %vm562, %v514, 0
        %v585 = vsel %vm562, %v515, 0
        %v588 = vsel %vm562, %v516, 0
        %v591 = vsel %vm562, %v517, 0
        %v594 = vsel %vm562, %v518, 0
        %v597 = vsel %vm562, %v519, 0
        %v600 = vsel %vm562, %v520, 0
        %v603 = vsel %vm562, %v521, 0
        %v606 = vsel %vm562, %v522, 0
        %v609 = vsel %vm562, %v523, 0
        %v612 = vsel %vm562, %v524, 0
        %v615 = vsel %vm562, %v525, 0
        %v618 = vsel %vm562, %v526, 0
        %v621 = vsel %vm562, %v527, 0
        %v624 = vsel %vm562, %v528, 0
        %v627 = vsel %vm562, %v529, 0
        %v630 = vsel %vm562, %v530, 0
        %v633 = vsel %vm562, %v531, 0
        %v636 = vsel %vm562, %v532, 0
        %v639 = vsel %vm562, %v533, 0
        %v642 = vsel %vm562, %v534, 0
        %v645 = vsel %vm562, %v535, 0
        %v648 = vsel %vm562, %v536, 0
        %v651 = vsel %vm562, %v537, 0
        %v654 = vsel %vm562, %v538, 0
        %v657 = vsel %vm562, %v539, 0
        %vm659 = vcmask 1044480
        %v661 = vsel %vm659, %v560, 0
        %663 = vmatprep.subr.bf16.mxu0 0
        %664 = vmatpush1.bf16.msra.mxu0 0
        %665 = vmatprep.subr.bf16.mxu0 0
        %666 = vmatpush1.bf16.msra.mxu0 0
        %667 = vmatprep.subr.bf16.mxu0 0
        %668 = vmatpush1.bf16.msra.mxu0 0
        %669 = vmatprep.subr.bf16.mxu0 0
        %670 = vmatpush1.bf16.msra.mxu0 0
        %671 = vmatprep.subr.bf16.mxu0 0
        %672 = vmatpush1.bf16.msra.mxu0 0
        %673 = vmatprep.subr.bf16.mxu0 0
        %674 = vmatpush1.bf16.msra.mxu0 0
        %675 = vmatprep.subr.bf16.mxu0 0
        %676 = vmatpush1.bf16.msra.mxu0 %v661
        %677 = vmatprep.subr.bf16.mxu0 0
        %678 = vmatpush1.bf16.msra.mxu0 %v559
        %679 = vmatprep.subr.bf16.mxu0 0
        %680 = vmatpush2.bf16.msra.mxu0 0
        %681 = vmatprep.subr.bf16.mxu0 0
        %682 = vmatpush2.bf16.msra.mxu0 0
        %683 = vmatprep.subr.bf16.mxu0 0
        %684 = vmatpush2.bf16.msra.mxu0 0
        %685 = vmatprep.subr.bf16.mxu0 0
        %686 = vmatpush2.bf16.msra.mxu0 0
        %687 = vmatprep.subr.bf16.mxu0 0
        %688 = vmatpush2.bf16.msra.mxu0 0
        %689 = vmatprep.subr.bf16.mxu0 0
        %690 = vmatpush2.bf16.msra.mxu0 0
        %691 = vmatprep.subr.bf16.mxu0 0
        %692 = vmatpush2.bf16.msra.mxu0 0
        %693 = vmatprep.subr.bf16.mxu0 0
        %694 = vmatpush2.bf16.msra.mxu0 0
        %695 = vmatprep.mubr.bf16.mxu0 0
        %696 = vmatmul.mubr.bf16.gmra.mxu0 %v564
        %v697 = vpop.f32.mrf.mxu0
        %v698 = vadd.f32 %v549, %v697
        %v699 = vpop.f32.mrf.mxu0
        %v700 = vpop.f32.mrf.mxu0
        %v701 = vadd.f32 %v549, %v700
        %v702 = vpop.f32.mrf.mxu0
        %703 = vmatprep.mubr.bf16.mxu0 0
        %704 = vmatmul.mubr.bf16.gmra.mxu0 %v567
        %v705 = vpop.f32.mrf.mxu0
        %v706 = vadd.f32 %v549, %v705
        %v707 = vpop.f32.mrf.mxu0
        %v708 = vpop.f32.mrf.mxu0
        %v709 = vadd.f32 %v549, %v708
        %v710 = vpop.f32.mrf.mxu0
        %711 = vmatprep.mubr.bf16.mxu0 0
        %712 = vmatmul.mubr.bf16.gmra.mxu0 %v570
        %v713 = vpop.f32.mrf.mxu0
        %v714 = vadd.f32 %v549, %v713
        %v715 = vpop.f32.mrf.mxu0
        %v716 = vpop.f32.mrf.mxu0
        %v717 = vadd.f32 %v549, %v716
        %v718 = vpop.f32.mrf.mxu0
        %719 = vmatprep.mubr.bf16.mxu0 0
        %720 = vmatmul.mubr.bf16.gmra.mxu0 %v573
        %v721 = vpop.f32.mrf.mxu0
        %v722 = vadd.f32 %v549, %v721
        %v723 = vpop.f32.mrf.mxu0
        %v724 = vpop.f32.mrf.mxu0
        %v725 = vadd.f32 %v549, %v724
        %v726 = vpop.f32.mrf.mxu0
        %727 = vmatprep.mubr.bf16.mxu0 0
        %728 = vmatmul.mubr.bf16.gmra.mxu0 %v576
        %v729 = vpop.f32.mrf.mxu0
        %v730 = vadd.f32 %v549, %v729
        %v731 = vpop.f32.mrf.mxu0
        %v732 = vpop.f32.mrf.mxu0
        %v733 = vadd.f32 %v549, %v732
        %v734 = vpop.f32.mrf.mxu0
        %735 = vmatprep.mubr.bf16.mxu0 0
        %736 = vmatmul.mubr.bf16.gmra.mxu0 %v579
        %v737 = vpop.f32.mrf.mxu0
        %v738 = vadd.f32 %v549, %v737
        %v739 = vpop.f32.mrf.mxu0
        %v740 = vpop.f32.mrf.mxu0
        %v741 = vadd.f32 %v549, %v740
        %v742 = vpop.f32.mrf.mxu0
        %743 = vmatprep.mubr.bf16.mxu0 0
        %744 = vmatmul.mubr.bf16.gmra.mxu0 %v582
        %v745 = vpop.f32.mrf.mxu0
        %v746 = vadd.f32 %v549, %v745
        %v747 = vpop.f32.mrf.mxu0
        %v748 = vpop.f32.mrf.mxu0
        %v749 = vadd.f32 %v549, %v748
        %v750 = vpop.f32.mrf.mxu0
        %751 = vmatprep.mubr.bf16.mxu0 0
        %752 = vmatmul.mubr.bf16.gmra.mxu0 %v585
        %v753 = vpop.f32.mrf.mxu0
        %v754 = vadd.f32 %v549, %v753
        %v755 = vpop.f32.mrf.mxu0
        %v756 = vpop.f32.mrf.mxu0
        %v757 = vadd.f32 %v549, %v756
        %v758 = vpop.f32.mrf.mxu0
        %759 = vmatprep.mubr.bf16.mxu0 0
        %760 = vmatmul.mubr.bf16.gmra.mxu0 %v588
        %v761 = vpop.f32.mrf.mxu0
        %v762 = vadd.f32 %v549, %v761
        %v763 = vpop.f32.mrf.mxu0
        %v764 = vpop.f32.mrf.mxu0
        %v765 = vadd.f32 %v549, %v764
        %v766 = vpop.f32.mrf.mxu0
        %767 = vmatprep.mubr.bf16.mxu0 0
        %768 = vmatmul.mubr.bf16.gmra.mxu0 %v591
        %v769 = vpop.f32.mrf.mxu0
        %v770 = vadd.f32 %v549, %v769
        %v771 = vpop.f32.mrf.mxu0
        %v772 = vpop.f32.mrf.mxu0
        %v773 = vadd.f32 %v549, %v772
        %v774 = vpop.f32.mrf.mxu0
        %775 = vmatprep.mubr.bf16.mxu0 0
        %776 = vmatmul.mubr.bf16.gmra.mxu0 %v594
        %v777 = vpop.f32.mrf.mxu0
        %v778 = vadd.f32 %v549, %v777
        %v779 = vpop.f32.mrf.mxu0
        %v780 = vpop.f32.mrf.mxu0
        %v781 = vadd.f32 %v549, %v780
        %v782 = vpop.f32.mrf.mxu0
        %783 = vmatprep.mubr.bf16.mxu0 0
        %784 = vmatmul.mubr.bf16.gmra.mxu0 %v597
        %v785 = vpop.f32.mrf.mxu0
        %v786 = vadd.f32 %v549, %v785
        %v787 = vpop.f32.mrf.mxu0
        %v788 = vpop.f32.mrf.mxu0
        %v789 = vadd.f32 %v549, %v788
        %v790 = vpop.f32.mrf.mxu0
        %791 = vmatprep.mubr.bf16.mxu0 0
        %792 = vmatmul.mubr.bf16.gmra.mxu0 %v600
        %v793 = vpop.f32.mrf.mxu0
        %v794 = vadd.f32 %v549, %v793
        %v795 = vpop.f32.mrf.mxu0
        %v796 = vpop.f32.mrf.mxu0
        %v797 = vadd.f32 %v549, %v796
        %v798 = vpop.f32.mrf.mxu0
        %799 = vmatprep.mubr.bf16.mxu0 0
        %800 = vmatmul.mubr.bf16.gmra.mxu0 %v603
        %v801 = vpop.f32.mrf.mxu0
        %v802 = vadd.f32 %v549, %v801
        %v803 = vpop.f32.mrf.mxu0
        %v804 = vpop.f32.mrf.mxu0
        %v805 = vadd.f32 %v549, %v804
        %v806 = vpop.f32.mrf.mxu0
        %807 = vmatprep.mubr.bf16.mxu0 0
        %808 = vmatmul.mubr.bf16.gmra.mxu0 %v606
        %v809 = vpop.f32.mrf.mxu0
        %v810 = vadd.f32 %v549, %v809
        %v811 = vpop.f32.mrf.mxu0
        %v812 = vpop.f32.mrf.mxu0
        %v813 = vadd.f32 %v549, %v812
        %v814 = vpop.f32.mrf.mxu0
        %815 = vmatprep.mubr.bf16.mxu0 0
        %816 = vmatmul.mubr.bf16.gmra.mxu0 %v609
        %v817 = vpop.f32.mrf.mxu0
        %v818 = vadd.f32 %v549, %v817
        %v819 = vpop.f32.mrf.mxu0
        %v820 = vpop.f32.mrf.mxu0
        %v821 = vadd.f32 %v549, %v820
        %v822 = vpop.f32.mrf.mxu0
        %823 = vmatprep.mubr.bf16.mxu0 0
        %824 = vmatmul.mubr.bf16.gmra.mxu0 %v612
        %v825 = vpop.f32.mrf.mxu0
        %v826 = vadd.f32 %v549, %v825
        %v827 = vpop.f32.mrf.mxu0
        %v828 = vpop.f32.mrf.mxu0
        %v829 = vadd.f32 %v549, %v828
        %v830 = vpop.f32.mrf.mxu0
        %831 = vmatprep.mubr.bf16.mxu0 0
        %832 = vmatmul.mubr.bf16.gmra.mxu0 %v615
        %v833 = vpop.f32.mrf.mxu0
        %v834 = vadd.f32 %v549, %v833
        %v835 = vpop.f32.mrf.mxu0
        %v836 = vpop.f32.mrf.mxu0
        %v837 = vadd.f32 %v549, %v836
        %v838 = vpop.f32.mrf.mxu0
        %839 = vmatprep.mubr.bf16.mxu0 0
        %840 = vmatmul.mubr.bf16.gmra.mxu0 %v618
        %v841 = vpop.f32.mrf.mxu0
        %v842 = vadd.f32 %v549, %v841
        %v843 = vpop.f32.mrf.mxu0
        %v844 = vpop.f32.mrf.mxu0
        %v845 = vadd.f32 %v549, %v844
        %v846 = vpop.f32.mrf.mxu0
        %847 = vmatprep.mubr.bf16.mxu0 0
        %848 = vmatmul.mubr.bf16.gmra.mxu0 %v621
        %v849 = vpop.f32.mrf.mxu0
        %v850 = vadd.f32 %v549, %v849
        %v851 = vpop.f32.mrf.mxu0
        %v852 = vpop.f32.mrf.mxu0
        %v853 = vadd.f32 %v549, %v852
        %v854 = vpop.f32.mrf.mxu0
        %855 = vmatprep.mubr.bf16.mxu0 0
        %856 = vmatmul.mubr.bf16.gmra.mxu0 %v624
        %v857 = vpop.f32.mrf.mxu0
        %v858 = vadd.f32 %v549, %v857
        %v859 = vpop.f32.mrf.mxu0
        %v860 = vpop.f32.mrf.mxu0
        %v861 = vadd.f32 %v549, %v860
        %v862 = vpop.f32.mrf.mxu0
        %863 = vmatprep.mubr.bf16.mxu0 0
        %864 = vmatmul.mubr.bf16.gmra.mxu0 %v627
        %v865 = vpop.f32.mrf.mxu0
        %v866 = vadd.f32 %v549, %v865
        %v867 = vpop.f32.mrf.mxu0
        %v868 = vpop.f32.mrf.mxu0
        %v869 = vadd.f32 %v549, %v868
        %v870 = vpop.f32.mrf.mxu0
        %871 = vmatprep.mubr.bf16.mxu0 0
        %872 = vmatmul.mubr.bf16.gmra.mxu0 %v630
        %v873 = vpop.f32.mrf.mxu0
        %v874 = vadd.f32 %v549, %v873
        %v875 = vpop.f32.mrf.mxu0
        %v876 = vpop.f32.mrf.mxu0
        %v877 = vadd.f32 %v549, %v876
        %v878 = vpop.f32.mrf.mxu0
        %879 = vmatprep.mubr.bf16.mxu0 0
        %880 = vmatmul.mubr.bf16.gmra.mxu0 %v633
        %v881 = vpop.f32.mrf.mxu0
        %v882 = vadd.f32 %v549, %v881
        %v883 = vpop.f32.mrf.mxu0
        %v884 = vpop.f32.mrf.mxu0
        %v885 = vadd.f32 %v549, %v884
        %v886 = vpop.f32.mrf.mxu0
        %887 = vmatprep.mubr.bf16.mxu0 0
        %888 = vmatmul.mubr.bf16.gmra.mxu0 %v636
        %v889 = vpop.f32.mrf.mxu0
        %v890 = vadd.f32 %v549, %v889
        %v891 = vpop.f32.mrf.mxu0
        %v892 = vpop.f32.mrf.mxu0
        %v893 = vadd.f32 %v549, %v892
        %v894 = vpop.f32.mrf.mxu0
        %895 = vmatprep.mubr.bf16.mxu0 0
        %896 = vmatmul.mubr.bf16.gmra.mxu0 %v639
        %v897 = vpop.f32.mrf.mxu0
        %v898 = vadd.f32 %v549, %v897
        %v899 = vpop.f32.mrf.mxu0
        %v900 = vpop.f32.mrf.mxu0
        %v901 = vadd.f32 %v549, %v900
        %v902 = vpop.f32.mrf.mxu0
        %903 = vmatprep.mubr.bf16.mxu0 0
        %904 = vmatmul.mubr.bf16.gmra.mxu0 %v642
        %v905 = vpop.f32.mrf.mxu0
        %v906 = vadd.f32 %v549, %v905
        %v907 = vpop.f32.mrf.mxu0
        %v908 = vpop.f32.mrf.mxu0
        %v909 = vadd.f32 %v549, %v908
        %v910 = vpop.f32.mrf.mxu0
        %911 = vmatprep.mubr.bf16.mxu0 0
        %912 = vmatmul.mubr.bf16.gmra.mxu0 %v645
        %v913 = vpop.f32.mrf.mxu0
        %v914 = vadd.f32 %v549, %v913
        %v915 = vpop.f32.mrf.mxu0
        %v916 = vpop.f32.mrf.mxu0
        %v917 = vadd.f32 %v549, %v916
        %v918 = vpop.f32.mrf.mxu0
        %919 = vmatprep.mubr.bf16.mxu0 0
        %920 = vmatmul.mubr.bf16.gmra.mxu0 %v648
        %v921 = vpop.f32.mrf.mxu0
        %v922 = vadd.f32 %v549, %v921
        %v923 = vpop.f32.mrf.mxu0
        %v924 = vpop.f32.mrf.mxu0
        %v925 = vadd.f32 %v549, %v924
        %v926 = vpop.f32.mrf.mxu0
        %927 = vmatprep.mubr.bf16.mxu0 0
        %928 = vmatmul.mubr.bf16.gmra.mxu0 %v651
        %v929 = vpop.f32.mrf.mxu0
        %v930 = vadd.f32 %v549, %v929
        %v931 = vpop.f32.mrf.mxu0
        %v932 = vpop.f32.mrf.mxu0
        %v933 = vadd.f32 %v549, %v932
        %v934 = vpop.f32.mrf.mxu0
        %935 = vmatprep.mubr.bf16.mxu0 0
        %936 = vmatmul.mubr.bf16.gmra.mxu0 %v654
        %v937 = vpop.f32.mrf.mxu0
        %v938 = vadd.f32 %v549, %v937
        %v939 = vpop.f32.mrf.mxu0
        %v940 = vpop.f32.mrf.mxu0
        %v941 = vadd.f32 %v549, %v940
        %v942 = vpop.f32.mrf.mxu0
        %943 = vmatprep.mubr.bf16.mxu0 0
        %944 = vmatmul.mubr.bf16.gmra.mxu0 %v657
        %v945 = vpop.f32.mrf.mxu0
        %v946 = vadd.f32 %v549, %v945
        %v947 = vpop.f32.mrf.mxu0
        %v948 = vpop.f32.mrf.mxu0
        %v949 = vadd.f32 %v549, %v948
        %v950 = vpop.f32.mrf.mxu0
        %951 = vdwg.mxu0
        %v952 = vmul.f32 %v698, 1.442695
        %v953 = vpow.pop %v952
        %v954 = vmul.f32 %v701, 1.442695
        %v955 = vpow.pop %v954
        %v956 = vmul.f32 %v706, 1.442695
        %v957 = vpow.pop %v956
        %v958 = vmul.f32 %v709, 1.442695
        %v959 = vpow.pop %v958
        %v960 = vmul.f32 %v714, 1.442695
        %v961 = vpow.pop %v960
        %v962 = vmul.f32 %v717, 1.442695
        %v963 = vpow.pop %v962
        %v964 = vmul.f32 %v722, 1.442695
        %v965 = vpow.pop %v964
        %v966 = vmul.f32 %v725, 1.442695
        %v967 = vpow.pop %v966
        %v968 = vmul.f32 %v730, 1.442695
        %v969 = vpow.pop %v968
        %v970 = vmul.f32 %v733, 1.442695
        %v971 = vpow.pop %v970
        %v972 = vmul.f32 %v738, 1.442695
        %v973 = vpow.pop %v972
        %v974 = vmul.f32 %v741, 1.442695
        %v975 = vpow.pop %v974
        %v976 = vmul.f32 %v746, 1.442695
        %v977 = vpow.pop %v976
        %v978 = vmul.f32 %v749, 1.442695
        %v979 = vpow.pop %v978
        %v980 = vmul.f32 %v754, 1.442695
        %v981 = vpow.pop %v980
        %v982 = vmul.f32 %v757, 1.442695
        %v983 = vpow.pop %v982
        %v984 = vmul.f32 %v762, 1.442695
        %v985 = vpow.pop %v984
        %v986 = vmul.f32 %v765, 1.442695
        %v987 = vpow.pop %v986
        %v988 = vmul.f32 %v770, 1.442695
        %v989 = vpow.pop %v988
        %v990 = vmul.f32 %v773, 1.442695
        %v991 = vpow.pop %v990
        %v992 = vmul.f32 %v778, 1.442695
        %v993 = vpow.pop %v992
        %v994 = vmul.f32 %v781, 1.442695
        %v995 = vpow.pop %v994
        %v996 = vmul.f32 %v786, 1.442695
        %v997 = vpow.pop %v996
        %v998 = vmul.f32 %v789, 1.442695
        %v999 = vpow.pop %v998
        %v1000 = vmul.f32 %v794, 1.442695
        %v1001 = vpow.pop %v1000
        %v1002 = vmul.f32 %v797, 1.442695
        %v1003 = vpow.pop %v1002
        %v1004 = vmul.f32 %v802, 1.442695
        %v1005 = vpow.pop %v1004
        %v1006 = vmul.f32 %v805, 1.442695
        %v1007 = vpow.pop %v1006
        %v1008 = vmul.f32 %v810, 1.442695
        %v1009 = vpow.pop %v1008
        %v1010 = vmul.f32 %v813, 1.442695
        %v1011 = vpow.pop %v1010
        %v1012 = vmul.f32 %v818, 1.442695
        %v1013 = vpow.pop %v1012
        %v1014 = vmul.f32 %v821, 1.442695
        %v1015 = vpow.pop %v1014
        %v1016 = vmul.f32 %v826, 1.442695
        %v1017 = vpow.pop %v1016
        %v1018 = vmul.f32 %v829, 1.442695
        %v1019 = vpow.pop %v1018
        %v1020 = vmul.f32 %v834, 1.442695
        %v1021 = vpow.pop %v1020
        %v1022 = vmul.f32 %v837, 1.442695
        %v1023 = vpow.pop %v1022
        %v1024 = vmul.f32 %v842, 1.442695
        %v1025 = vpow.pop %v1024
        %v1026 = vmul.f32 %v845, 1.442695
        %v1027 = vpow.pop %v1026
        %v1028 = vmul.f32 %v850, 1.442695
        %v1029 = vpow.pop %v1028
        %v1030 = vmul.f32 %v853, 1.442695
        %v1031 = vpow.pop %v1030
        %v1032 = vmul.f32 %v858, 1.442695
        %v1033 = vpow.pop %v1032
        %v1034 = vmul.f32 %v861, 1.442695
        %v1035 = vpow.pop %v1034
        %v1036 = vmul.f32 %v866, 1.442695
        %v1037 = vpow.pop %v1036
        %v1038 = vmul.f32 %v869, 1.442695
        %v1039 = vpow.pop %v1038
        %v1040 = vmul.f32 %v874, 1.442695
        %v1041 = vpow.pop %v1040
        %v1042 = vmul.f32 %v877, 1.442695
        %v1043 = vpow.pop %v1042
        %v1044 = vmul.f32 %v882, 1.442695
        %v1045 = vpow.pop %v1044
        %v1046 = vmul.f32 %v885, 1.442695
        %v1047 = vpow.pop %v1046
        %v1048 = vmul.f32 %v890, 1.442695
        %v1049 = vpow.pop %v1048
        %v1050 = vmul.f32 %v893, 1.442695
        %v1051 = vpow.pop %v1050
        %v1052 = vmul.f32 %v898, 1.442695
        %v1053 = vpow.pop %v1052
        %v1054 = vmul.f32 %v901, 1.442695
        %v1055 = vpow.pop %v1054
        %v1056 = vmul.f32 %v906, 1.442695
        %v1057 = vpow.pop %v1056
        %v1058 = vmul.f32 %v909, 1.442695
        %v1059 = vpow.pop %v1058
        %v1060 = vmul.f32 %v914, 1.442695
        %v1061 = vpow.pop %v1060
        %v1062 = vmul.f32 %v917, 1.442695
        %v1063 = vpow.pop %v1062
        %v1064 = vmul.f32 %v922, 1.442695
        %v1065 = vpow.pop %v1064
        %v1066 = vmul.f32 %v925, 1.442695
        %v1067 = vpow.pop %v1066
        %v1068 = vmul.f32 %v930, 1.442695
        %v1069 = vpow.pop %v1068
        %v1070 = vmul.f32 %v933, 1.442695
        %v1071 = vpow.pop %v1070
        %v1072 = vmul.f32 %v938, 1.442695
        %v1073 = vpow.pop %v1072
        %v1074 = vmul.f32 %v941, 1.442695
        %v1075 = vpow.pop %v1074
        %v1076 = vmul.f32 %v946, 1.442695
        %v1077 = vpow.pop %v1076
        %v1078 = vmul.f32 %v949, 1.442695
        %v1079 = vpow.pop %v1078
        %v1080 = vadd.f32 %v953, 2.0
        %v1081 = vadd.f32 %v955, 2.0
        %v1082 = vadd.f32 %v957, 2.0
        %v1083 = vadd.f32 %v959, 2.0
        %v1084 = vadd.f32 %v961, 2.0
        %v1085 = vadd.f32 %v963, 2.0
        %v1086 = vadd.f32 %v965, 2.0
        %v1087 = vadd.f32 %v967, 2.0
        %v1088 = vadd.f32 %v969, 2.0
        %v1089 = vadd.f32 %v971, 2.0
        %v1090 = vadd.f32 %v973, 2.0
        %v1091 = vadd.f32 %v975, 2.0
        %v1092 = vadd.f32 %v977, 2.0
        %v1093 = vadd.f32 %v979, 2.0
        %v1094 = vadd.f32 %v981, 2.0
        %v1095 = vadd.f32 %v983, 2.0
        %v1096 = vadd.f32 %v985, 2.0
        %v1097 = vadd.f32 %v987, 2.0
        %v1098 = vadd.f32 %v989, 2.0
        %v1099 = vadd.f32 %v991, 2.0
        %v1100 = vadd.f32 %v993, 2.0
        %v1101 = vadd.f32 %v995, 2.0
        %v1102 = vadd.f32 %v997, 2.0
        %v1103 = vadd.f32 %v999, 2.0
        %v1104 = vadd.f32 %v1001, 2.0
        %v1105 = vadd.f32 %v1003, 2.0
        %v1106 = vadd.f32 %v1005, 2.0
        %v1107 = vadd.f32 %v1007, 2.0
        %v1108 = vadd.f32 %v1009, 2.0
        %v1109 = vadd.f32 %v1011, 2.0
        %v1110 = vadd.f32 %v1013, 2.0
        %v1111 = vadd.f32 %v1015, 2.0
        %v1112 = vadd.f32 %v1017, 2.0
        %v1113 = vadd.f32 %v1019, 2.0
        %v1114 = vadd.f32 %v1021, 2.0
        %v1115 = vadd.f32 %v1023, 2.0
        %v1116 = vadd.f32 %v1025, 2.0
        %v1117 = vadd.f32 %v1027, 2.0
        %v1118 = vadd.f32 %v1029, 2.0
        %v1119 = vadd.f32 %v1031, 2.0
        %v1120 = vadd.f32 %v1033, 2.0
        %v1121 = vadd.f32 %v1035, 2.0
        %v1122 = vadd.f32 %v1037, 2.0
        %v1123 = vadd.f32 %v1039, 2.0
        %v1124 = vadd.f32 %v1041, 2.0
        %v1125 = vadd.f32 %v1043, 2.0
        %v1126 = vadd.f32 %v1045, 2.0
        %v1127 = vadd.f32 %v1047, 2.0
        %v1128 = vadd.f32 %v1049, 2.0
        %v1129 = vadd.f32 %v1051, 2.0
        %v1130 = vadd.f32 %v1053, 2.0
        %v1131 = vadd.f32 %v1055, 2.0
        %v1132 = vadd.f32 %v1057, 2.0
        %v1133 = vadd.f32 %v1059, 2.0
        %v1134 = vadd.f32 %v1061, 2.0
        %v1135 = vadd.f32 %v1063, 2.0
        %v1136 = vadd.f32 %v1065, 2.0
        %v1137 = vadd.f32 %v1067, 2.0
        %v1138 = vadd.f32 %v1069, 2.0
        %v1139 = vadd.f32 %v1071, 2.0
        %v1140 = vadd.f32 %v1073, 2.0
        %v1141 = vadd.f32 %v1075, 2.0
        %v1142 = vadd.f32 %v1077, 2.0
        %v1143 = vadd.f32 %v1079, 2.0
        %v1144 = vmul.f32 %v953, %v1080
        %v1145 = vmul.f32 %v955, %v1081
        %v1146 = vmul.f32 %v957, %v1082
        %v1147 = vmul.f32 %v959, %v1083
        %v1148 = vmul.f32 %v961, %v1084
        %v1149 = vmul.f32 %v963, %v1085
        %v1150 = vmul.f32 %v965, %v1086
        %v1151 = vmul.f32 %v967, %v1087
        %v1152 = vmul.f32 %v969, %v1088
        %v1153 = vmul.f32 %v971, %v1089
        %v1154 = vmul.f32 %v973, %v1090
        %v1155 = vmul.f32 %v975, %v1091
        %v1156 = vmul.f32 %v977, %v1092
        %v1157 = vmul.f32 %v979, %v1093
        %v1158 = vmul.f32 %v981, %v1094
        %v1159 = vmul.f32 %v983, %v1095
        %v1160 = vmul.f32 %v985, %v1096
        %v1161 = vmul.f32 %v987, %v1097
        %v1162 = vmul.f32 %v989, %v1098
        %v1163 = vmul.f32 %v991, %v1099
        %v1164 = vmul.f32 %v993, %v1100
        %v1165 = vmul.f32 %v995, %v1101
        %v1166 = vmul.f32 %v997, %v1102
        %v1167 = vmul.f32 %v999, %v1103
        %v1168 = vmul.f32 %v1001, %v1104
        %v1169 = vmul.f32 %v1003, %v1105
        %v1170 = vmul.f32 %v1005, %v1106
        %v1171 = vmul.f32 %v1007, %v1107
        %v1172 = vmul.f32 %v1009, %v1108
        %v1173 = vmul.f32 %v1011, %v1109
        %v1174 = vmul.f32 %v1013, %v1110
        %v1175 = vmul.f32 %v1015, %v1111
        %v1176 = vmul.f32 %v1017, %v1112
        %v1177 = vmul.f32 %v1019, %v1113
        %v1178 = vmul.f32 %v1021, %v1114
        %v1179 = vmul.f32 %v1023, %v1115
        %v1180 = vmul.f32 %v1025, %v1116
        %v1181 = vmul.f32 %v1027, %v1117
        %v1182 = vmul.f32 %v1029, %v1118
        %v1183 = vmul.f32 %v1031, %v1119
        %v1184 = vmul.f32 %v1033, %v1120
        %v1185 = vmul.f32 %v1035, %v1121
        %v1186 = vmul.f32 %v1037, %v1122
        %v1187 = vmul.f32 %v1039, %v1123
        %v1188 = vmul.f32 %v1041, %v1124
        %v1189 = vmul.f32 %v1043, %v1125
        %v1190 = vmul.f32 %v1045, %v1126
        %v1191 = vmul.f32 %v1047, %v1127
        %v1192 = vmul.f32 %v1049, %v1128
        %v1193 = vmul.f32 %v1051, %v1129
        %v1194 = vmul.f32 %v1053, %v1130
        %v1195 = vmul.f32 %v1055, %v1131
        %v1196 = vmul.f32 %v1057, %v1132
        %v1197 = vmul.f32 %v1059, %v1133
        %v1198 = vmul.f32 %v1061, %v1134
        %v1199 = vmul.f32 %v1063, %v1135
        %v1200 = vmul.f32 %v1065, %v1136
        %v1201 = vmul.f32 %v1067, %v1137
        %v1202 = vmul.f32 %v1069, %v1138
        %v1203 = vmul.f32 %v1071, %v1139
        %v1204 = vmul.f32 %v1073, %v1140
        %v1205 = vmul.f32 %v1075, %v1141
        %v1206 = vmul.f32 %v1077, %v1142
        %v1207 = vmul.f32 %v1079, %v1143
        %v1208 = vmul.f32 %v698, %v1144
        %v1209 = vmul.f32 %v701, %v1145
        %v1210 = vmul.f32 %v706, %v1146
        %v1211 = vmul.f32 %v709, %v1147
        %v1212 = vmul.f32 %v714, %v1148
        %v1213 = vmul.f32 %v717, %v1149
        %v1214 = vmul.f32 %v722, %v1150
        %v1215 = vmul.f32 %v725, %v1151
        %v1216 = vmul.f32 %v730, %v1152
        %v1217 = vmul.f32 %v733, %v1153
        %v1218 = vmul.f32 %v738, %v1154
        %v1219 = vmul.f32 %v741, %v1155
        %v1220 = vmul.f32 %v746, %v1156
        %v1221 = vmul.f32 %v749, %v1157
        %v1222 = vmul.f32 %v754, %v1158
        %v1223 = vmul.f32 %v757, %v1159
        %v1224 = vmul.f32 %v762, %v1160
        %v1225 = vmul.f32 %v765, %v1161
        %v1226 = vmul.f32 %v770, %v1162
        %v1227 = vmul.f32 %v773, %v1163
        %v1228 = vmul.f32 %v778, %v1164
        %v1229 = vmul.f32 %v781, %v1165
        %v1230 = vmul.f32 %v786, %v1166
        %v1231 = vmul.f32 %v789, %v1167
        %v1232 = vmul.f32 %v794, %v1168
        %v1233 = vmul.f32 %v797, %v1169
        %v1234 = vmul.f32 %v802, %v1170
        %v1235 = vmul.f32 %v805, %v1171
        %v1236 = vmul.f32 %v810, %v1172
        %v1237 = vmul.f32 %v813, %v1173
        %v1238 = vmul.f32 %v818, %v1174
        %v1239 = vmul.f32 %v821, %v1175
        %v1240 = vmul.f32 %v826, %v1176
        %v1241 = vmul.f32 %v829, %v1177
        %v1242 = vmul.f32 %v834, %v1178
        %v1243 = vmul.f32 %v837, %v1179
        %v1244 = vmul.f32 %v842, %v1180
        %v1245 = vmul.f32 %v845, %v1181
        %v1246 = vmul.f32 %v850, %v1182
        %v1247 = vmul.f32 %v853, %v1183
        %v1248 = vmul.f32 %v858, %v1184
        %v1249 = vmul.f32 %v861, %v1185
        %v1250 = vmul.f32 %v866, %v1186
        %v1251 = vmul.f32 %v869, %v1187
        %v1252 = vmul.f32 %v874, %v1188
        %v1253 = vmul.f32 %v877, %v1189
        %v1254 = vmul.f32 %v882, %v1190
        %v1255 = vmul.f32 %v885, %v1191
        %v1256 = vmul.f32 %v890, %v1192
        %v1257 = vmul.f32 %v893, %v1193
        %v1258 = vmul.f32 %v898, %v1194
        %v1259 = vmul.f32 %v901, %v1195
        %v1260 = vmul.f32 %v906, %v1196
        %v1261 = vmul.f32 %v909, %v1197
        %v1262 = vmul.f32 %v914, %v1198
        %v1263 = vmul.f32 %v917, %v1199
        %v1264 = vmul.f32 %v922, %v1200
        %v1265 = vmul.f32 %v925, %v1201
        %v1266 = vmul.f32 %v930, %v1202
        %v1267 = vmul.f32 %v933, %v1203
        %v1268 = vmul.f32 %v938, %v1204
        %v1269 = vmul.f32 %v941, %v1205
        %v1270 = vmul.f32 %v946, %v1206
        %v1271 = vmul.f32 %v949, %v1207
        %v1272 = vadd.f32 %v1144, 2.0
        %v1273 = vadd.f32 %v1145, 2.0
        %v1274 = vadd.f32 %v1146, 2.0
        %v1275 = vadd.f32 %v1147, 2.0
        %v1276 = vadd.f32 %v1148, 2.0
        %v1277 = vadd.f32 %v1149, 2.0
        %v1278 = vadd.f32 %v1150, 2.0
        %v1279 = vadd.f32 %v1151, 2.0
        %v1280 = vadd.f32 %v1152, 2.0
        %v1281 = vadd.f32 %v1153, 2.0
        %v1282 = vadd.f32 %v1154, 2.0
        %v1283 = vadd.f32 %v1155, 2.0
        %v1284 = vadd.f32 %v1156, 2.0
        %v1285 = vadd.f32 %v1157, 2.0
        %v1286 = vadd.f32 %v1158, 2.0
        %v1287 = vadd.f32 %v1159, 2.0
        %v1288 = vadd.f32 %v1160, 2.0
        %v1289 = vadd.f32 %v1161, 2.0
        %v1290 = vadd.f32 %v1162, 2.0
        %v1291 = vadd.f32 %v1163, 2.0
        %v1292 = vadd.f32 %v1164, 2.0
        %v1293 = vadd.f32 %v1165, 2.0
        %v1294 = vadd.f32 %v1166, 2.0
        %v1295 = vadd.f32 %v1167, 2.0
        %v1296 = vadd.f32 %v1168, 2.0
        %v1297 = vadd.f32 %v1169, 2.0
        %v1298 = vadd.f32 %v1170, 2.0
        %v1299 = vadd.f32 %v1171, 2.0
        %v1300 = vadd.f32 %v1172, 2.0
        %v1301 = vadd.f32 %v1173, 2.0
        %v1302 = vadd.f32 %v1174, 2.0
        %v1303 = vadd.f32 %v1175, 2.0
        %v1304 = vadd.f32 %v1176, 2.0
        %v1305 = vadd.f32 %v1177, 2.0
        %v1306 = vadd.f32 %v1178, 2.0
        %v1307 = vadd.f32 %v1179, 2.0
        %v1308 = vadd.f32 %v1180, 2.0
        %v1309 = vadd.f32 %v1181, 2.0
        %v1310 = vadd.f32 %v1182, 2.0
        %v1311 = vadd.f32 %v1183, 2.0
        %v1312 = vadd.f32 %v1184, 2.0
        %v1313 = vadd.f32 %v1185, 2.0
        %v1314 = vadd.f32 %v1186, 2.0
        %v1315 = vadd.f32 %v1187, 2.0
        %v1316 = vadd.f32 %v1188, 2.0
        %v1317 = vadd.f32 %v1189, 2.0
        %v1318 = vadd.f32 %v1190, 2.0
        %v1319 = vadd.f32 %v1191, 2.0
        %v1320 = vadd.f32 %v1192, 2.0
        %v1321 = vadd.f32 %v1193, 2.0
        %v1322 = vadd.f32 %v1194, 2.0
        %v1323 = vadd.f32 %v1195, 2.0
        %v1324 = vadd.f32 %v1196, 2.0
        %v1325 = vadd.f32 %v1197, 2.0
        %v1326 = vadd.f32 %v1198, 2.0
        %v1327 = vadd.f32 %v1199, 2.0
        %v1328 = vadd.f32 %v1200, 2.0
        %v1329 = vadd.f32 %v1201, 2.0
        %v1330 = vadd.f32 %v1202, 2.0
        %v1331 = vadd.f32 %v1203, 2.0
        %v1332 = vadd.f32 %v1204, 2.0
        %v1333 = vadd.f32 %v1205, 2.0
        %v1334 = vadd.f32 %v1206, 2.0
        %v1335 = vadd.f32 %v1207, 2.0
        %v1336 = vrcp.pop %v1272
        %v1337 = vrcp.pop %v1273
        %v1338 = vrcp.pop %v1274
        %v1339 = vrcp.pop %v1275
        %v1340 = vrcp.pop %v1276
        %v1341 = vrcp.pop %v1277
        %v1342 = vrcp.pop %v1278
        %v1343 = vrcp.pop %v1279
        %v1344 = vrcp.pop %v1280
        %v1345 = vrcp.pop %v1281
        %v1346 = vrcp.pop %v1282
        %v1347 = vrcp.pop %v1283
        %v1348 = vrcp.pop %v1284
        %v1349 = vrcp.pop %v1285
        %v1350 = vrcp.pop %v1286
        %v1351 = vrcp.pop %v1287
        %v1352 = vrcp.pop %v1288
        %v1353 = vrcp.pop %v1289
        %v1354 = vrcp.pop %v1290
        %v1355 = vrcp.pop %v1291
        %v1356 = vrcp.pop %v1292
        %v1357 = vrcp.pop %v1293
        %v1358 = vrcp.pop %v1294
        %v1359 = vrcp.pop %v1295
        %v1360 = vrcp.pop %v1296
        %v1361 = vrcp.pop %v1297
        %v1362 = vrcp.pop %v1298
        %v1363 = vrcp.pop %v1299
        %v1364 = vrcp.pop %v1300
        %v1365 = vrcp.pop %v1301
        %v1366 = vrcp.pop %v1302
        %v1367 = vrcp.pop %v1303
        %v1368 = vrcp.pop %v1304
        %v1369 = vrcp.pop %v1305
        %v1370 = vrcp.pop %v1306
        %v1371 = vrcp.pop %v1307
        %v1372 = vrcp.pop %v1308
        %v1373 = vrcp.pop %v1309
        %v1374 = vrcp.pop %v1310
        %v1375 = vrcp.pop %v1311
        %v1376 = vrcp.pop %v1312
        %v1377 = vrcp.pop %v1313
        %v1378 = vrcp.pop %v1314
        %v1379 = vrcp.pop %v1315
        %v1380 = vrcp.pop %v1316
        %v1381 = vrcp.pop %v1317
        %v1382 = vrcp.pop %v1318
        %v1383 = vrcp.pop %v1319
        %v1384 = vrcp.pop %v1320
        %v1385 = vrcp.pop %v1321
        %v1386 = vrcp.pop %v1322
        %v1387 = vrcp.pop %v1323
        %v1388 = vrcp.pop %v1324
        %v1389 = vrcp.pop %v1325
        %v1390 = vrcp.pop %v1326
        %v1391 = vrcp.pop %v1327
        %v1392 = vrcp.pop %v1328
        %v1393 = vrcp.pop %v1329
        %v1394 = vrcp.pop %v1330
        %v1395 = vrcp.pop %v1331
        %v1396 = vrcp.pop %v1332
        %v1397 = vrcp.pop %v1333
        %v1398 = vrcp.pop %v1334
        %v1399 = vrcp.pop %v1335
        %v1400 = vmul.f32 %v1208, %v1336
        %v1401 = vmul.f32 %v1209, %v1337
        %v1402 = vmul.f32 %v1210, %v1338
        %v1403 = vmul.f32 %v1211, %v1339
        %v1404 = vmul.f32 %v1212, %v1340
        %v1405 = vmul.f32 %v1213, %v1341
        %v1406 = vmul.f32 %v1214, %v1342
        %v1407 = vmul.f32 %v1215, %v1343
        %v1408 = vmul.f32 %v1216, %v1344
        %v1409 = vmul.f32 %v1217, %v1345
        %v1410 = vmul.f32 %v1218, %v1346
        %v1411 = vmul.f32 %v1219, %v1347
        %v1412 = vmul.f32 %v1220, %v1348
        %v1413 = vmul.f32 %v1221, %v1349
        %v1414 = vmul.f32 %v1222, %v1350
        %v1415 = vmul.f32 %v1223, %v1351
        %v1416 = vmul.f32 %v1224, %v1352
        %v1417 = vmul.f32 %v1225, %v1353
        %v1418 = vmul.f32 %v1226, %v1354
        %v1419 = vmul.f32 %v1227, %v1355
        %v1420 = vmul.f32 %v1228, %v1356
        %v1421 = vmul.f32 %v1229, %v1357
        %v1422 = vmul.f32 %v1230, %v1358
        %v1423 = vmul.f32 %v1231, %v1359
        %v1424 = vmul.f32 %v1232, %v1360
        %v1425 = vmul.f32 %v1233, %v1361
        %v1426 = vmul.f32 %v1234, %v1362
        %v1427 = vmul.f32 %v1235, %v1363
        %v1428 = vmul.f32 %v1236, %v1364
        %v1429 = vmul.f32 %v1237, %v1365
        %v1430 = vmul.f32 %v1238, %v1366
        %v1431 = vmul.f32 %v1239, %v1367
        %v1432 = vmul.f32 %v1240, %v1368
        %v1433 = vmul.f32 %v1241, %v1369
        %v1434 = vmul.f32 %v1242, %v1370
        %v1435 = vmul.f32 %v1243, %v1371
        %v1436 = vmul.f32 %v1244, %v1372
        %v1437 = vmul.f32 %v1245, %v1373
        %v1438 = vmul.f32 %v1246, %v1374
        %v1439 = vmul.f32 %v1247, %v1375
        %v1440 = vmul.f32 %v1248, %v1376
        %v1441 = vmul.f32 %v1249, %v1377
        %v1442 = vmul.f32 %v1250, %v1378
        %v1443 = vmul.f32 %v1251, %v1379
        %v1444 = vmul.f32 %v1252, %v1380
        %v1445 = vmul.f32 %v1253, %v1381
        %v1446 = vmul.f32 %v1254, %v1382
        %v1447 = vmul.f32 %v1255, %v1383
        %v1448 = vmul.f32 %v1256, %v1384
        %v1449 = vmul.f32 %v1257, %v1385
        %v1450 = vmul.f32 %v1258, %v1386
        %v1451 = vmul.f32 %v1259, %v1387
        %v1452 = vmul.f32 %v1260, %v1388
        %v1453 = vmul.f32 %v1261, %v1389
        %v1454 = vmul.f32 %v1262, %v1390
        %v1455 = vmul.f32 %v1263, %v1391
        %v1456 = vmul.f32 %v1264, %v1392
        %v1457 = vmul.f32 %v1265, %v1393
        %v1458 = vmul.f32 %v1266, %v1394
        %v1459 = vmul.f32 %v1267, %v1395
        %v1460 = vmul.f32 %v1268, %v1396
        %v1461 = vmul.f32 %v1269, %v1397
        %v1462 = vmul.f32 %v1270, %v1398
        %v1463 = vmul.f32 %v1271, %v1399
        %vm1464 = vcmp.gt.f32.partialorder %v698, 20.0
        %vm1465 = vcmp.gt.f32.partialorder %v701, 20.0
        %vm1466 = vcmp.gt.f32.partialorder %v706, 20.0
        %vm1467 = vcmp.gt.f32.partialorder %v709, 20.0
        %vm1468 = vcmp.gt.f32.partialorder %v714, 20.0
        %vm1469 = vcmp.gt.f32.partialorder %v717, 20.0
        %vm1470 = vcmp.gt.f32.partialorder %v722, 20.0
        %vm1471 = vcmp.gt.f32.partialorder %v725, 20.0
        %vm1472 = vcmp.gt.f32.partialorder %v730, 20.0
        %vm1473 = vcmp.gt.f32.partialorder %v733, 20.0
        %vm1474 = vcmp.gt.f32.partialorder %v738, 20.0
        %vm1475 = vcmp.gt.f32.partialorder %v741, 20.0
        %vm1476 = vcmp.gt.f32.partialorder %v746, 20.0
        %vm1477 = vcmp.gt.f32.partialorder %v749, 20.0
        %vm1478 = vcmp.gt.f32.partialorder %v754, 20.0
        %vm1479 = vcmp.gt.f32.partialorder %v757, 20.0
        %vm1480 = vcmp.gt.f32.partialorder %v762, 20.0
        %vm1481 = vcmp.gt.f32.partialorder %v765, 20.0
        %vm1482 = vcmp.gt.f32.partialorder %v770, 20.0
        %vm1483 = vcmp.gt.f32.partialorder %v773, 20.0
        %vm1484 = vcmp.gt.f32.partialorder %v778, 20.0
        %vm1485 = vcmp.gt.f32.partialorder %v781, 20.0
        %vm1486 = vcmp.gt.f32.partialorder %v786, 20.0
        %vm1487 = vcmp.gt.f32.partialorder %v789, 20.0
        %vm1488 = vcmp.gt.f32.partialorder %v794, 20.0
        %vm1489 = vcmp.gt.f32.partialorder %v797, 20.0
        %vm1490 = vcmp.gt.f32.partialorder %v802, 20.0
        %vm1491 = vcmp.gt.f32.partialorder %v805, 20.0
        %vm1492 = vcmp.gt.f32.partialorder %v810, 20.0
        %vm1493 = vcmp.gt.f32.partialorder %v813, 20.0
        %vm1494 = vcmp.gt.f32.partialorder %v818, 20.0
        %vm1495 = vcmp.gt.f32.partialorder %v821, 20.0
        %vm1496 = vcmp.gt.f32.partialorder %v826, 20.0
        %vm1497 = vcmp.gt.f32.partialorder %v829, 20.0
        %vm1498 = vcmp.gt.f32.partialorder %v834, 20.0
        %vm1499 = vcmp.gt.f32.partialorder %v837, 20.0
        %vm1500 = vcmp.gt.f32.partialorder %v842, 20.0
        %vm1501 = vcmp.gt.f32.partialorder %v845, 20.0
        %vm1502 = vcmp.gt.f32.partialorder %v850, 20.0
        %vm1503 = vcmp.gt.f32.partialorder %v853, 20.0
        %vm1504 = vcmp.gt.f32.partialorder %v858, 20.0
        %vm1505 = vcmp.gt.f32.partialorder %v861, 20.0
        %vm1506 = vcmp.gt.f32.partialorder %v866, 20.0
        %vm1507 = vcmp.gt.f32.partialorder %v869, 20.0
        %vm1508 = vcmp.gt.f32.partialorder %v874, 20.0
        %vm1509 = vcmp.gt.f32.partialorder %v877, 20.0
        %vm1510 = vcmp.gt.f32.partialorder %v882, 20.0
        %vm1511 = vcmp.gt.f32.partialorder %v885, 20.0
        %vm1512 = vcmp.gt.f32.partialorder %v890, 20.0
        %vm1513 = vcmp.gt.f32.partialorder %v893, 20.0
        %vm1514 = vcmp.gt.f32.partialorder %v898, 20.0
        %vm1515 = vcmp.gt.f32.partialorder %v901, 20.0
        %vm1516 = vcmp.gt.f32.partialorder %v906, 20.0
        %vm1517 = vcmp.gt.f32.partialorder %v909, 20.0
        %vm1518 = vcmp.gt.f32.partialorder %v914, 20.0
        %vm1519 = vcmp.gt.f32.partialorder %v917, 20.0
        %vm1520 = vcmp.gt.f32.partialorder %v922, 20.0
        %vm1521 = vcmp.gt.f32.partialorder %v925, 20.0
        %vm1522 = vcmp.gt.f32.partialorder %v930, 20.0
        %vm1523 = vcmp.gt.f32.partialorder %v933, 20.0
        %vm1524 = vcmp.gt.f32.partialorder %v938, 20.0
        %vm1525 = vcmp.gt.f32.partialorder %v941, 20.0
        %vm1526 = vcmp.gt.f32.partialorder %v946, 20.0
        %vm1527 = vcmp.gt.f32.partialorder %v949, 20.0
        %v1528 = vsel %vm1464, %v698, %v1400
        %v1529 = vsel %vm1465, %v701, %v1401
        %v1530 = vsel %vm1466, %v706, %v1402
        %v1531 = vsel %vm1467, %v709, %v1403
        %v1532 = vsel %vm1468, %v714, %v1404
        %v1533 = vsel %vm1469, %v717, %v1405
        %v1534 = vsel %vm1470, %v722, %v1406
        %v1535 = vsel %vm1471, %v725, %v1407
        %v1536 = vsel %vm1472, %v730, %v1408
        %v1537 = vsel %vm1473, %v733, %v1409
        %v1538 = vsel %vm1474, %v738, %v1410
        %v1539 = vsel %vm1475, %v741, %v1411
        %v1540 = vsel %vm1476, %v746, %v1412
        %v1541 = vsel %vm1477, %v749, %v1413
        %v1542 = vsel %vm1478, %v754, %v1414
        %v1543 = vsel %vm1479, %v757, %v1415
        %v1544 = vsel %vm1480, %v762, %v1416
        %v1545 = vsel %vm1481, %v765, %v1417
        %v1546 = vsel %vm1482, %v770, %v1418
        %v1547 = vsel %vm1483, %v773, %v1419
        %v1548 = vsel %vm1484, %v778, %v1420
        %v1549 = vsel %vm1485, %v781, %v1421
        %v1550 = vsel %vm1486, %v786, %v1422
        %v1551 = vsel %vm1487, %v789, %v1423
        %v1552 = vsel %vm1488, %v794, %v1424
        %v1553 = vsel %vm1489, %v797, %v1425
        %v1554 = vsel %vm1490, %v802, %v1426
        %v1555 = vsel %vm1491, %v805, %v1427
        %v1556 = vsel %vm1492, %v810, %v1428
        %v1557 = vsel %vm1493, %v813, %v1429
        %v1558 = vsel %vm1494, %v818, %v1430
        %v1559 = vsel %vm1495, %v821, %v1431
        %v1560 = vsel %vm1496, %v826, %v1432
        %v1561 = vsel %vm1497, %v829, %v1433
        %v1562 = vsel %vm1498, %v834, %v1434
        %v1563 = vsel %vm1499, %v837, %v1435
        %v1564 = vsel %vm1500, %v842, %v1436
        %v1565 = vsel %vm1501, %v845, %v1437
        %v1566 = vsel %vm1502, %v850, %v1438
        %v1567 = vsel %vm1503, %v853, %v1439
        %v1568 = vsel %vm1504, %v858, %v1440
        %v1569 = vsel %vm1505, %v861, %v1441
        %v1570 = vsel %vm1506, %v866, %v1442
        %v1571 = vsel %vm1507, %v869, %v1443
        %v1572 = vsel %vm1508, %v874, %v1444
        %v1573 = vsel %vm1509, %v877, %v1445
        %v1574 = vsel %vm1510, %v882, %v1446
        %v1575 = vsel %vm1511, %v885, %v1447
        %v1576 = vsel %vm1512, %v890, %v1448
        %v1577 = vsel %vm1513, %v893, %v1449
        %v1578 = vsel %vm1514, %v898, %v1450
        %v1579 = vsel %vm1515, %v901, %v1451
        %v1580 = vsel %vm1516, %v906, %v1452
        %v1581 = vsel %vm1517, %v909, %v1453
        %v1582 = vsel %vm1518, %v914, %v1454
        %v1583 = vsel %vm1519, %v917, %v1455
        %v1584 = vsel %vm1520, %v922, %v1456
        %v1585 = vsel %vm1521, %v925, %v1457
        %v1586 = vsel %vm1522, %v930, %v1458
        %v1587 = vsel %vm1523, %v933, %v1459
        %v1588 = vsel %vm1524, %v938, %v1460
        %v1589 = vsel %vm1525, %v941, %v1461
        %v1590 = vsel %vm1526, %v946, %v1462
        %v1591 = vsel %vm1527, %v949, %v1463
        %v1592 = vpack.c.bf16 %v1529, %v1528
        %v1593 = vpack.c.bf16 %v1531, %v1530
        %v1594 = vpack.c.bf16 %v1533, %v1532
        %v1595 = vpack.c.bf16 %v1535, %v1534
        %v1596 = vpack.c.bf16 %v1537, %v1536
        %v1597 = vpack.c.bf16 %v1539, %v1538
        %v1598 = vpack.c.bf16 %v1541, %v1540
        %v1599 = vpack.c.bf16 %v1543, %v1542
        %v1600 = vpack.c.bf16 %v1545, %v1544
        %v1601 = vpack.c.bf16 %v1547, %v1546
        %v1602 = vpack.c.bf16 %v1549, %v1548
        %v1603 = vpack.c.bf16 %v1551, %v1550
        %v1604 = vpack.c.bf16 %v1553, %v1552
        %v1605 = vpack.c.bf16 %v1555, %v1554
        %v1606 = vpack.c.bf16 %v1557, %v1556
        %v1607 = vpack.c.bf16 %v1559, %v1558
        %v1608 = vpack.c.bf16 %v1561, %v1560
        %v1609 = vpack.c.bf16 %v1563, %v1562
        %v1610 = vpack.c.bf16 %v1565, %v1564
        %v1611 = vpack.c.bf16 %v1567, %v1566
        %v1612 = vpack.c.bf16 %v1569, %v1568
        %v1613 = vpack.c.bf16 %v1571, %v1570
        %v1614 = vpack.c.bf16 %v1573, %v1572
        %v1615 = vpack.c.bf16 %v1575, %v1574
        %v1616 = vpack.c.bf16 %v1577, %v1576
        %v1617 = vpack.c.bf16 %v1579, %v1578
        %v1618 = vpack.c.bf16 %v1581, %v1580
        %v1619 = vpack.c.bf16 %v1583, %v1582
        %v1620 = vpack.c.bf16 %v1585, %v1584
        %v1621 = vpack.c.bf16 %v1587, %v1586
        %v1622 = vpack.c.bf16 %v1589, %v1588
        %v1623 = vpack.c.bf16 %v1591, %v1590
        %v1624 = vld [vmem:[%s3] sm:$0xf]
        %v1625 = vld [vmem:[%s3 + $0x4] sm:$0xf]
        %v1626 = vld [vmem:[%s3 + $0x8] sm:$0xf]
        %v1627 = vld [vmem:[%s3 + $0xc] sm:$0xf]
        %v1628 = vld [vmem:[%s3 + $0x10] sm:$0xf]
        %v1629 = vld [vmem:[%s3 + $0x14] sm:$0xf]
        %v1630 = vld [vmem:[%s3 + $0x18] sm:$0xf]
        %v1631 = vld [vmem:[%s3 + $0x1c] sm:$0xf]
        %v1632 = vld [vmem:[%s3 + $0x20] sm:$0xf]
        %v1633 = vld [vmem:[%s3 + $0x24] sm:$0xf]
        %v1634 = vld [vmem:[%s3 + $0x28] sm:$0xf]
        %v1635 = vld [vmem:[%s3 + $0x2c] sm:$0xf]
        %v1636 = vld [vmem:[%s3 + $0x30] sm:$0xf]
        %v1637 = vld [vmem:[%s3 + $0x34] sm:$0xf]
        %v1638 = vld [vmem:[%s3 + $0x38] sm:$0xf]
        %v1639 = vld [vmem:[%s3 + $0x3c] sm:$0xf]
        %v1640 = vld [vmem:[%s4] sm:$0x1]
        %v1642 = vlaneseq
        %v1643 = vshrl.u32 %v1642, 7
        %v1644 = vsub.s32 0, %v1643
        %v1645 = vrot.slane %v1640, %v1644
        %v1663 = vunpack.c.l.b16 %v1624
        %v1664 = vunpack.c.l.b16 %v1625
        %v1665 = vunpack.c.l.b16 %v1626
        %v1666 = vunpack.c.l.b16 %v1627
        %v1667 = vunpack.c.l.b16 %v1628
        %v1668 = vunpack.c.l.b16 %v1629
        %v1669 = vunpack.c.l.b16 %v1630
        %v1670 = vunpack.c.l.b16 %v1631
        %v1671 = vunpack.c.l.b16 %v1632
        %v1672 = vunpack.c.l.b16 %v1633
        %v1673 = vunpack.c.l.b16 %v1634
        %v1674 = vunpack.c.l.b16 %v1635
        %v1675 = vunpack.c.l.b16 %v1636
        %v1676 = vunpack.c.l.b16 %v1637
        %v1677 = vunpack.c.l.b16 %v1638
        %v1678 = vunpack.c.l.b16 %v1639
        %v1679 = vpack.c.b16 %v1664, %v1663
        %v1680 = vpack.c.b16 %v1666, %v1665
        %v1681 = vpack.c.b16 %v1668, %v1667
        %v1682 = vpack.c.b16 %v1670, %v1669
        %v1683 = vpack.c.b16 %v1672, %v1671
        %v1684 = vpack.c.b16 %v1674, %v1673
        %v1685 = vpack.c.b16 %v1676, %v1675
        %v1686 = vpack.c.b16 %v1678, %v1677
        %1695 = vmatprep.subr.bf16.mxu0 0
        %1696 = vmatpush1.bf16.msra.mxu0 %v1686
        %1697 = vmatprep.subr.bf16.mxu0 0
        %1698 = vmatpush1.bf16.msra.mxu0 %v1685
        %1699 = vmatprep.subr.bf16.mxu0 0
        %1700 = vmatpush1.bf16.msra.mxu0 %v1684
        %1701 = vmatprep.subr.bf16.mxu0 0
        %1702 = vmatpush1.bf16.msra.mxu0 %v1683
        %1703 = vmatprep.subr.bf16.mxu0 0
        %1704 = vmatpush1.bf16.msra.mxu0 %v1682
        %1705 = vmatprep.subr.bf16.mxu0 0
        %1706 = vmatpush1.bf16.msra.mxu0 %v1681
        %1707 = vmatprep.subr.bf16.mxu0 0
        %1708 = vmatpush1.bf16.msra.mxu0 %v1680
        %1709 = vmatprep.subr.bf16.mxu0 0
        %1710 = vmatpush1.bf16.msra.mxu0 %v1679
        %1711 = vmatprep.subr.bf16.mxu0 0
        %1712 = vmatpush2.bf16.msra.mxu0 0
        %1713 = vmatprep.subr.bf16.mxu0 0
        %1714 = vmatpush2.bf16.msra.mxu0 0
        %1715 = vmatprep.subr.bf16.mxu0 0
        %1716 = vmatpush2.bf16.msra.mxu0 0
        %1717 = vmatprep.subr.bf16.mxu0 0
        %1718 = vmatpush2.bf16.msra.mxu0 0
        %1719 = vmatprep.subr.bf16.mxu0 0
        %1720 = vmatpush2.bf16.msra.mxu0 0
        %1721 = vmatprep.subr.bf16.mxu0 0
        %1722 = vmatpush2.bf16.msra.mxu0 0
        %1723 = vmatprep.subr.bf16.mxu0 0
        %1724 = vmatpush2.bf16.msra.mxu0 0
        %1725 = vmatprep.subr.bf16.mxu0 0
        %1726 = vmatpush2.bf16.msra.mxu0 0
        %1727 = vmatprep.mubr.bf16.mxu0 0
        %1728 = vmatmul.mubr.bf16.gmra.mxu0 %v1592
        %v1729 = vpop.f32.mrf.mxu0
        %v1730 = vadd.f32 %v1645, %v1729
        %v1731 = vpop.f32.mrf.mxu0
        %v1732 = vpop.f32.mrf.mxu0
        %v1733 = vadd.f32 %v1645, %v1732
        %v1734 = vpop.f32.mrf.mxu0
        %1735 = vmatprep.mubr.bf16.mxu0 0
        %1736 = vmatmul.mubr.bf16.gmra.mxu0 %v1593
        %v1737 = vpop.f32.mrf.mxu0
        %v1738 = vadd.f32 %v1645, %v1737
        %v1739 = vpop.f32.mrf.mxu0
        %v1740 = vpop.f32.mrf.mxu0
        %v1741 = vadd.f32 %v1645, %v1740
        %v1742 = vpop.f32.mrf.mxu0
        %1743 = vmatprep.mubr.bf16.mxu0 0
        %1744 = vmatmul.mubr.bf16.gmra.mxu0 %v1594
        %v1745 = vpop.f32.mrf.mxu0
        %v1746 = vadd.f32 %v1645, %v1745
        %v1747 = vpop.f32.mrf.mxu0
        %v1748 = vpop.f32.mrf.mxu0
        %v1749 = vadd.f32 %v1645, %v1748
        %v1750 = vpop.f32.mrf.mxu0
        %1751 = vmatprep.mubr.bf16.mxu0 0
        %1752 = vmatmul.mubr.bf16.gmra.mxu0 %v1595
        %v1753 = vpop.f32.mrf.mxu0
        %v1754 = vadd.f32 %v1645, %v1753
        %v1755 = vpop.f32.mrf.mxu0
        %v1756 = vpop.f32.mrf.mxu0
        %v1757 = vadd.f32 %v1645, %v1756
        %v1758 = vpop.f32.mrf.mxu0
        %1759 = vmatprep.mubr.bf16.mxu0 0
        %1760 = vmatmul.mubr.bf16.gmra.mxu0 %v1596
        %v1761 = vpop.f32.mrf.mxu0
        %v1762 = vadd.f32 %v1645, %v1761
        %v1763 = vpop.f32.mrf.mxu0
        %v1764 = vpop.f32.mrf.mxu0
        %v1765 = vadd.f32 %v1645, %v1764
        %v1766 = vpop.f32.mrf.mxu0
        %1767 = vmatprep.mubr.bf16.mxu0 0
        %1768 = vmatmul.mubr.bf16.gmra.mxu0 %v1597
        %v1769 = vpop.f32.mrf.mxu0
        %v1770 = vadd.f32 %v1645, %v1769
        %v1771 = vpop.f32.mrf.mxu0
        %v1772 = vpop.f32.mrf.mxu0
        %v1773 = vadd.f32 %v1645, %v1772
        %v1774 = vpop.f32.mrf.mxu0
        %1775 = vmatprep.mubr.bf16.mxu0 0
        %1776 = vmatmul.mubr.bf16.gmra.mxu0 %v1598
        %v1777 = vpop.f32.mrf.mxu0
        %v1778 = vadd.f32 %v1645, %v1777
        %v1779 = vpop.f32.mrf.mxu0
        %v1780 = vpop.f32.mrf.mxu0
        %v1781 = vadd.f32 %v1645, %v1780
        %v1782 = vpop.f32.mrf.mxu0
        %1783 = vmatprep.mubr.bf16.mxu0 0
        %1784 = vmatmul.mubr.bf16.gmra.mxu0 %v1599
        %v1785 = vpop.f32.mrf.mxu0
        %v1786 = vadd.f32 %v1645, %v1785
        %v1787 = vpop.f32.mrf.mxu0
        %v1788 = vpop.f32.mrf.mxu0
        %v1789 = vadd.f32 %v1645, %v1788
        %v1790 = vpop.f32.mrf.mxu0
        %1791 = vmatprep.mubr.bf16.mxu0 0
        %1792 = vmatmul.mubr.bf16.gmra.mxu0 %v1600
        %v1793 = vpop.f32.mrf.mxu0
        %v1794 = vadd.f32 %v1645, %v1793
        %v1795 = vpop.f32.mrf.mxu0
        %v1796 = vpop.f32.mrf.mxu0
        %v1797 = vadd.f32 %v1645, %v1796
        %v1798 = vpop.f32.mrf.mxu0
        %1799 = vmatprep.mubr.bf16.mxu0 0
        %1800 = vmatmul.mubr.bf16.gmra.mxu0 %v1601
        %v1801 = vpop.f32.mrf.mxu0
        %v1802 = vadd.f32 %v1645, %v1801
        %v1803 = vpop.f32.mrf.mxu0
        %v1804 = vpop.f32.mrf.mxu0
        %v1805 = vadd.f32 %v1645, %v1804
        %v1806 = vpop.f32.mrf.mxu0
        %1807 = vmatprep.mubr.bf16.mxu0 0
        %1808 = vmatmul.mubr.bf16.gmra.mxu0 %v1602
        %v1809 = vpop.f32.mrf.mxu0
        %v1810 = vadd.f32 %v1645, %v1809
        %v1811 = vpop.f32.mrf.mxu0
        %v1812 = vpop.f32.mrf.mxu0
        %v1813 = vadd.f32 %v1645, %v1812
        %v1814 = vpop.f32.mrf.mxu0
        %1815 = vmatprep.mubr.bf16.mxu0 0
        %1816 = vmatmul.mubr.bf16.gmra.mxu0 %v1603
        %v1817 = vpop.f32.mrf.mxu0
        %v1818 = vadd.f32 %v1645, %v1817
        %v1819 = vpop.f32.mrf.mxu0
        %v1820 = vpop.f32.mrf.mxu0
        %v1821 = vadd.f32 %v1645, %v1820
        %v1822 = vpop.f32.mrf.mxu0
        %1823 = vmatprep.mubr.bf16.mxu0 0
        %1824 = vmatmul.mubr.bf16.gmra.mxu0 %v1604
        %v1825 = vpop.f32.mrf.mxu0
        %v1826 = vadd.f32 %v1645, %v1825
        %v1827 = vpop.f32.mrf.mxu0
        %v1828 = vpop.f32.mrf.mxu0
        %v1829 = vadd.f32 %v1645, %v1828
        %v1830 = vpop.f32.mrf.mxu0
        %1831 = vmatprep.mubr.bf16.mxu0 0
        %1832 = vmatmul.mubr.bf16.gmra.mxu0 %v1605
        %v1833 = vpop.f32.mrf.mxu0
        %v1834 = vadd.f32 %v1645, %v1833
        %v1835 = vpop.f32.mrf.mxu0
        %v1836 = vpop.f32.mrf.mxu0
        %v1837 = vadd.f32 %v1645, %v1836
        %v1838 = vpop.f32.mrf.mxu0
        %1839 = vmatprep.mubr.bf16.mxu0 0
        %1840 = vmatmul.mubr.bf16.gmra.mxu0 %v1606
        %v1841 = vpop.f32.mrf.mxu0
        %v1842 = vadd.f32 %v1645, %v1841
        %v1843 = vpop.f32.mrf.mxu0
        %v1844 = vpop.f32.mrf.mxu0
        %v1845 = vadd.f32 %v1645, %v1844
        %v1846 = vpop.f32.mrf.mxu0
        %1847 = vmatprep.mubr.bf16.mxu0 0
        %1848 = vmatmul.mubr.bf16.gmra.mxu0 %v1607
        %v1849 = vpop.f32.mrf.mxu0
        %v1850 = vadd.f32 %v1645, %v1849
        %v1851 = vpop.f32.mrf.mxu0
        %v1852 = vpop.f32.mrf.mxu0
        %v1853 = vadd.f32 %v1645, %v1852
        %v1854 = vpop.f32.mrf.mxu0
        %1855 = vmatprep.mubr.bf16.mxu0 0
        %1856 = vmatmul.mubr.bf16.gmra.mxu0 %v1608
        %v1857 = vpop.f32.mrf.mxu0
        %v1858 = vadd.f32 %v1645, %v1857
        %v1859 = vpop.f32.mrf.mxu0
        %v1860 = vpop.f32.mrf.mxu0
        %v1861 = vadd.f32 %v1645, %v1860
        %v1862 = vpop.f32.mrf.mxu0
        %1863 = vmatprep.mubr.bf16.mxu0 0
        %1864 = vmatmul.mubr.bf16.gmra.mxu0 %v1609
        %v1865 = vpop.f32.mrf.mxu0
        %v1866 = vadd.f32 %v1645, %v1865
        %v1867 = vpop.f32.mrf.mxu0
        %v1868 = vpop.f32.mrf.mxu0
        %v1869 = vadd.f32 %v1645, %v1868
        %v1870 = vpop.f32.mrf.mxu0
        %1871 = vmatprep.mubr.bf16.mxu0 0
        %1872 = vmatmul.mubr.bf16.gmra.mxu0 %v1610
        %v1873 = vpop.f32.mrf.mxu0
        %v1874 = vadd.f32 %v1645, %v1873
        %v1875 = vpop.f32.mrf.mxu0
        %v1876 = vpop.f32.mrf.mxu0
        %v1877 = vadd.f32 %v1645, %v1876
        %v1878 = vpop.f32.mrf.mxu0
        %1879 = vmatprep.mubr.bf16.mxu0 0
        %1880 = vmatmul.mubr.bf16.gmra.mxu0 %v1611
        %v1881 = vpop.f32.mrf.mxu0
        %v1882 = vadd.f32 %v1645, %v1881
        %v1883 = vpop.f32.mrf.mxu0
        %v1884 = vpop.f32.mrf.mxu0
        %v1885 = vadd.f32 %v1645, %v1884
        %v1886 = vpop.f32.mrf.mxu0
        %1887 = vmatprep.mubr.bf16.mxu0 0
        %1888 = vmatmul.mubr.bf16.gmra.mxu0 %v1612
        %v1889 = vpop.f32.mrf.mxu0
        %v1890 = vadd.f32 %v1645, %v1889
        %v1891 = vpop.f32.mrf.mxu0
        %v1892 = vpop.f32.mrf.mxu0
        %v1893 = vadd.f32 %v1645, %v1892
        %v1894 = vpop.f32.mrf.mxu0
        %1895 = vmatprep.mubr.bf16.mxu0 0
        %1896 = vmatmul.mubr.bf16.gmra.mxu0 %v1613
        %v1897 = vpop.f32.mrf.mxu0
        %v1898 = vadd.f32 %v1645, %v1897
        %v1899 = vpop.f32.mrf.mxu0
        %v1900 = vpop.f32.mrf.mxu0
        %v1901 = vadd.f32 %v1645, %v1900
        %v1902 = vpop.f32.mrf.mxu0
        %1903 = vmatprep.mubr.bf16.mxu0 0
        %1904 = vmatmul.mubr.bf16.gmra.mxu0 %v1614
        %v1905 = vpop.f32.mrf.mxu0
        %v1906 = vadd.f32 %v1645, %v1905
        %v1907 = vpop.f32.mrf.mxu0
        %v1908 = vpop.f32.mrf.mxu0
        %v1909 = vadd.f32 %v1645, %v1908
        %v1910 = vpop.f32.mrf.mxu0
        %1911 = vmatprep.mubr.bf16.mxu0 0
        %1912 = vmatmul.mubr.bf16.gmra.mxu0 %v1615
        %v1913 = vpop.f32.mrf.mxu0
        %v1914 = vadd.f32 %v1645, %v1913
        %v1915 = vpop.f32.mrf.mxu0
        %v1916 = vpop.f32.mrf.mxu0
        %v1917 = vadd.f32 %v1645, %v1916
        %v1918 = vpop.f32.mrf.mxu0
        %1919 = vmatprep.mubr.bf16.mxu0 0
        %1920 = vmatmul.mubr.bf16.gmra.mxu0 %v1616
        %v1921 = vpop.f32.mrf.mxu0
        %v1922 = vadd.f32 %v1645, %v1921
        %v1923 = vpop.f32.mrf.mxu0
        %v1924 = vpop.f32.mrf.mxu0
        %v1925 = vadd.f32 %v1645, %v1924
        %v1926 = vpop.f32.mrf.mxu0
        %1927 = vmatprep.mubr.bf16.mxu0 0
        %1928 = vmatmul.mubr.bf16.gmra.mxu0 %v1617
        %v1929 = vpop.f32.mrf.mxu0
        %v1930 = vadd.f32 %v1645, %v1929
        %v1931 = vpop.f32.mrf.mxu0
        %v1932 = vpop.f32.mrf.mxu0
        %v1933 = vadd.f32 %v1645, %v1932
        %v1934 = vpop.f32.mrf.mxu0
        %1935 = vmatprep.mubr.bf16.mxu0 0
        %1936 = vmatmul.mubr.bf16.gmra.mxu0 %v1618
        %v1937 = vpop.f32.mrf.mxu0
        %v1938 = vadd.f32 %v1645, %v1937
        %v1939 = vpop.f32.mrf.mxu0
        %v1940 = vpop.f32.mrf.mxu0
        %v1941 = vadd.f32 %v1645, %v1940
        %v1942 = vpop.f32.mrf.mxu0
        %1943 = vmatprep.mubr.bf16.mxu0 0
        %1944 = vmatmul.mubr.bf16.gmra.mxu0 %v1619
        %v1945 = vpop.f32.mrf.mxu0
        %v1946 = vadd.f32 %v1645, %v1945
        %v1947 = vpop.f32.mrf.mxu0
        %v1948 = vpop.f32.mrf.mxu0
        %v1949 = vadd.f32 %v1645, %v1948
        %v1950 = vpop.f32.mrf.mxu0
        %1951 = vmatprep.mubr.bf16.mxu0 0
        %1952 = vmatmul.mubr.bf16.gmra.mxu0 %v1620
        %v1953 = vpop.f32.mrf.mxu0
        %v1954 = vadd.f32 %v1645, %v1953
        %v1955 = vpop.f32.mrf.mxu0
        %v1956 = vpop.f32.mrf.mxu0
        %v1957 = vadd.f32 %v1645, %v1956
        %v1958 = vpop.f32.mrf.mxu0
        %1959 = vmatprep.mubr.bf16.mxu0 0
        %1960 = vmatmul.mubr.bf16.gmra.mxu0 %v1621
        %v1961 = vpop.f32.mrf.mxu0
        %v1962 = vadd.f32 %v1645, %v1961
        %v1963 = vpop.f32.mrf.mxu0
        %v1964 = vpop.f32.mrf.mxu0
        %v1965 = vadd.f32 %v1645, %v1964
        %v1966 = vpop.f32.mrf.mxu0
        %1967 = vmatprep.mubr.bf16.mxu0 0
        %1968 = vmatmul.mubr.bf16.gmra.mxu0 %v1622
        %v1969 = vpop.f32.mrf.mxu0
        %v1970 = vadd.f32 %v1645, %v1969
        %v1971 = vpop.f32.mrf.mxu0
        %v1972 = vpop.f32.mrf.mxu0
        %v1973 = vadd.f32 %v1645, %v1972
        %v1974 = vpop.f32.mrf.mxu0
        %1975 = vmatprep.mubr.bf16.mxu0 0
        %1976 = vmatmul.mubr.bf16.gmra.mxu0 %v1623
        %v1977 = vpop.f32.mrf.mxu0
        %v1978 = vadd.f32 %v1645, %v1977
        %v1979 = vpop.f32.mrf.mxu0
        %v1980 = vpop.f32.mrf.mxu0
        %v1981 = vadd.f32 %v1645, %v1980
        %v1982 = vpop.f32.mrf.mxu0
        %1983 = vdwg.mxu0
        %v1984 = vmax.f32 %v1730, 0.0
        %v1985 = vmax.f32 %v1733, 0.0
        %v1986 = vmax.f32 %v1738, 0.0
        %v1987 = vmax.f32 %v1741, 0.0
        %v1988 = vmax.f32 %v1746, 0.0
        %v1989 = vmax.f32 %v1749, 0.0
        %v1990 = vmax.f32 %v1754, 0.0
        %v1991 = vmax.f32 %v1757, 0.0
        %v1992 = vmax.f32 %v1762, 0.0
        %v1993 = vmax.f32 %v1765, 0.0
        %v1994 = vmax.f32 %v1770, 0.0
        %v1995 = vmax.f32 %v1773, 0.0
        %v1996 = vmax.f32 %v1778, 0.0
        %v1997 = vmax.f32 %v1781, 0.0
        %v1998 = vmax.f32 %v1786, 0.0
        %v1999 = vmax.f32 %v1789, 0.0
        %v2000 = vmax.f32 %v1794, 0.0
        %v2001 = vmax.f32 %v1797, 0.0
        %v2002 = vmax.f32 %v1802, 0.0
        %v2003 = vmax.f32 %v1805, 0.0
        %v2004 = vmax.f32 %v1810, 0.0
        %v2005 = vmax.f32 %v1813, 0.0
        %v2006 = vmax.f32 %v1818, 0.0
        %v2007 = vmax.f32 %v1821, 0.0
        %v2008 = vmax.f32 %v1826, 0.0
        %v2009 = vmax.f32 %v1829, 0.0
        %v2010 = vmax.f32 %v1834, 0.0
        %v2011 = vmax.f32 %v1837, 0.0
        %v2012 = vmax.f32 %v1842, 0.0
        %v2013 = vmax.f32 %v1845, 0.0
        %v2014 = vmax.f32 %v1850, 0.0
        %v2015 = vmax.f32 %v1853, 0.0
        %v2016 = vmax.f32 %v1858, 0.0
        %v2017 = vmax.f32 %v1861, 0.0
        %v2018 = vmax.f32 %v1866, 0.0
        %v2019 = vmax.f32 %v1869, 0.0
        %v2020 = vmax.f32 %v1874, 0.0
        %v2021 = vmax.f32 %v1877, 0.0
        %v2022 = vmax.f32 %v1882, 0.0
        %v2023 = vmax.f32 %v1885, 0.0
        %v2024 = vmax.f32 %v1890, 0.0
        %v2025 = vmax.f32 %v1893, 0.0
        %v2026 = vmax.f32 %v1898, 0.0
        %v2027 = vmax.f32 %v1901, 0.0
        %v2028 = vmax.f32 %v1906, 0.0
        %v2029 = vmax.f32 %v1909, 0.0
        %v2030 = vmax.f32 %v1914, 0.0
        %v2031 = vmax.f32 %v1917, 0.0
        %v2032 = vmax.f32 %v1922, 0.0
        %v2033 = vmax.f32 %v1925, 0.0
        %v2034 = vmax.f32 %v1930, 0.0
        %v2035 = vmax.f32 %v1933, 0.0
        %v2036 = vmax.f32 %v1938, 0.0
        %v2037 = vmax.f32 %v1941, 0.0
        %v2038 = vmax.f32 %v1946, 0.0
        %v2039 = vmax.f32 %v1949, 0.0
        %v2040 = vmax.f32 %v1954, 0.0
        %v2041 = vmax.f32 %v1957, 0.0
        %v2042 = vmax.f32 %v1962, 0.0
        %v2043 = vmax.f32 %v1965, 0.0
        %v2044 = vmax.f32 %v1970, 0.0
        %v2045 = vmax.f32 %v1973, 0.0
        %v2046 = vmax.f32 %v1978, 0.0
        %v2047 = vmax.f32 %v1981, 0.0
        %v2048 = vpack.c.bf16 %v1985, %v1984
        %v2049 = vpack.c.bf16 %v1987, %v1986
        %v2050 = vpack.c.bf16 %v1989, %v1988
        %v2051 = vpack.c.bf16 %v1991, %v1990
        %v2052 = vpack.c.bf16 %v1993, %v1992
        %v2053 = vpack.c.bf16 %v1995, %v1994
        %v2054 = vpack.c.bf16 %v1997, %v1996
        %v2055 = vpack.c.bf16 %v1999, %v1998
        %v2056 = vpack.c.bf16 %v2001, %v2000
        %v2057 = vpack.c.bf16 %v2003, %v2002
        %v2058 = vpack.c.bf16 %v2005, %v2004
        %v2059 = vpack.c.bf16 %v2007, %v2006
        %v2060 = vpack.c.bf16 %v2009, %v2008
        %v2061 = vpack.c.bf16 %v2011, %v2010
        %v2062 = vpack.c.bf16 %v2013, %v2012
        %v2063 = vpack.c.bf16 %v2015, %v2014
        %v2064 = vpack.c.bf16 %v2017, %v2016
        %v2065 = vpack.c.bf16 %v2019, %v2018
        %v2066 = vpack.c.bf16 %v2021, %v2020
        %v2067 = vpack.c.bf16 %v2023, %v2022
        %v2068 = vpack.c.bf16 %v2025, %v2024
        %v2069 = vpack.c.bf16 %v2027, %v2026
        %v2070 = vpack.c.bf16 %v2029, %v2028
        %v2071 = vpack.c.bf16 %v2031, %v2030
        %v2072 = vpack.c.bf16 %v2033, %v2032
        %v2073 = vpack.c.bf16 %v2035, %v2034
        %v2074 = vpack.c.bf16 %v2037, %v2036
        %v2075 = vpack.c.bf16 %v2039, %v2038
        %v2076 = vpack.c.bf16 %v2041, %v2040
        %v2077 = vpack.c.bf16 %v2043, %v2042
        %v2078 = vpack.c.bf16 %v2045, %v2044
        %v2079 = vpack.c.bf16 %v2047, %v2046
        %v2080 = vld [vmem:[%s5] sm:$0xf]
        %v2081 = vld [vmem:[%s5 + $0x4] sm:$0xf]
        %v2082 = vld [vmem:[%s5 + $0x8] sm:$0xf]
        %v2083 = vld [vmem:[%s5 + $0xc] sm:$0xf]
        %v2084 = vld [vmem:[%s5 + $0x10] sm:$0xf]
        %v2085 = vld [vmem:[%s5 + $0x14] sm:$0xf]
        %v2086 = vld [vmem:[%s5 + $0x18] sm:$0xf]
        %v2087 = vld [vmem:[%s5 + $0x1c] sm:$0xf]
        %v2088 = vld [vmem:[%s6] sm:$0x1]
        %v2090 = vlaneseq
        %v2091 = vshrl.u32 %v2090, 7
        %v2092 = vsub.s32 0, %v2091
        %v2093 = vrot.slane %v2088, %v2092
        %v2103 = vunpack.c.l.b16 %v2080
        %v2104 = vunpack.c.l.b16 %v2081
        %v2105 = vunpack.c.l.b16 %v2082
        %v2106 = vunpack.c.l.b16 %v2083
        %v2107 = vunpack.c.l.b16 %v2084
        %v2108 = vunpack.c.l.b16 %v2085
        %v2109 = vunpack.c.l.b16 %v2086
        %v2110 = vunpack.c.l.b16 %v2087
        %v2111 = vpack.c.b16 %v2104, %v2103
        %v2112 = vpack.c.b16 %v2106, %v2105
        %v2113 = vpack.c.b16 %v2108, %v2107
        %v2114 = vpack.c.b16 %v2110, %v2109
        %vm2119 = vcmask 523264
        %v2121 = vsel %vm2119, %v2048, 0
        %v2124 = vsel %vm2119, %v2049, 0
        %v2127 = vsel %vm2119, %v2050, 0
        %v2130 = vsel %vm2119, %v2051, 0
        %v2133 = vsel %vm2119, %v2052, 0
        %v2136 = vsel %vm2119, %v2053, 0
        %v2139 = vsel %vm2119, %v2054, 0
        %v2142 = vsel %vm2119, %v2055, 0
        %v2145 = vsel %vm2119, %v2056, 0
        %v2148 = vsel %vm2119, %v2057, 0
        %v2151 = vsel %vm2119, %v2058, 0
        %v2154 = vsel %vm2119, %v2059, 0
        %v2157 = vsel %vm2119, %v2060, 0
        %v2160 = vsel %vm2119, %v2061, 0
        %v2163 = vsel %vm2119, %v2062, 0
        %v2166 = vsel %vm2119, %v2063, 0
        %v2169 = vsel %vm2119, %v2064, 0
        %v2172 = vsel %vm2119, %v2065, 0
        %v2175 = vsel %vm2119, %v2066, 0
        %v2178 = vsel %vm2119, %v2067, 0
        %v2181 = vsel %vm2119, %v2068, 0
        %v2184 = vsel %vm2119, %v2069, 0
        %v2187 = vsel %vm2119, %v2070, 0
        %v2190 = vsel %vm2119, %v2071, 0
        %v2193 = vsel %vm2119, %v2072, 0
        %v2196 = vsel %vm2119, %v2073, 0
        %v2199 = vsel %vm2119, %v2074, 0
        %v2202 = vsel %vm2119, %v2075, 0
        %v2205 = vsel %vm2119, %v2076, 0
        %v2208 = vsel %vm2119, %v2077, 0
        %v2211 = vsel %vm2119, %v2078, 0
        %v2214 = vsel %vm2119, %v2079, 0
        %2216 = vmatprep.subr.bf16.mxu0 0
        %2217 = vmatpush1.bf16.msra.mxu0 0
        %2218 = vmatprep.subr.bf16.mxu0 0
        %2219 = vmatpush1.bf16.msra.mxu0 0
        %2220 = vmatprep.subr.bf16.mxu0 0
        %2221 = vmatpush1.bf16.msra.mxu0 0
        %2222 = vmatprep.subr.bf16.mxu0 0
        %2223 = vmatpush1.bf16.msra.mxu0 0
        %2224 = vmatprep.subr.bf16.mxu0 0
        %2225 = vmatpush1.bf16.msra.mxu0 %v2114
        %2226 = vmatprep.subr.bf16.mxu0 0
        %2227 = vmatpush1.bf16.msra.mxu0 %v2113
        %2228 = vmatprep.subr.bf16.mxu0 0
        %2229 = vmatpush1.bf16.msra.mxu0 %v2112
        %2230 = vmatprep.subr.bf16.mxu0 0
        %2231 = vmatpush1.bf16.msra.mxu0 %v2111
        %2232 = vmatprep.subr.bf16.mxu0 0
        %2233 = vmatpush2.bf16.msra.mxu0 0
        %2234 = vmatprep.subr.bf16.mxu0 0
        %2235 = vmatpush2.bf16.msra.mxu0 0
        %2236 = vmatprep.subr.bf16.mxu0 0
        %2237 = vmatpush2.bf16.msra.mxu0 0
        %2238 = vmatprep.subr.bf16.mxu0 0
        %2239 = vmatpush2.bf16.msra.mxu0 0
        %2240 = vmatprep.subr.bf16.mxu0 0
        %2241 = vmatpush2.bf16.msra.mxu0 0
        %2242 = vmatprep.subr.bf16.mxu0 0
        %2243 = vmatpush2.bf16.msra.mxu0 0
        %2244 = vmatprep.subr.bf16.mxu0 0
        %2245 = vmatpush2.bf16.msra.mxu0 0
        %2246 = vmatprep.subr.bf16.mxu0 0
        %2247 = vmatpush2.bf16.msra.mxu0 0
        %2248 = vmatprep.mubr.bf16.mxu0 0
        %2249 = vmatmul.mubr.bf16.gmra.mxu0 %v2121
        %v2250 = vpop.f32.mrf.mxu0
        %v2251 = vadd.f32 %v2093, %v2250
        %v2252 = vpop.f32.mrf.mxu0
        %v2253 = vpop.f32.mrf.mxu0
        %v2254 = vadd.f32 %v2093, %v2253
        %v2255 = vpop.f32.mrf.mxu0
        %2256 = vmatprep.mubr.bf16.mxu0 0
        %2257 = vmatmul.mubr.bf16.gmra.mxu0 %v2124
        %v2258 = vpop.f32.mrf.mxu0
        %v2259 = vadd.f32 %v2093, %v2258
        %v2260 = vpop.f32.mrf.mxu0
        %v2261 = vpop.f32.mrf.mxu0
        %v2262 = vadd.f32 %v2093, %v2261
        %v2263 = vpop.f32.mrf.mxu0
        %2264 = vmatprep.mubr.bf16.mxu0 0
        %2265 = vmatmul.mubr.bf16.gmra.mxu0 %v2127
        %v2266 = vpop.f32.mrf.mxu0
        %v2267 = vadd.f32 %v2093, %v2266
        %v2268 = vpop.f32.mrf.mxu0
        %v2269 = vpop.f32.mrf.mxu0
        %v2270 = vadd.f32 %v2093, %v2269
        %v2271 = vpop.f32.mrf.mxu0
        %2272 = vmatprep.mubr.bf16.mxu0 0
        %2273 = vmatmul.mubr.bf16.gmra.mxu0 %v2130
        %v2274 = vpop.f32.mrf.mxu0
        %v2275 = vadd.f32 %v2093, %v2274
        %v2276 = vpop.f32.mrf.mxu0
        %v2277 = vpop.f32.mrf.mxu0
        %v2278 = vadd.f32 %v2093, %v2277
        %v2279 = vpop.f32.mrf.mxu0
        %2280 = vmatprep.mubr.bf16.mxu0 0
        %2281 = vmatmul.mubr.bf16.gmra.mxu0 %v2133
        %v2282 = vpop.f32.mrf.mxu0
        %v2283 = vadd.f32 %v2093, %v2282
        %v2284 = vpop.f32.mrf.mxu0
        %v2285 = vpop.f32.mrf.mxu0
        %v2286 = vadd.f32 %v2093, %v2285
        %v2287 = vpop.f32.mrf.mxu0
        %2288 = vmatprep.mubr.bf16.mxu0 0
        %2289 = vmatmul.mubr.bf16.gmra.mxu0 %v2136
        %v2290 = vpop.f32.mrf.mxu0
        %v2291 = vadd.f32 %v2093, %v2290
        %v2292 = vpop.f32.mrf.mxu0
        %v2293 = vpop.f32.mrf.mxu0
        %v2294 = vadd.f32 %v2093, %v2293
        %v2295 = vpop.f32.mrf.mxu0
        %2296 = vmatprep.mubr.bf16.mxu0 0
        %2297 = vmatmul.mubr.bf16.gmra.mxu0 %v2139
        %v2298 = vpop.f32.mrf.mxu0
        %v2299 = vadd.f32 %v2093, %v2298
        %v2300 = vpop.f32.mrf.mxu0
        %v2301 = vpop.f32.mrf.mxu0
        %v2302 = vadd.f32 %v2093, %v2301
        %v2303 = vpop.f32.mrf.mxu0
        %2304 = vmatprep.mubr.bf16.mxu0 0
        %2305 = vmatmul.mubr.bf16.gmra.mxu0 %v2142
        %v2306 = vpop.f32.mrf.mxu0
        %v2307 = vadd.f32 %v2093, %v2306
        %v2308 = vpop.f32.mrf.mxu0
        %v2309 = vpop.f32.mrf.mxu0
        %v2310 = vadd.f32 %v2093, %v2309
        %v2311 = vpop.f32.mrf.mxu0
        %2312 = vmatprep.mubr.bf16.mxu0 0
        %2313 = vmatmul.mubr.bf16.gmra.mxu0 %v2145
        %v2314 = vpop.f32.mrf.mxu0
        %v2315 = vadd.f32 %v2093, %v2314
        %v2316 = vpop.f32.mrf.mxu0
        %v2317 = vpop.f32.mrf.mxu0
        %v2318 = vadd.f32 %v2093, %v2317
        %v2319 = vpop.f32.mrf.mxu0
        %2320 = vmatprep.mubr.bf16.mxu0 0
        %2321 = vmatmul.mubr.bf16.gmra.mxu0 %v2148
        %v2322 = vpop.f32.mrf.mxu0
        %v2323 = vadd.f32 %v2093, %v2322
        %v2324 = vpop.f32.mrf.mxu0
        %v2325 = vpop.f32.mrf.mxu0
        %v2326 = vadd.f32 %v2093, %v2325
        %v2327 = vpop.f32.mrf.mxu0
        %2328 = vmatprep.mubr.bf16.mxu0 0
        %2329 = vmatmul.mubr.bf16.gmra.mxu0 %v2151
        %v2330 = vpop.f32.mrf.mxu0
        %v2331 = vadd.f32 %v2093, %v2330
        %v2332 = vpop.f32.mrf.mxu0
        %v2333 = vpop.f32.mrf.mxu0
        %v2334 = vadd.f32 %v2093, %v2333
        %v2335 = vpop.f32.mrf.mxu0
        %2336 = vmatprep.mubr.bf16.mxu0 0
        %2337 = vmatmul.mubr.bf16.gmra.mxu0 %v2154
        %v2338 = vpop.f32.mrf.mxu0
        %v2339 = vadd.f32 %v2093, %v2338
        %v2340 = vpop.f32.mrf.mxu0
        %v2341 = vpop.f32.mrf.mxu0
        %v2342 = vadd.f32 %v2093, %v2341
        %v2343 = vpop.f32.mrf.mxu0
        %2344 = vmatprep.mubr.bf16.mxu0 0
        %2345 = vmatmul.mubr.bf16.gmra.mxu0 %v2157
        %v2346 = vpop.f32.mrf.mxu0
        %v2347 = vadd.f32 %v2093, %v2346
        %v2348 = vpop.f32.mrf.mxu0
        %v2349 = vpop.f32.mrf.mxu0
        %v2350 = vadd.f32 %v2093, %v2349
        %v2351 = vpop.f32.mrf.mxu0
        %2352 = vmatprep.mubr.bf16.mxu0 0
        %2353 = vmatmul.mubr.bf16.gmra.mxu0 %v2160
        %v2354 = vpop.f32.mrf.mxu0
        %v2355 = vadd.f32 %v2093, %v2354
        %v2356 = vpop.f32.mrf.mxu0
        %v2357 = vpop.f32.mrf.mxu0
        %v2358 = vadd.f32 %v2093, %v2357
        %v2359 = vpop.f32.mrf.mxu0
        %2360 = vmatprep.mubr.bf16.mxu0 0
        %2361 = vmatmul.mubr.bf16.gmra.mxu0 %v2163
        %v2362 = vpop.f32.mrf.mxu0
        %v2363 = vadd.f32 %v2093, %v2362
        %v2364 = vpop.f32.mrf.mxu0
        %v2365 = vpop.f32.mrf.mxu0
        %v2366 = vadd.f32 %v2093, %v2365
        %v2367 = vpop.f32.mrf.mxu0
        %2368 = vmatprep.mubr.bf16.mxu0 0
        %2369 = vmatmul.mubr.bf16.gmra.mxu0 %v2166
        %v2370 = vpop.f32.mrf.mxu0
        %v2371 = vadd.f32 %v2093, %v2370
        %v2372 = vpop.f32.mrf.mxu0
        %v2373 = vpop.f32.mrf.mxu0
        %v2374 = vadd.f32 %v2093, %v2373
        %v2375 = vpop.f32.mrf.mxu0
        %2376 = vmatprep.mubr.bf16.mxu0 0
        %2377 = vmatmul.mubr.bf16.gmra.mxu0 %v2169
        %v2378 = vpop.f32.mrf.mxu0
        %v2379 = vadd.f32 %v2093, %v2378
        %v2380 = vpop.f32.mrf.mxu0
        %v2381 = vpop.f32.mrf.mxu0
        %v2382 = vadd.f32 %v2093, %v2381
        %v2383 = vpop.f32.mrf.mxu0
        %2384 = vmatprep.mubr.bf16.mxu0 0
        %2385 = vmatmul.mubr.bf16.gmra.mxu0 %v2172
        %v2386 = vpop.f32.mrf.mxu0
        %v2387 = vadd.f32 %v2093, %v2386
        %v2388 = vpop.f32.mrf.mxu0
        %v2389 = vpop.f32.mrf.mxu0
        %v2390 = vadd.f32 %v2093, %v2389
        %v2391 = vpop.f32.mrf.mxu0
        %2392 = vmatprep.mubr.bf16.mxu0 0
        %2393 = vmatmul.mubr.bf16.gmra.mxu0 %v2175
        %v2394 = vpop.f32.mrf.mxu0
        %v2395 = vadd.f32 %v2093, %v2394
        %v2396 = vpop.f32.mrf.mxu0
        %v2397 = vpop.f32.mrf.mxu0
        %v2398 = vadd.f32 %v2093, %v2397
        %v2399 = vpop.f32.mrf.mxu0
        %2400 = vmatprep.mubr.bf16.mxu0 0
        %2401 = vmatmul.mubr.bf16.gmra.mxu0 %v2178
        %v2402 = vpop.f32.mrf.mxu0
        %v2403 = vadd.f32 %v2093, %v2402
        %v2404 = vpop.f32.mrf.mxu0
        %v2405 = vpop.f32.mrf.mxu0
        %v2406 = vadd.f32 %v2093, %v2405
        %v2407 = vpop.f32.mrf.mxu0
        %2408 = vmatprep.mubr.bf16.mxu0 0
        %2409 = vmatmul.mubr.bf16.gmra.mxu0 %v2181
        %v2410 = vpop.f32.mrf.mxu0
        %v2411 = vadd.f32 %v2093, %v2410
        %v2412 = vpop.f32.mrf.mxu0
        %v2413 = vpop.f32.mrf.mxu0
        %v2414 = vadd.f32 %v2093, %v2413
        %v2415 = vpop.f32.mrf.mxu0
        %2416 = vmatprep.mubr.bf16.mxu0 0
        %2417 = vmatmul.mubr.bf16.gmra.mxu0 %v2184
        %v2418 = vpop.f32.mrf.mxu0
        %v2419 = vadd.f32 %v2093, %v2418
        %v2420 = vpop.f32.mrf.mxu0
        %v2421 = vpop.f32.mrf.mxu0
        %v2422 = vadd.f32 %v2093, %v2421
        %v2423 = vpop.f32.mrf.mxu0
        %2424 = vmatprep.mubr.bf16.mxu0 0
        %2425 = vmatmul.mubr.bf16.gmra.mxu0 %v2187
        %v2426 = vpop.f32.mrf.mxu0
        %v2427 = vadd.f32 %v2093, %v2426
        %v2428 = vpop.f32.mrf.mxu0
        %v2429 = vpop.f32.mrf.mxu0
        %v2430 = vadd.f32 %v2093, %v2429
        %v2431 = vpop.f32.mrf.mxu0
        %2432 = vmatprep.mubr.bf16.mxu0 0
        %2433 = vmatmul.mubr.bf16.gmra.mxu0 %v2190
        %v2434 = vpop.f32.mrf.mxu0
        %v2435 = vadd.f32 %v2093, %v2434
        %v2436 = vpop.f32.mrf.mxu0
        %v2437 = vpop.f32.mrf.mxu0
        %v2438 = vadd.f32 %v2093, %v2437
        %v2439 = vpop.f32.mrf.mxu0
        %2440 = vmatprep.mubr.bf16.mxu0 0
        %2441 = vmatmul.mubr.bf16.gmra.mxu0 %v2193
        %v2442 = vpop.f32.mrf.mxu0
        %v2443 = vadd.f32 %v2093, %v2442
        %v2444 = vpop.f32.mrf.mxu0
        %v2445 = vpop.f32.mrf.mxu0
        %v2446 = vadd.f32 %v2093, %v2445
        %v2447 = vpop.f32.mrf.mxu0
        %2448 = vmatprep.mubr.bf16.mxu0 0
        %2449 = vmatmul.mubr.bf16.gmra.mxu0 %v2196
        %v2450 = vpop.f32.mrf.mxu0
        %v2451 = vadd.f32 %v2093, %v2450
        %v2452 = vpop.f32.mrf.mxu0
        %v2453 = vpop.f32.mrf.mxu0
        %v2454 = vadd.f32 %v2093, %v2453
        %v2455 = vpop.f32.mrf.mxu0
        %2456 = vmatprep.mubr.bf16.mxu0 0
        %2457 = vmatmul.mubr.bf16.gmra.mxu0 %v2199
        %v2458 = vpop.f32.mrf.mxu0
        %v2459 = vadd.f32 %v2093, %v2458
        %v2460 = vpop.f32.mrf.mxu0
        %v2461 = vpop.f32.mrf.mxu0
        %v2462 = vadd.f32 %v2093, %v2461
        %v2463 = vpop.f32.mrf.mxu0
        %2464 = vmatprep.mubr.bf16.mxu0 0
        %2465 = vmatmul.mubr.bf16.gmra.mxu0 %v2202
        %v2466 = vpop.f32.mrf.mxu0
        %v2467 = vadd.f32 %v2093, %v2466
        %v2468 = vpop.f32.mrf.mxu0
        %v2469 = vpop.f32.mrf.mxu0
        %v2470 = vadd.f32 %v2093, %v2469
        %v2471 = vpop.f32.mrf.mxu0
        %2472 = vmatprep.mubr.bf16.mxu0 0
        %2473 = vmatmul.mubr.bf16.gmra.mxu0 %v2205
        %v2474 = vpop.f32.mrf.mxu0
        %v2475 = vadd.f32 %v2093, %v2474
        %v2476 = vpop.f32.mrf.mxu0
        %v2477 = vpop.f32.mrf.mxu0
        %v2478 = vadd.f32 %v2093, %v2477
        %v2479 = vpop.f32.mrf.mxu0
        %2480 = vmatprep.mubr.bf16.mxu0 0
        %2481 = vmatmul.mubr.bf16.gmra.mxu0 %v2208
        %v2482 = vpop.f32.mrf.mxu0
        %v2483 = vadd.f32 %v2093, %v2482
        %v2484 = vpop.f32.mrf.mxu0
        %v2485 = vpop.f32.mrf.mxu0
        %v2486 = vadd.f32 %v2093, %v2485
        %v2487 = vpop.f32.mrf.mxu0
        %2488 = vmatprep.mubr.bf16.mxu0 0
        %2489 = vmatmul.mubr.bf16.gmra.mxu0 %v2211
        %v2490 = vpop.f32.mrf.mxu0
        %v2491 = vadd.f32 %v2093, %v2490
        %v2492 = vpop.f32.mrf.mxu0
        %v2493 = vpop.f32.mrf.mxu0
        %v2494 = vadd.f32 %v2093, %v2493
        %v2495 = vpop.f32.mrf.mxu0
        %2496 = vmatprep.mubr.bf16.mxu0 0
        %2497 = vmatmul.mubr.bf16.gmra.mxu0 %v2214
        %v2498 = vpop.f32.mrf.mxu0
        %v2499 = vadd.f32 %v2093, %v2498
        %v2500 = vpop.f32.mrf.mxu0
        %v2501 = vpop.f32.mrf.mxu0
        %v2502 = vadd.f32 %v2093, %v2501
        %v2503 = vpop.f32.mrf.mxu0
        %2504 = vdwg.mxu0
        %v2505 = vmax.f32 %v2251, 0.0
        %v2506 = vmax.f32 %v2254, 0.0
        %v2507 = vmax.f32 %v2259, 0.0
        %v2508 = vmax.f32 %v2262, 0.0
        %v2509 = vmax.f32 %v2267, 0.0
        %v2510 = vmax.f32 %v2270, 0.0
        %v2511 = vmax.f32 %v2275, 0.0
        %v2512 = vmax.f32 %v2278, 0.0
        %v2513 = vmax.f32 %v2283, 0.0
        %v2514 = vmax.f32 %v2286, 0.0
        %v2515 = vmax.f32 %v2291, 0.0
        %v2516 = vmax.f32 %v2294, 0.0
        %v2517 = vmax.f32 %v2299, 0.0
        %v2518 = vmax.f32 %v2302, 0.0
        %v2519 = vmax.f32 %v2307, 0.0
        %v2520 = vmax.f32 %v2310, 0.0
        %v2521 = vmax.f32 %v2315, 0.0
        %v2522 = vmax.f32 %v2318, 0.0
        %v2523 = vmax.f32 %v2323, 0.0
        %v2524 = vmax.f32 %v2326, 0.0
        %v2525 = vmax.f32 %v2331, 0.0
        %v2526 = vmax.f32 %v2334, 0.0
        %v2527 = vmax.f32 %v2339, 0.0
        %v2528 = vmax.f32 %v2342, 0.0
        %v2529 = vmax.f32 %v2347, 0.0
        %v2530 = vmax.f32 %v2350, 0.0
        %v2531 = vmax.f32 %v2355, 0.0
        %v2532 = vmax.f32 %v2358, 0.0
        %v2533 = vmax.f32 %v2363, 0.0
        %v2534 = vmax.f32 %v2366, 0.0
        %v2535 = vmax.f32 %v2371, 0.0
        %v2536 = vmax.f32 %v2374, 0.0
        %v2537 = vmax.f32 %v2379, 0.0
        %v2538 = vmax.f32 %v2382, 0.0
        %v2539 = vmax.f32 %v2387, 0.0
        %v2540 = vmax.f32 %v2390, 0.0
        %v2541 = vmax.f32 %v2395, 0.0
        %v2542 = vmax.f32 %v2398, 0.0
        %v2543 = vmax.f32 %v2403, 0.0
        %v2544 = vmax.f32 %v2406, 0.0
        %v2545 = vmax.f32 %v2411, 0.0
        %v2546 = vmax.f32 %v2414, 0.0
        %v2547 = vmax.f32 %v2419, 0.0
        %v2548 = vmax.f32 %v2422, 0.0
        %v2549 = vmax.f32 %v2427, 0.0
        %v2550 = vmax.f32 %v2430, 0.0
        %v2551 = vmax.f32 %v2435, 0.0
        %v2552 = vmax.f32 %v2438, 0.0
        %v2553 = vmax.f32 %v2443, 0.0
        %v2554 = vmax.f32 %v2446, 0.0
        %v2555 = vmax.f32 %v2451, 0.0
        %v2556 = vmax.f32 %v2454, 0.0
        %v2557 = vmax.f32 %v2459, 0.0
        %v2558 = vmax.f32 %v2462, 0.0
        %v2559 = vmax.f32 %v2467, 0.0
        %v2560 = vmax.f32 %v2470, 0.0
        %v2561 = vmax.f32 %v2475, 0.0
        %v2562 = vmax.f32 %v2478, 0.0
        %v2563 = vmax.f32 %v2483, 0.0
        %v2564 = vmax.f32 %v2486, 0.0
        %v2565 = vmax.f32 %v2491, 0.0
        %v2566 = vmax.f32 %v2494, 0.0
        %v2567 = vmax.f32 %v2499, 0.0
        %v2568 = vmax.f32 %v2502, 0.0
        %v2569 = vpack.c.bf16 %v2506, %v2505
        %v2570 = vpack.c.bf16 %v2508, %v2507
        %v2571 = vpack.c.bf16 %v2510, %v2509
        %v2572 = vpack.c.bf16 %v2512, %v2511
        %v2573 = vpack.c.bf16 %v2514, %v2513
        %v2574 = vpack.c.bf16 %v2516, %v2515
        %v2575 = vpack.c.bf16 %v2518, %v2517
        %v2576 = vpack.c.bf16 %v2520, %v2519
        %v2577 = vpack.c.bf16 %v2522, %v2521
        %v2578 = vpack.c.bf16 %v2524, %v2523
        %v2579 = vpack.c.bf16 %v2526, %v2525
        %v2580 = vpack.c.bf16 %v2528, %v2527
        %v2581 = vpack.c.bf16 %v2530, %v2529
        %v2582 = vpack.c.bf16 %v2532, %v2531
        %v2583 = vpack.c.bf16 %v2534, %v2533
        %v2584 = vpack.c.bf16 %v2536, %v2535
        %v2585 = vpack.c.bf16 %v2538, %v2537
        %v2586 = vpack.c.bf16 %v2540, %v2539
        %v2587 = vpack.c.bf16 %v2542, %v2541
        %v2588 = vpack.c.bf16 %v2544, %v2543
        %v2589 = vpack.c.bf16 %v2546, %v2545
        %v2590 = vpack.c.bf16 %v2548, %v2547
        %v2591 = vpack.c.bf16 %v2550, %v2549
        %v2592 = vpack.c.bf16 %v2552, %v2551
        %v2593 = vpack.c.bf16 %v2554, %v2553
        %v2594 = vpack.c.bf16 %v2556, %v2555
        %v2595 = vpack.c.bf16 %v2558, %v2557
        %v2596 = vpack.c.bf16 %v2560, %v2559
        %v2597 = vpack.c.bf16 %v2562, %v2561
        %v2598 = vpack.c.bf16 %v2564, %v2563
        %v2599 = vpack.c.bf16 %v2566, %v2565
        %v2600 = vpack.c.bf16 %v2568, %v2567
        %v2601 = vld [vmem:[%s7] sm:$0xf]
        %v2602 = vld [vmem:[%s7 + $0x4] sm:$0xf]
        %v2603 = vld [vmem:[%s7 + $0x8] sm:$0xf]
        %v2604 = vld [vmem:[%s7 + $0xc] sm:$0xf]
        %v2605 = vld [vmem:[%s8] sm:$0x1]
        %v2607 = vlaneseq
        %v2608 = vshrl.u32 %v2607, 7
        %v2609 = vsub.s32 0, %v2608
        %v2610 = vrot.slane %v2605, %v2609
        %v2616 = vunpack.c.l.b16 %v2601
        %v2617 = vunpack.c.l.b16 %v2602
        %v2618 = vunpack.c.l.b16 %v2603
        %v2619 = vunpack.c.l.b16 %v2604
        %v2620 = vpack.c.b16 %v2617, %v2616
        %v2621 = vpack.c.b16 %v2619, %v2618
        %vm2624 = vcmask 261120
        %v2626 = vsel %vm2624, %v2569, 0
        %v2629 = vsel %vm2624, %v2570, 0
        %v2632 = vsel %vm2624, %v2571, 0
        %v2635 = vsel %vm2624, %v2572, 0
        %v2638 = vsel %vm2624, %v2573, 0
        %v2641 = vsel %vm2624, %v2574, 0
        %v2644 = vsel %vm2624, %v2575, 0
        %v2647 = vsel %vm2624, %v2576, 0
        %v2650 = vsel %vm2624, %v2577, 0
        %v2653 = vsel %vm2624, %v2578, 0
        %v2656 = vsel %vm2624, %v2579, 0
        %v2659 = vsel %vm2624, %v2580, 0
        %v2662 = vsel %vm2624, %v2581, 0
        %v2665 = vsel %vm2624, %v2582, 0
        %v2668 = vsel %vm2624, %v2583, 0
        %v2671 = vsel %vm2624, %v2584, 0
        %v2674 = vsel %vm2624, %v2585, 0
        %v2677 = vsel %vm2624, %v2586, 0
        %v2680 = vsel %vm2624, %v2587, 0
        %v2683 = vsel %vm2624, %v2588, 0
        %v2686 = vsel %vm2624, %v2589, 0
        %v2689 = vsel %vm2624, %v2590, 0
        %v2692 = vsel %vm2624, %v2591, 0
        %v2695 = vsel %vm2624, %v2592, 0
        %v2698 = vsel %vm2624, %v2593, 0
        %v2701 = vsel %vm2624, %v2594, 0
        %v2704 = vsel %vm2624, %v2595, 0
        %v2707 = vsel %vm2624, %v2596, 0
        %v2710 = vsel %vm2624, %v2597, 0
        %v2713 = vsel %vm2624, %v2598, 0
        %v2716 = vsel %vm2624, %v2599, 0
        %v2719 = vsel %vm2624, %v2600, 0
        %2721 = vmatprep.subr.bf16.mxu0 0
        %2722 = vmatpush1.bf16.msra.mxu0 0
        %2723 = vmatprep.subr.bf16.mxu0 0
        %2724 = vmatpush1.bf16.msra.mxu0 0
        %2725 = vmatprep.subr.bf16.mxu0 0
        %2726 = vmatpush1.bf16.msra.mxu0 0
        %2727 = vmatprep.subr.bf16.mxu0 0
        %2728 = vmatpush1.bf16.msra.mxu0 0
        %2729 = vmatprep.subr.bf16.mxu0 0
        %2730 = vmatpush1.bf16.msra.mxu0 0
        %2731 = vmatprep.subr.bf16.mxu0 0
        %2732 = vmatpush1.bf16.msra.mxu0 0
        %2733 = vmatprep.subr.bf16.mxu0 0
        %2734 = vmatpush1.bf16.msra.mxu0 %v2621
        %2735 = vmatprep.subr.bf16.mxu0 0
        %2736 = vmatpush1.bf16.msra.mxu0 %v2620
        %2737 = vmatprep.subr.bf16.mxu0 0
        %2738 = vmatpush2.bf16.msra.mxu0 0
        %2739 = vmatprep.subr.bf16.mxu0 0
        %2740 = vmatpush2.bf16.msra.mxu0 0
        %2741 = vmatprep.subr.bf16.mxu0 0
        %2742 = vmatpush2.bf16.msra.mxu0 0
        %2743 = vmatprep.subr.bf16.mxu0 0
        %2744 = vmatpush2.bf16.msra.mxu0 0
        %2745 = vmatprep.subr.bf16.mxu0 0
        %2746 = vmatpush2.bf16.msra.mxu0 0
        %2747 = vmatprep.subr.bf16.mxu0 0
        %2748 = vmatpush2.bf16.msra.mxu0 0
        %2749 = vmatprep.subr.bf16.mxu0 0
        %2750 = vmatpush2.bf16.msra.mxu0 0
        %2751 = vmatprep.subr.bf16.mxu0 0
        %2752 = vmatpush2.bf16.msra.mxu0 0
        %2753 = vmatprep.mubr.bf16.mxu0 0
        %2754 = vmatmul.mubr.bf16.gmra.mxu0 %v2626
        %v2755 = vpop.f32.mrf.mxu0
        %v2756 = vadd.f32 %v2610, %v2755
        %v2757 = vpop.f32.mrf.mxu0
        %v2758 = vpop.f32.mrf.mxu0
        %v2759 = vadd.f32 %v2610, %v2758
        %v2760 = vpop.f32.mrf.mxu0
        %2761 = vmatprep.mubr.bf16.mxu0 0
        %2762 = vmatmul.mubr.bf16.gmra.mxu0 %v2629
        %v2763 = vpop.f32.mrf.mxu0
        %v2764 = vadd.f32 %v2610, %v2763
        %v2765 = vpop.f32.mrf.mxu0
        %v2766 = vpop.f32.mrf.mxu0
        %v2767 = vadd.f32 %v2610, %v2766
        %v2768 = vpop.f32.mrf.mxu0
        %2769 = vmatprep.mubr.bf16.mxu0 0
        %2770 = vmatmul.mubr.bf16.gmra.mxu0 %v2632
        %v2771 = vpop.f32.mrf.mxu0
        %v2772 = vadd.f32 %v2610, %v2771
        %v2773 = vpop.f32.mrf.mxu0
        %v2774 = vpop.f32.mrf.mxu0
        %v2775 = vadd.f32 %v2610, %v2774
        %v2776 = vpop.f32.mrf.mxu0
        %2777 = vmatprep.mubr.bf16.mxu0 0
        %2778 = vmatmul.mubr.bf16.gmra.mxu0 %v2635
        %v2779 = vpop.f32.mrf.mxu0
        %v2780 = vadd.f32 %v2610, %v2779
        %v2781 = vpop.f32.mrf.mxu0
        %v2782 = vpop.f32.mrf.mxu0
        %v2783 = vadd.f32 %v2610, %v2782
        %v2784 = vpop.f32.mrf.mxu0
        %2785 = vmatprep.mubr.bf16.mxu0 0
        %2786 = vmatmul.mubr.bf16.gmra.mxu0 %v2638
        %v2787 = vpop.f32.mrf.mxu0
        %v2788 = vadd.f32 %v2610, %v2787
        %v2789 = vpop.f32.mrf.mxu0
        %v2790 = vpop.f32.mrf.mxu0
        %v2791 = vadd.f32 %v2610, %v2790
        %v2792 = vpop.f32.mrf.mxu0
        %2793 = vmatprep.mubr.bf16.mxu0 0
        %2794 = vmatmul.mubr.bf16.gmra.mxu0 %v2641
        %v2795 = vpop.f32.mrf.mxu0
        %v2796 = vadd.f32 %v2610, %v2795
        %v2797 = vpop.f32.mrf.mxu0
        %v2798 = vpop.f32.mrf.mxu0
        %v2799 = vadd.f32 %v2610, %v2798
        %v2800 = vpop.f32.mrf.mxu0
        %2801 = vmatprep.mubr.bf16.mxu0 0
        %2802 = vmatmul.mubr.bf16.gmra.mxu0 %v2644
        %v2803 = vpop.f32.mrf.mxu0
        %v2804 = vadd.f32 %v2610, %v2803
        %v2805 = vpop.f32.mrf.mxu0
        %v2806 = vpop.f32.mrf.mxu0
        %v2807 = vadd.f32 %v2610, %v2806
        %v2808 = vpop.f32.mrf.mxu0
        %2809 = vmatprep.mubr.bf16.mxu0 0
        %2810 = vmatmul.mubr.bf16.gmra.mxu0 %v2647
        %v2811 = vpop.f32.mrf.mxu0
        %v2812 = vadd.f32 %v2610, %v2811
        %v2813 = vpop.f32.mrf.mxu0
        %v2814 = vpop.f32.mrf.mxu0
        %v2815 = vadd.f32 %v2610, %v2814
        %v2816 = vpop.f32.mrf.mxu0
        %2817 = vmatprep.mubr.bf16.mxu0 0
        %2818 = vmatmul.mubr.bf16.gmra.mxu0 %v2650
        %v2819 = vpop.f32.mrf.mxu0
        %v2820 = vadd.f32 %v2610, %v2819
        %v2821 = vpop.f32.mrf.mxu0
        %v2822 = vpop.f32.mrf.mxu0
        %v2823 = vadd.f32 %v2610, %v2822
        %v2824 = vpop.f32.mrf.mxu0
        %2825 = vmatprep.mubr.bf16.mxu0 0
        %2826 = vmatmul.mubr.bf16.gmra.mxu0 %v2653
        %v2827 = vpop.f32.mrf.mxu0
        %v2828 = vadd.f32 %v2610, %v2827
        %v2829 = vpop.f32.mrf.mxu0
        %v2830 = vpop.f32.mrf.mxu0
        %v2831 = vadd.f32 %v2610, %v2830
        %v2832 = vpop.f32.mrf.mxu0
        %2833 = vmatprep.mubr.bf16.mxu0 0
        %2834 = vmatmul.mubr.bf16.gmra.mxu0 %v2656
        %v2835 = vpop.f32.mrf.mxu0
        %v2836 = vadd.f32 %v2610, %v2835
        %v2837 = vpop.f32.mrf.mxu0
        %v2838 = vpop.f32.mrf.mxu0
        %v2839 = vadd.f32 %v2610, %v2838
        %v2840 = vpop.f32.mrf.mxu0
        %2841 = vmatprep.mubr.bf16.mxu0 0
        %2842 = vmatmul.mubr.bf16.gmra.mxu0 %v2659
        %v2843 = vpop.f32.mrf.mxu0
        %v2844 = vadd.f32 %v2610, %v2843
        %v2845 = vpop.f32.mrf.mxu0
        %v2846 = vpop.f32.mrf.mxu0
        %v2847 = vadd.f32 %v2610, %v2846
        %v2848 = vpop.f32.mrf.mxu0
        %2849 = vmatprep.mubr.bf16.mxu0 0
        %2850 = vmatmul.mubr.bf16.gmra.mxu0 %v2662
        %v2851 = vpop.f32.mrf.mxu0
        %v2852 = vadd.f32 %v2610, %v2851
        %v2853 = vpop.f32.mrf.mxu0
        %v2854 = vpop.f32.mrf.mxu0
        %v2855 = vadd.f32 %v2610, %v2854
        %v2856 = vpop.f32.mrf.mxu0
        %2857 = vmatprep.mubr.bf16.mxu0 0
        %2858 = vmatmul.mubr.bf16.gmra.mxu0 %v2665
        %v2859 = vpop.f32.mrf.mxu0
        %v2860 = vadd.f32 %v2610, %v2859
        %v2861 = vpop.f32.mrf.mxu0
        %v2862 = vpop.f32.mrf.mxu0
        %v2863 = vadd.f32 %v2610, %v2862
        %v2864 = vpop.f32.mrf.mxu0
        %2865 = vmatprep.mubr.bf16.mxu0 0
        %2866 = vmatmul.mubr.bf16.gmra.mxu0 %v2668
        %v2867 = vpop.f32.mrf.mxu0
        %v2868 = vadd.f32 %v2610, %v2867
        %v2869 = vpop.f32.mrf.mxu0
        %v2870 = vpop.f32.mrf.mxu0
        %v2871 = vadd.f32 %v2610, %v2870
        %v2872 = vpop.f32.mrf.mxu0
        %2873 = vmatprep.mubr.bf16.mxu0 0
        %2874 = vmatmul.mubr.bf16.gmra.mxu0 %v2671
        %v2875 = vpop.f32.mrf.mxu0
        %v2876 = vadd.f32 %v2610, %v2875
        %v2877 = vpop.f32.mrf.mxu0
        %v2878 = vpop.f32.mrf.mxu0
        %v2879 = vadd.f32 %v2610, %v2878
        %v2880 = vpop.f32.mrf.mxu0
        %2881 = vmatprep.mubr.bf16.mxu0 0
        %2882 = vmatmul.mubr.bf16.gmra.mxu0 %v2674
        %v2883 = vpop.f32.mrf.mxu0
        %v2884 = vadd.f32 %v2610, %v2883
        %v2885 = vpop.f32.mrf.mxu0
        %v2886 = vpop.f32.mrf.mxu0
        %v2887 = vadd.f32 %v2610, %v2886
        %v2888 = vpop.f32.mrf.mxu0
        %2889 = vmatprep.mubr.bf16.mxu0 0
        %2890 = vmatmul.mubr.bf16.gmra.mxu0 %v2677
        %v2891 = vpop.f32.mrf.mxu0
        %v2892 = vadd.f32 %v2610, %v2891
        %v2893 = vpop.f32.mrf.mxu0
        %v2894 = vpop.f32.mrf.mxu0
        %v2895 = vadd.f32 %v2610, %v2894
        %v2896 = vpop.f32.mrf.mxu0
        %2897 = vmatprep.mubr.bf16.mxu0 0
        %2898 = vmatmul.mubr.bf16.gmra.mxu0 %v2680
        %v2899 = vpop.f32.mrf.mxu0
        %v2900 = vadd.f32 %v2610, %v2899
        %v2901 = vpop.f32.mrf.mxu0
        %v2902 = vpop.f32.mrf.mxu0
        %v2903 = vadd.f32 %v2610, %v2902
        %v2904 = vpop.f32.mrf.mxu0
        %2905 = vmatprep.mubr.bf16.mxu0 0
        %2906 = vmatmul.mubr.bf16.gmra.mxu0 %v2683
        %v2907 = vpop.f32.mrf.mxu0
        %v2908 = vadd.f32 %v2610, %v2907
        %v2909 = vpop.f32.mrf.mxu0
        %v2910 = vpop.f32.mrf.mxu0
        %v2911 = vadd.f32 %v2610, %v2910
        %v2912 = vpop.f32.mrf.mxu0
        %2913 = vmatprep.mubr.bf16.mxu0 0
        %2914 = vmatmul.mubr.bf16.gmra.mxu0 %v2686
        %v2915 = vpop.f32.mrf.mxu0
        %v2916 = vadd.f32 %v2610, %v2915
        %v2917 = vpop.f32.mrf.mxu0
        %v2918 = vpop.f32.mrf.mxu0
        %v2919 = vadd.f32 %v2610, %v2918
        %v2920 = vpop.f32.mrf.mxu0
        %2921 = vmatprep.mubr.bf16.mxu0 0
        %2922 = vmatmul.mubr.bf16.gmra.mxu0 %v2689
        %v2923 = vpop.f32.mrf.mxu0
        %v2924 = vadd.f32 %v2610, %v2923
        %v2925 = vpop.f32.mrf.mxu0
        %v2926 = vpop.f32.mrf.mxu0
        %v2927 = vadd.f32 %v2610, %v2926
        %v2928 = vpop.f32.mrf.mxu0
        %2929 = vmatprep.mubr.bf16.mxu0 0
        %2930 = vmatmul.mubr.bf16.gmra.mxu0 %v2692
        %v2931 = vpop.f32.mrf.mxu0
        %v2932 = vadd.f32 %v2610, %v2931
        %v2933 = vpop.f32.mrf.mxu0
        %v2934 = vpop.f32.mrf.mxu0
        %v2935 = vadd.f32 %v2610, %v2934
        %v2936 = vpop.f32.mrf.mxu0
        %2937 = vmatprep.mubr.bf16.mxu0 0
        %2938 = vmatmul.mubr.bf16.gmra.mxu0 %v2695
        %v2939 = vpop.f32.mrf.mxu0
        %v2940 = vadd.f32 %v2610, %v2939
        %v2941 = vpop.f32.mrf.mxu0
        %v2942 = vpop.f32.mrf.mxu0
        %v2943 = vadd.f32 %v2610, %v2942
        %v2944 = vpop.f32.mrf.mxu0
        %2945 = vmatprep.mubr.bf16.mxu0 0
        %2946 = vmatmul.mubr.bf16.gmra.mxu0 %v2698
        %v2947 = vpop.f32.mrf.mxu0
        %v2948 = vadd.f32 %v2610, %v2947
        %v2949 = vpop.f32.mrf.mxu0
        %v2950 = vpop.f32.mrf.mxu0
        %v2951 = vadd.f32 %v2610, %v2950
        %v2952 = vpop.f32.mrf.mxu0
        %2953 = vmatprep.mubr.bf16.mxu0 0
        %2954 = vmatmul.mubr.bf16.gmra.mxu0 %v2701
        %v2955 = vpop.f32.mrf.mxu0
        %v2956 = vadd.f32 %v2610, %v2955
        %v2957 = vpop.f32.mrf.mxu0
        %v2958 = vpop.f32.mrf.mxu0
        %v2959 = vadd.f32 %v2610, %v2958
        %v2960 = vpop.f32.mrf.mxu0
        %2961 = vmatprep.mubr.bf16.mxu0 0
        %2962 = vmatmul.mubr.bf16.gmra.mxu0 %v2704
        %v2963 = vpop.f32.mrf.mxu0
        %v2964 = vadd.f32 %v2610, %v2963
        %v2965 = vpop.f32.mrf.mxu0
        %v2966 = vpop.f32.mrf.mxu0
        %v2967 = vadd.f32 %v2610, %v2966
        %v2968 = vpop.f32.mrf.mxu0
        %2969 = vmatprep.mubr.bf16.mxu0 0
        %2970 = vmatmul.mubr.bf16.gmra.mxu0 %v2707
        %v2971 = vpop.f32.mrf.mxu0
        %v2972 = vadd.f32 %v2610, %v2971
        %v2973 = vpop.f32.mrf.mxu0
        %v2974 = vpop.f32.mrf.mxu0
        %v2975 = vadd.f32 %v2610, %v2974
        %v2976 = vpop.f32.mrf.mxu0
        %2977 = vmatprep.mubr.bf16.mxu0 0
        %2978 = vmatmul.mubr.bf16.gmra.mxu0 %v2710
        %v2979 = vpop.f32.mrf.mxu0
        %v2980 = vadd.f32 %v2610, %v2979
        %v2981 = vpop.f32.mrf.mxu0
        %v2982 = vpop.f32.mrf.mxu0
        %v2983 = vadd.f32 %v2610, %v2982
        %v2984 = vpop.f32.mrf.mxu0
        %2985 = vmatprep.mubr.bf16.mxu0 0
        %2986 = vmatmul.mubr.bf16.gmra.mxu0 %v2713
        %v2987 = vpop.f32.mrf.mxu0
        %v2988 = vadd.f32 %v2610, %v2987
        %v2989 = vpop.f32.mrf.mxu0
        %v2990 = vpop.f32.mrf.mxu0
        %v2991 = vadd.f32 %v2610, %v2990
        %v2992 = vpop.f32.mrf.mxu0
        %2993 = vmatprep.mubr.bf16.mxu0 0
        %2994 = vmatmul.mubr.bf16.gmra.mxu0 %v2716
        %v2995 = vpop.f32.mrf.mxu0
        %v2996 = vadd.f32 %v2610, %v2995
        %v2997 = vpop.f32.mrf.mxu0
        %v2998 = vpop.f32.mrf.mxu0
        %v2999 = vadd.f32 %v2610, %v2998
        %v3000 = vpop.f32.mrf.mxu0
        %3001 = vmatprep.mubr.bf16.mxu0 0
        %3002 = vmatmul.mubr.bf16.gmra.mxu0 %v2719
        %v3003 = vpop.f32.mrf.mxu0
        %v3004 = vadd.f32 %v2610, %v3003
        %v3005 = vpop.f32.mrf.mxu0
        %v3006 = vpop.f32.mrf.mxu0
        %v3007 = vadd.f32 %v2610, %v3006
        %v3008 = vpop.f32.mrf.mxu0
        %3009 = vdwg.mxu0
        %v3010 = vmul.f32 %v2756, 1.442695
        %v3011 = vpow.pop %v3010
        %v3012 = vmul.f32 %v2759, 1.442695
        %v3013 = vpow.pop %v3012
        %v3014 = vmul.f32 %v2764, 1.442695
        %v3015 = vpow.pop %v3014
        %v3016 = vmul.f32 %v2767, 1.442695
        %v3017 = vpow.pop %v3016
        %v3018 = vmul.f32 %v2772, 1.442695
        %v3019 = vpow.pop %v3018
        %v3020 = vmul.f32 %v2775, 1.442695
        %v3021 = vpow.pop %v3020
        %v3022 = vmul.f32 %v2780, 1.442695
        %v3023 = vpow.pop %v3022
        %v3024 = vmul.f32 %v2783, 1.442695
        %v3025 = vpow.pop %v3024
        %v3026 = vmul.f32 %v2788, 1.442695
        %v3027 = vpow.pop %v3026
        %v3028 = vmul.f32 %v2791, 1.442695
        %v3029 = vpow.pop %v3028
        %v3030 = vmul.f32 %v2796, 1.442695
        %v3031 = vpow.pop %v3030
        %v3032 = vmul.f32 %v2799, 1.442695
        %v3033 = vpow.pop %v3032
        %v3034 = vmul.f32 %v2804, 1.442695
        %v3035 = vpow.pop %v3034
        %v3036 = vmul.f32 %v2807, 1.442695
        %v3037 = vpow.pop %v3036
        %v3038 = vmul.f32 %v2812, 1.442695
        %v3039 = vpow.pop %v3038
        %v3040 = vmul.f32 %v2815, 1.442695
        %v3041 = vpow.pop %v3040
        %v3042 = vmul.f32 %v2820, 1.442695
        %v3043 = vpow.pop %v3042
        %v3044 = vmul.f32 %v2823, 1.442695
        %v3045 = vpow.pop %v3044
        %v3046 = vmul.f32 %v2828, 1.442695
        %v3047 = vpow.pop %v3046
        %v3048 = vmul.f32 %v2831, 1.442695
        %v3049 = vpow.pop %v3048
        %v3050 = vmul.f32 %v2836, 1.442695
        %v3051 = vpow.pop %v3050
        %v3052 = vmul.f32 %v2839, 1.442695
        %v3053 = vpow.pop %v3052
        %v3054 = vmul.f32 %v2844, 1.442695
        %v3055 = vpow.pop %v3054
        %v3056 = vmul.f32 %v2847, 1.442695
        %v3057 = vpow.pop %v3056
        %v3058 = vmul.f32 %v2852, 1.442695
        %v3059 = vpow.pop %v3058
        %v3060 = vmul.f32 %v2855, 1.442695
        %v3061 = vpow.pop %v3060
        %v3062 = vmul.f32 %v2860, 1.442695
        %v3063 = vpow.pop %v3062
        %v3064 = vmul.f32 %v2863, 1.442695
        %v3065 = vpow.pop %v3064
        %v3066 = vmul.f32 %v2868, 1.442695
        %v3067 = vpow.pop %v3066
        %v3068 = vmul.f32 %v2871, 1.442695
        %v3069 = vpow.pop %v3068
        %v3070 = vmul.f32 %v2876, 1.442695
        %v3071 = vpow.pop %v3070
        %v3072 = vmul.f32 %v2879, 1.442695
        %v3073 = vpow.pop %v3072
        %v3074 = vmul.f32 %v2884, 1.442695
        %v3075 = vpow.pop %v3074
        %v3076 = vmul.f32 %v2887, 1.442695
        %v3077 = vpow.pop %v3076
        %v3078 = vmul.f32 %v2892, 1.442695
        %v3079 = vpow.pop %v3078
        %v3080 = vmul.f32 %v2895, 1.442695
        %v3081 = vpow.pop %v3080
        %v3082 = vmul.f32 %v2900, 1.442695
        %v3083 = vpow.pop %v3082
        %v3084 = vmul.f32 %v2903, 1.442695
        %v3085 = vpow.pop %v3084
        %v3086 = vmul.f32 %v2908, 1.442695
        %v3087 = vpow.pop %v3086
        %v3088 = vmul.f32 %v2911, 1.442695
        %v3089 = vpow.pop %v3088
        %v3090 = vmul.f32 %v2916, 1.442695
        %v3091 = vpow.pop %v3090
        %v3092 = vmul.f32 %v2919, 1.442695
        %v3093 = vpow.pop %v3092
        %v3094 = vmul.f32 %v2924, 1.442695
        %v3095 = vpow.pop %v3094
        %v3096 = vmul.f32 %v2927, 1.442695
        %v3097 = vpow.pop %v3096
        %v3098 = vmul.f32 %v2932, 1.442695
        %v3099 = vpow.pop %v3098
        %v3100 = vmul.f32 %v2935, 1.442695
        %v3101 = vpow.pop %v3100
        %v3102 = vmul.f32 %v2940, 1.442695
        %v3103 = vpow.pop %v3102
        %v3104 = vmul.f32 %v2943, 1.442695
        %v3105 = vpow.pop %v3104
        %v3106 = vmul.f32 %v2948, 1.442695
        %v3107 = vpow.pop %v3106
        %v3108 = vmul.f32 %v2951, 1.442695
        %v3109 = vpow.pop %v3108
        %v3110 = vmul.f32 %v2956, 1.442695
        %v3111 = vpow.pop %v3110
        %v3112 = vmul.f32 %v2959, 1.442695
        %v3113 = vpow.pop %v3112
        %v3114 = vmul.f32 %v2964, 1.442695
        %v3115 = vpow.pop %v3114
        %v3116 = vmul.f32 %v2967, 1.442695
        %v3117 = vpow.pop %v3116
        %v3118 = vmul.f32 %v2972, 1.442695
        %v3119 = vpow.pop %v3118
        %v3120 = vmul.f32 %v2975, 1.442695
        %v3121 = vpow.pop %v3120
        %v3122 = vmul.f32 %v2980, 1.442695
        %v3123 = vpow.pop %v3122
        %v3124 = vmul.f32 %v2983, 1.442695
        %v3125 = vpow.pop %v3124
        %v3126 = vmul.f32 %v2988, 1.442695
        %v3127 = vpow.pop %v3126
        %v3128 = vmul.f32 %v2991, 1.442695
        %v3129 = vpow.pop %v3128
        %v3130 = vmul.f32 %v2996, 1.442695
        %v3131 = vpow.pop %v3130
        %v3132 = vmul.f32 %v2999, 1.442695
        %v3133 = vpow.pop %v3132
        %v3134 = vmul.f32 %v3004, 1.442695
        %v3135 = vpow.pop %v3134
        %v3136 = vmul.f32 %v3007, 1.442695
        %v3137 = vpow.pop %v3136
        %v3138 = vadd.f32 %v3011, 2.0
        %v3139 = vadd.f32 %v3013, 2.0
        %v3140 = vadd.f32 %v3015, 2.0
        %v3141 = vadd.f32 %v3017, 2.0
        %v3142 = vadd.f32 %v3019, 2.0
        %v3143 = vadd.f32 %v3021, 2.0
        %v3144 = vadd.f32 %v3023, 2.0
        %v3145 = vadd.f32 %v3025, 2.0
        %v3146 = vadd.f32 %v3027, 2.0
        %v3147 = vadd.f32 %v3029, 2.0
        %v3148 = vadd.f32 %v3031, 2.0
        %v3149 = vadd.f32 %v3033, 2.0
        %v3150 = vadd.f32 %v3035, 2.0
        %v3151 = vadd.f32 %v3037, 2.0
        %v3152 = vadd.f32 %v3039, 2.0
        %v3153 = vadd.f32 %v3041, 2.0
        %v3154 = vadd.f32 %v3043, 2.0
        %v3155 = vadd.f32 %v3045, 2.0
        %v3156 = vadd.f32 %v3047, 2.0
        %v3157 = vadd.f32 %v3049, 2.0
        %v3158 = vadd.f32 %v3051, 2.0
        %v3159 = vadd.f32 %v3053, 2.0
        %v3160 = vadd.f32 %v3055, 2.0
        %v3161 = vadd.f32 %v3057, 2.0
        %v3162 = vadd.f32 %v3059, 2.0
        %v3163 = vadd.f32 %v3061, 2.0
        %v3164 = vadd.f32 %v3063, 2.0
        %v3165 = vadd.f32 %v3065, 2.0
        %v3166 = vadd.f32 %v3067, 2.0
        %v3167 = vadd.f32 %v3069, 2.0
        %v3168 = vadd.f32 %v3071, 2.0
        %v3169 = vadd.f32 %v3073, 2.0
        %v3170 = vadd.f32 %v3075, 2.0
        %v3171 = vadd.f32 %v3077, 2.0
        %v3172 = vadd.f32 %v3079, 2.0
        %v3173 = vadd.f32 %v3081, 2.0
        %v3174 = vadd.f32 %v3083, 2.0
        %v3175 = vadd.f32 %v3085, 2.0
        %v3176 = vadd.f32 %v3087, 2.0
        %v3177 = vadd.f32 %v3089, 2.0
        %v3178 = vadd.f32 %v3091, 2.0
        %v3179 = vadd.f32 %v3093, 2.0
        %v3180 = vadd.f32 %v3095, 2.0
        %v3181 = vadd.f32 %v3097, 2.0
        %v3182 = vadd.f32 %v3099, 2.0
        %v3183 = vadd.f32 %v3101, 2.0
        %v3184 = vadd.f32 %v3103, 2.0
        %v3185 = vadd.f32 %v3105, 2.0
        %v3186 = vadd.f32 %v3107, 2.0
        %v3187 = vadd.f32 %v3109, 2.0
        %v3188 = vadd.f32 %v3111, 2.0
        %v3189 = vadd.f32 %v3113, 2.0
        %v3190 = vadd.f32 %v3115, 2.0
        %v3191 = vadd.f32 %v3117, 2.0
        %v3192 = vadd.f32 %v3119, 2.0
        %v3193 = vadd.f32 %v3121, 2.0
        %v3194 = vadd.f32 %v3123, 2.0
        %v3195 = vadd.f32 %v3125, 2.0
        %v3196 = vadd.f32 %v3127, 2.0
        %v3197 = vadd.f32 %v3129, 2.0
        %v3198 = vadd.f32 %v3131, 2.0
        %v3199 = vadd.f32 %v3133, 2.0
        %v3200 = vadd.f32 %v3135, 2.0
        %v3201 = vadd.f32 %v3137, 2.0
        %v3202 = vmul.f32 %v3011, %v3138
        %v3203 = vmul.f32 %v3013, %v3139
        %v3204 = vmul.f32 %v3015, %v3140
        %v3205 = vmul.f32 %v3017, %v3141
        %v3206 = vmul.f32 %v3019, %v3142
        %v3207 = vmul.f32 %v3021, %v3143
        %v3208 = vmul.f32 %v3023, %v3144
        %v3209 = vmul.f32 %v3025, %v3145
        %v3210 = vmul.f32 %v3027, %v3146
        %v3211 = vmul.f32 %v3029, %v3147
        %v3212 = vmul.f32 %v3031, %v3148
        %v3213 = vmul.f32 %v3033, %v3149
        %v3214 = vmul.f32 %v3035, %v3150
        %v3215 = vmul.f32 %v3037, %v3151
        %v3216 = vmul.f32 %v3039, %v3152
        %v3217 = vmul.f32 %v3041, %v3153
        %v3218 = vmul.f32 %v3043, %v3154
        %v3219 = vmul.f32 %v3045, %v3155
        %v3220 = vmul.f32 %v3047, %v3156
        %v3221 = vmul.f32 %v3049, %v3157
        %v3222 = vmul.f32 %v3051, %v3158
        %v3223 = vmul.f32 %v3053, %v3159
        %v3224 = vmul.f32 %v3055, %v3160
        %v3225 = vmul.f32 %v3057, %v3161
        %v3226 = vmul.f32 %v3059, %v3162
        %v3227 = vmul.f32 %v3061, %v3163
        %v3228 = vmul.f32 %v3063, %v3164
        %v3229 = vmul.f32 %v3065, %v3165
        %v3230 = vmul.f32 %v3067, %v3166
        %v3231 = vmul.f32 %v3069, %v3167
        %v3232 = vmul.f32 %v3071, %v3168
        %v3233 = vmul.f32 %v3073, %v3169
        %v3234 = vmul.f32 %v3075, %v3170
        %v3235 = vmul.f32 %v3077, %v3171
        %v3236 = vmul.f32 %v3079, %v3172
        %v3237 = vmul.f32 %v3081, %v3173
        %v3238 = vmul.f32 %v3083, %v3174
        %v3239 = vmul.f32 %v3085, %v3175
        %v3240 = vmul.f32 %v3087, %v3176
        %v3241 = vmul.f32 %v3089, %v3177
        %v3242 = vmul.f32 %v3091, %v3178
        %v3243 = vmul.f32 %v3093, %v3179
        %v3244 = vmul.f32 %v3095, %v3180
        %v3245 = vmul.f32 %v3097, %v3181
        %v3246 = vmul.f32 %v3099, %v3182
        %v3247 = vmul.f32 %v3101, %v3183
        %v3248 = vmul.f32 %v3103, %v3184
        %v3249 = vmul.f32 %v3105, %v3185
        %v3250 = vmul.f32 %v3107, %v3186
        %v3251 = vmul.f32 %v3109, %v3187
        %v3252 = vmul.f32 %v3111, %v3188
        %v3253 = vmul.f32 %v3113, %v3189
        %v3254 = vmul.f32 %v3115, %v3190
        %v3255 = vmul.f32 %v3117, %v3191
        %v3256 = vmul.f32 %v3119, %v3192
        %v3257 = vmul.f32 %v3121, %v3193
        %v3258 = vmul.f32 %v3123, %v3194
        %v3259 = vmul.f32 %v3125, %v3195
        %v3260 = vmul.f32 %v3127, %v3196
        %v3261 = vmul.f32 %v3129, %v3197
        %v3262 = vmul.f32 %v3131, %v3198
        %v3263 = vmul.f32 %v3133, %v3199
        %v3264 = vmul.f32 %v3135, %v3200
        %v3265 = vmul.f32 %v3137, %v3201
        %v3266 = vmul.f32 %v2756, %v3202
        %v3267 = vmul.f32 %v2759, %v3203
        %v3268 = vmul.f32 %v2764, %v3204
        %v3269 = vmul.f32 %v2767, %v3205
        %v3270 = vmul.f32 %v2772, %v3206
        %v3271 = vmul.f32 %v2775, %v3207
        %v3272 = vmul.f32 %v2780, %v3208
        %v3273 = vmul.f32 %v2783, %v3209
        %v3274 = vmul.f32 %v2788, %v3210
        %v3275 = vmul.f32 %v2791, %v3211
        %v3276 = vmul.f32 %v2796, %v3212
        %v3277 = vmul.f32 %v2799, %v3213
        %v3278 = vmul.f32 %v2804, %v3214
        %v3279 = vmul.f32 %v2807, %v3215
        %v3280 = vmul.f32 %v2812, %v3216
        %v3281 = vmul.f32 %v2815, %v3217
        %v3282 = vmul.f32 %v2820, %v3218
        %v3283 = vmul.f32 %v2823, %v3219
        %v3284 = vmul.f32 %v2828, %v3220
        %v3285 = vmul.f32 %v2831, %v3221
        %v3286 = vmul.f32 %v2836, %v3222
        %v3287 = vmul.f32 %v2839, %v3223
        %v3288 = vmul.f32 %v2844, %v3224
        %v3289 = vmul.f32 %v2847, %v3225
        %v3290 = vmul.f32 %v2852, %v3226
        %v3291 = vmul.f32 %v2855, %v3227
        %v3292 = vmul.f32 %v2860, %v3228
        %v3293 = vmul.f32 %v2863, %v3229
        %v3294 = vmul.f32 %v2868, %v3230
        %v3295 = vmul.f32 %v2871, %v3231
        %v3296 = vmul.f32 %v2876, %v3232
        %v3297 = vmul.f32 %v2879, %v3233
        %v3298 = vmul.f32 %v2884, %v3234
        %v3299 = vmul.f32 %v2887, %v3235
        %v3300 = vmul.f32 %v2892, %v3236
        %v3301 = vmul.f32 %v2895, %v3237
        %v3302 = vmul.f32 %v2900, %v3238
        %v3303 = vmul.f32 %v2903, %v3239
        %v3304 = vmul.f32 %v2908, %v3240
        %v3305 = vmul.f32 %v2911, %v3241
        %v3306 = vmul.f32 %v2916, %v3242
        %v3307 = vmul.f32 %v2919, %v3243
        %v3308 = vmul.f32 %v2924, %v3244
        %v3309 = vmul.f32 %v2927, %v3245
        %v3310 = vmul.f32 %v2932, %v3246
        %v3311 = vmul.f32 %v2935, %v3247
        %v3312 = vmul.f32 %v2940, %v3248
        %v3313 = vmul.f32 %v2943, %v3249
        %v3314 = vmul.f32 %v2948, %v3250
        %v3315 = vmul.f32 %v2951, %v3251
        %v3316 = vmul.f32 %v2956, %v3252
        %v3317 = vmul.f32 %v2959, %v3253
        %v3318 = vmul.f32 %v2964, %v3254
        %v3319 = vmul.f32 %v2967, %v3255
        %v3320 = vmul.f32 %v2972, %v3256
        %v3321 = vmul.f32 %v2975, %v3257
        %v3322 = vmul.f32 %v2980, %v3258
        %v3323 = vmul.f32 %v2983, %v3259
        %v3324 = vmul.f32 %v2988, %v3260
        %v3325 = vmul.f32 %v2991, %v3261
        %v3326 = vmul.f32 %v2996, %v3262
        %v3327 = vmul.f32 %v2999, %v3263
        %v3328 = vmul.f32 %v3004, %v3264
        %v3329 = vmul.f32 %v3007, %v3265
        %v3330 = vadd.f32 %v3202, 2.0
        %v3331 = vadd.f32 %v3203, 2.0
        %v3332 = vadd.f32 %v3204, 2.0
        %v3333 = vadd.f32 %v3205, 2.0
        %v3334 = vadd.f32 %v3206, 2.0
        %v3335 = vadd.f32 %v3207, 2.0
        %v3336 = vadd.f32 %v3208, 2.0
        %v3337 = vadd.f32 %v3209, 2.0
        %v3338 = vadd.f32 %v3210, 2.0
        %v3339 = vadd.f32 %v3211, 2.0
        %v3340 = vadd.f32 %v3212, 2.0
        %v3341 = vadd.f32 %v3213, 2.0
        %v3342 = vadd.f32 %v3214, 2.0
        %v3343 = vadd.f32 %v3215, 2.0
        %v3344 = vadd.f32 %v3216, 2.0
        %v3345 = vadd.f32 %v3217, 2.0
        %v3346 = vadd.f32 %v3218, 2.0
        %v3347 = vadd.f32 %v3219, 2.0
        %v3348 = vadd.f32 %v3220, 2.0
        %v3349 = vadd.f32 %v3221, 2.0
        %v3350 = vadd.f32 %v3222, 2.0
        %v3351 = vadd.f32 %v3223, 2.0
        %v3352 = vadd.f32 %v3224, 2.0
        %v3353 = vadd.f32 %v3225, 2.0
        %v3354 = vadd.f32 %v3226, 2.0
        %v3355 = vadd.f32 %v3227, 2.0
        %v3356 = vadd.f32 %v3228, 2.0
        %v3357 = vadd.f32 %v3229, 2.0
        %v3358 = vadd.f32 %v3230, 2.0
        %v3359 = vadd.f32 %v3231, 2.0
        %v3360 = vadd.f32 %v3232, 2.0
        %v3361 = vadd.f32 %v3233, 2.0
        %v3362 = vadd.f32 %v3234, 2.0
        %v3363 = vadd.f32 %v3235, 2.0
        %v3364 = vadd.f32 %v3236, 2.0
        %v3365 = vadd.f32 %v3237, 2.0
        %v3366 = vadd.f32 %v3238, 2.0
        %v3367 = vadd.f32 %v3239, 2.0
        %v3368 = vadd.f32 %v3240, 2.0
        %v3369 = vadd.f32 %v3241, 2.0
        %v3370 = vadd.f32 %v3242, 2.0
        %v3371 = vadd.f32 %v3243, 2.0
        %v3372 = vadd.f32 %v3244, 2.0
        %v3373 = vadd.f32 %v3245, 2.0
        %v3374 = vadd.f32 %v3246, 2.0
        %v3375 = vadd.f32 %v3247, 2.0
        %v3376 = vadd.f32 %v3248, 2.0
        %v3377 = vadd.f32 %v3249, 2.0
        %v3378 = vadd.f32 %v3250, 2.0
        %v3379 = vadd.f32 %v3251, 2.0
        %v3380 = vadd.f32 %v3252, 2.0
        %v3381 = vadd.f32 %v3253, 2.0
        %v3382 = vadd.f32 %v3254, 2.0
        %v3383 = vadd.f32 %v3255, 2.0
        %v3384 = vadd.f32 %v3256, 2.0
        %v3385 = vadd.f32 %v3257, 2.0
        %v3386 = vadd.f32 %v3258, 2.0
        %v3387 = vadd.f32 %v3259, 2.0
        %v3388 = vadd.f32 %v3260, 2.0
        %v3389 = vadd.f32 %v3261, 2.0
        %v3390 = vadd.f32 %v3262, 2.0
        %v3391 = vadd.f32 %v3263, 2.0
        %v3392 = vadd.f32 %v3264, 2.0
        %v3393 = vadd.f32 %v3265, 2.0
        %v3394 = vrcp.pop %v3330
        %v3395 = vrcp.pop %v3331
        %v3396 = vrcp.pop %v3332
        %v3397 = vrcp.pop %v3333
        %v3398 = vrcp.pop %v3334
        %v3399 = vrcp.pop %v3335
        %v3400 = vrcp.pop %v3336
        %v3401 = vrcp.pop %v3337
        %v3402 = vrcp.pop %v3338
        %v3403 = vrcp.pop %v3339
        %v3404 = vrcp.pop %v3340
        %v3405 = vrcp.pop %v3341
        %v3406 = vrcp.pop %v3342
        %v3407 = vrcp.pop %v3343
        %v3408 = vrcp.pop %v3344
        %v3409 = vrcp.pop %v3345
        %v3410 = vrcp.pop %v3346
        %v3411 = vrcp.pop %v3347
        %v3412 = vrcp.pop %v3348
        %v3413 = vrcp.pop %v3349
        %v3414 = vrcp.pop %v3350
        %v3415 = vrcp.pop %v3351
        %v3416 = vrcp.pop %v3352
        %v3417 = vrcp.pop %v3353
        %v3418 = vrcp.pop %v3354
        %v3419 = vrcp.pop %v3355
        %v3420 = vrcp.pop %v3356
        %v3421 = vrcp.pop %v3357
        %v3422 = vrcp.pop %v3358
        %v3423 = vrcp.pop %v3359
        %v3424 = vrcp.pop %v3360
        %v3425 = vrcp.pop %v3361
        %v3426 = vrcp.pop %v3362
        %v3427 = vrcp.pop %v3363
        %v3428 = vrcp.pop %v3364
        %v3429 = vrcp.pop %v3365
        %v3430 = vrcp.pop %v3366
        %v3431 = vrcp.pop %v3367
        %v3432 = vrcp.pop %v3368
        %v3433 = vrcp.pop %v3369
        %v3434 = vrcp.pop %v3370
        %v3435 = vrcp.pop %v3371
        %v3436 = vrcp.pop %v3372
        %v3437 = vrcp.pop %v3373
        %v3438 = vrcp.pop %v3374
        %v3439 = vrcp.pop %v3375
        %v3440 = vrcp.pop %v3376
        %v3441 = vrcp.pop %v3377
        %v3442 = vrcp.pop %v3378
        %v3443 = vrcp.pop %v3379
        %v3444 = vrcp.pop %v3380
        %v3445 = vrcp.pop %v3381
        %v3446 = vrcp.pop %v3382
        %v3447 = vrcp.pop %v3383
        %v3448 = vrcp.pop %v3384
        %v3449 = vrcp.pop %v3385
        %v3450 = vrcp.pop %v3386
        %v3451 = vrcp.pop %v3387
        %v3452 = vrcp.pop %v3388
        %v3453 = vrcp.pop %v3389
        %v3454 = vrcp.pop %v3390
        %v3455 = vrcp.pop %v3391
        %v3456 = vrcp.pop %v3392
        %v3457 = vrcp.pop %v3393
        %v3458 = vmul.f32 %v3266, %v3394
        %v3459 = vmul.f32 %v3267, %v3395
        %v3460 = vmul.f32 %v3268, %v3396
        %v3461 = vmul.f32 %v3269, %v3397
        %v3462 = vmul.f32 %v3270, %v3398
        %v3463 = vmul.f32 %v3271, %v3399
        %v3464 = vmul.f32 %v3272, %v3400
        %v3465 = vmul.f32 %v3273, %v3401
        %v3466 = vmul.f32 %v3274, %v3402
        %v3467 = vmul.f32 %v3275, %v3403
        %v3468 = vmul.f32 %v3276, %v3404
        %v3469 = vmul.f32 %v3277, %v3405
        %v3470 = vmul.f32 %v3278, %v3406
        %v3471 = vmul.f32 %v3279, %v3407
        %v3472 = vmul.f32 %v3280, %v3408
        %v3473 = vmul.f32 %v3281, %v3409
        %v3474 = vmul.f32 %v3282, %v3410
        %v3475 = vmul.f32 %v3283, %v3411
        %v3476 = vmul.f32 %v3284, %v3412
        %v3477 = vmul.f32 %v3285, %v3413
        %v3478 = vmul.f32 %v3286, %v3414
        %v3479 = vmul.f32 %v3287, %v3415
        %v3480 = vmul.f32 %v3288, %v3416
        %v3481 = vmul.f32 %v3289, %v3417
        %v3482 = vmul.f32 %v3290, %v3418
        %v3483 = vmul.f32 %v3291, %v3419
        %v3484 = vmul.f32 %v3292, %v3420
        %v3485 = vmul.f32 %v3293, %v3421
        %v3486 = vmul.f32 %v3294, %v3422
        %v3487 = vmul.f32 %v3295, %v3423
        %v3488 = vmul.f32 %v3296, %v3424
        %v3489 = vmul.f32 %v3297, %v3425
        %v3490 = vmul.f32 %v3298, %v3426
        %v3491 = vmul.f32 %v3299, %v3427
        %v3492 = vmul.f32 %v3300, %v3428
        %v3493 = vmul.f32 %v3301, %v3429
        %v3494 = vmul.f32 %v3302, %v3430
        %v3495 = vmul.f32 %v3303, %v3431
        %v3496 = vmul.f32 %v3304, %v3432
        %v3497 = vmul.f32 %v3305, %v3433
        %v3498 = vmul.f32 %v3306, %v3434
        %v3499 = vmul.f32 %v3307, %v3435
        %v3500 = vmul.f32 %v3308, %v3436
        %v3501 = vmul.f32 %v3309, %v3437
        %v3502 = vmul.f32 %v3310, %v3438
        %v3503 = vmul.f32 %v3311, %v3439
        %v3504 = vmul.f32 %v3312, %v3440
        %v3505 = vmul.f32 %v3313, %v3441
        %v3506 = vmul.f32 %v3314, %v3442
        %v3507 = vmul.f32 %v3315, %v3443
        %v3508 = vmul.f32 %v3316, %v3444
        %v3509 = vmul.f32 %v3317, %v3445
        %v3510 = vmul.f32 %v3318, %v3446
        %v3511 = vmul.f32 %v3319, %v3447
        %v3512 = vmul.f32 %v3320, %v3448
        %v3513 = vmul.f32 %v3321, %v3449
        %v3514 = vmul.f32 %v3322, %v3450
        %v3515 = vmul.f32 %v3323, %v3451
        %v3516 = vmul.f32 %v3324, %v3452
        %v3517 = vmul.f32 %v3325, %v3453
        %v3518 = vmul.f32 %v3326, %v3454
        %v3519 = vmul.f32 %v3327, %v3455
        %v3520 = vmul.f32 %v3328, %v3456
        %v3521 = vmul.f32 %v3329, %v3457
        %vm3522 = vcmp.gt.f32.partialorder %v2756, 20.0
        %vm3523 = vcmp.gt.f32.partialorder %v2759, 20.0
        %vm3524 = vcmp.gt.f32.partialorder %v2764, 20.0
        %vm3525 = vcmp.gt.f32.partialorder %v2767, 20.0
        %vm3526 = vcmp.gt.f32.partialorder %v2772, 20.0
        %vm3527 = vcmp.gt.f32.partialorder %v2775, 20.0
        %vm3528 = vcmp.gt.f32.partialorder %v2780, 20.0
        %vm3529 = vcmp.gt.f32.partialorder %v2783, 20.0
        %vm3530 = vcmp.gt.f32.partialorder %v2788, 20.0
        %vm3531 = vcmp.gt.f32.partialorder %v2791, 20.0
        %vm3532 = vcmp.gt.f32.partialorder %v2796, 20.0
        %vm3533 = vcmp.gt.f32.partialorder %v2799, 20.0
        %vm3534 = vcmp.gt.f32.partialorder %v2804, 20.0
        %vm3535 = vcmp.gt.f32.partialorder %v2807, 20.0
        %vm3536 = vcmp.gt.f32.partialorder %v2812, 20.0
        %vm3537 = vcmp.gt.f32.partialorder %v2815, 20.0
        %vm3538 = vcmp.gt.f32.partialorder %v2820, 20.0
        %vm3539 = vcmp.gt.f32.partialorder %v2823, 20.0
        %vm3540 = vcmp.gt.f32.partialorder %v2828, 20.0
        %vm3541 = vcmp.gt.f32.partialorder %v2831, 20.0
        %vm3542 = vcmp.gt.f32.partialorder %v2836, 20.0
        %vm3543 = vcmp.gt.f32.partialorder %v2839, 20.0
        %vm3544 = vcmp.gt.f32.partialorder %v2844, 20.0
        %vm3545 = vcmp.gt.f32.partialorder %v2847, 20.0
        %vm3546 = vcmp.gt.f32.partialorder %v2852, 20.0
        %vm3547 = vcmp.gt.f32.partialorder %v2855, 20.0
        %vm3548 = vcmp.gt.f32.partialorder %v2860, 20.0
        %vm3549 = vcmp.gt.f32.partialorder %v2863, 20.0
        %vm3550 = vcmp.gt.f32.partialorder %v2868, 20.0
        %vm3551 = vcmp.gt.f32.partialorder %v2871, 20.0
        %vm3552 = vcmp.gt.f32.partialorder %v2876, 20.0
        %vm3553 = vcmp.gt.f32.partialorder %v2879, 20.0
        %vm3554 = vcmp.gt.f32.partialorder %v2884, 20.0
        %vm3555 = vcmp.gt.f32.partialorder %v2887, 20.0
        %vm3556 = vcmp.gt.f32.partialorder %v2892, 20.0
        %vm3557 = vcmp.gt.f32.partialorder %v2895, 20.0
        %vm3558 = vcmp.gt.f32.partialorder %v2900, 20.0
        %vm3559 = vcmp.gt.f32.partialorder %v2903, 20.0
        %vm3560 = vcmp.gt.f32.partialorder %v2908, 20.0
        %vm3561 = vcmp.gt.f32.partialorder %v2911, 20.0
        %vm3562 = vcmp.gt.f32.partialorder %v2916, 20.0
        %vm3563 = vcmp.gt.f32.partialorder %v2919, 20.0
        %vm3564 = vcmp.gt.f32.partialorder %v2924, 20.0
        %vm3565 = vcmp.gt.f32.partialorder %v2927, 20.0
        %vm3566 = vcmp.gt.f32.partialorder %v2932, 20.0
        %vm3567 = vcmp.gt.f32.partialorder %v2935, 20.0
        %vm3568 = vcmp.gt.f32.partialorder %v2940, 20.0
        %vm3569 = vcmp.gt.f32.partialorder %v2943, 20.0
        %vm3570 = vcmp.gt.f32.partialorder %v2948, 20.0
        %vm3571 = vcmp.gt.f32.partialorder %v2951, 20.0
        %vm3572 = vcmp.gt.f32.partialorder %v2956, 20.0
        %vm3573 = vcmp.gt.f32.partialorder %v2959, 20.0
        %vm3574 = vcmp.gt.f32.partialorder %v2964, 20.0
        %vm3575 = vcmp.gt.f32.partialorder %v2967, 20.0
        %vm3576 = vcmp.gt.f32.partialorder %v2972, 20.0
        %vm3577 = vcmp.gt.f32.partialorder %v2975, 20.0
        %vm3578 = vcmp.gt.f32.partialorder %v2980, 20.0
        %vm3579 = vcmp.gt.f32.partialorder %v2983, 20.0
        %vm3580 = vcmp.gt.f32.partialorder %v2988, 20.0
        %vm3581 = vcmp.gt.f32.partialorder %v2991, 20.0
        %vm3582 = vcmp.gt.f32.partialorder %v2996, 20.0
        %vm3583 = vcmp.gt.f32.partialorder %v2999, 20.0
        %vm3584 = vcmp.gt.f32.partialorder %v3004, 20.0
        %vm3585 = vcmp.gt.f32.partialorder %v3007, 20.0
        %v3586 = vsel %vm3522, %v2756, %v3458
        %v3587 = vsel %vm3523, %v2759, %v3459
        %v3588 = vsel %vm3524, %v2764, %v3460
        %v3589 = vsel %vm3525, %v2767, %v3461
        %v3590 = vsel %vm3526, %v2772, %v3462
        %v3591 = vsel %vm3527, %v2775, %v3463
        %v3592 = vsel %vm3528, %v2780, %v3464
        %v3593 = vsel %vm3529, %v2783, %v3465
        %v3594 = vsel %vm3530, %v2788, %v3466
        %v3595 = vsel %vm3531, %v2791, %v3467
        %v3596 = vsel %vm3532, %v2796, %v3468
        %v3597 = vsel %vm3533, %v2799, %v3469
        %v3598 = vsel %vm3534, %v2804, %v3470
        %v3599 = vsel %vm3535, %v2807, %v3471
        %v3600 = vsel %vm3536, %v2812, %v3472
        %v3601 = vsel %vm3537, %v2815, %v3473
        %v3602 = vsel %vm3538, %v2820, %v3474
        %v3603 = vsel %vm3539, %v2823, %v3475
        %v3604 = vsel %vm3540, %v2828, %v3476
        %v3605 = vsel %vm3541, %v2831, %v3477
        %v3606 = vsel %vm3542, %v2836, %v3478
        %v3607 = vsel %vm3543, %v2839, %v3479
        %v3608 = vsel %vm3544, %v2844, %v3480
        %v3609 = vsel %vm3545, %v2847, %v3481
        %v3610 = vsel %vm3546, %v2852, %v3482
        %v3611 = vsel %vm3547, %v2855, %v3483
        %v3612 = vsel %vm3548, %v2860, %v3484
        %v3613 = vsel %vm3549, %v2863, %v3485
        %v3614 = vsel %vm3550, %v2868, %v3486
        %v3615 = vsel %vm3551, %v2871, %v3487
        %v3616 = vsel %vm3552, %v2876, %v3488
        %v3617 = vsel %vm3553, %v2879, %v3489
        %v3618 = vsel %vm3554, %v2884, %v3490
        %v3619 = vsel %vm3555, %v2887, %v3491
        %v3620 = vsel %vm3556, %v2892, %v3492
        %v3621 = vsel %vm3557, %v2895, %v3493
        %v3622 = vsel %vm3558, %v2900, %v3494
        %v3623 = vsel %vm3559, %v2903, %v3495
        %v3624 = vsel %vm3560, %v2908, %v3496
        %v3625 = vsel %vm3561, %v2911, %v3497
        %v3626 = vsel %vm3562, %v2916, %v3498
        %v3627 = vsel %vm3563, %v2919, %v3499
        %v3628 = vsel %vm3564, %v2924, %v3500
        %v3629 = vsel %vm3565, %v2927, %v3501
        %v3630 = vsel %vm3566, %v2932, %v3502
        %v3631 = vsel %vm3567, %v2935, %v3503
        %v3632 = vsel %vm3568, %v2940, %v3504
        %v3633 = vsel %vm3569, %v2943, %v3505
        %v3634 = vsel %vm3570, %v2948, %v3506
        %v3635 = vsel %vm3571, %v2951, %v3507
        %v3636 = vsel %vm3572, %v2956, %v3508
        %v3637 = vsel %vm3573, %v2959, %v3509
        %v3638 = vsel %vm3574, %v2964, %v3510
        %v3639 = vsel %vm3575, %v2967, %v3511
        %v3640 = vsel %vm3576, %v2972, %v3512
        %v3641 = vsel %vm3577, %v2975, %v3513
        %v3642 = vsel %vm3578, %v2980, %v3514
        %v3643 = vsel %vm3579, %v2983, %v3515
        %v3644 = vsel %vm3580, %v2988, %v3516
        %v3645 = vsel %vm3581, %v2991, %v3517
        %v3646 = vsel %vm3582, %v2996, %v3518
        %v3647 = vsel %vm3583, %v2999, %v3519
        %v3648 = vsel %vm3584, %v3004, %v3520
        %v3649 = vsel %vm3585, %v3007, %v3521
        %v3650 = vpack.c.bf16 %v3587, %v3586
        %v3651 = vpack.c.bf16 %v3589, %v3588
        %v3652 = vpack.c.bf16 %v3591, %v3590
        %v3653 = vpack.c.bf16 %v3593, %v3592
        %v3654 = vpack.c.bf16 %v3595, %v3594
        %v3655 = vpack.c.bf16 %v3597, %v3596
        %v3656 = vpack.c.bf16 %v3599, %v3598
        %v3657 = vpack.c.bf16 %v3601, %v3600
        %v3658 = vpack.c.bf16 %v3603, %v3602
        %v3659 = vpack.c.bf16 %v3605, %v3604
        %v3660 = vpack.c.bf16 %v3607, %v3606
        %v3661 = vpack.c.bf16 %v3609, %v3608
        %v3662 = vpack.c.bf16 %v3611, %v3610
        %v3663 = vpack.c.bf16 %v3613, %v3612
        %v3664 = vpack.c.bf16 %v3615, %v3614
        %v3665 = vpack.c.bf16 %v3617, %v3616
        %v3666 = vpack.c.bf16 %v3619, %v3618
        %v3667 = vpack.c.bf16 %v3621, %v3620
        %v3668 = vpack.c.bf16 %v3623, %v3622
        %v3669 = vpack.c.bf16 %v3625, %v3624
        %v3670 = vpack.c.bf16 %v3627, %v3626
        %v3671 = vpack.c.bf16 %v3629, %v3628
        %v3672 = vpack.c.bf16 %v3631, %v3630
        %v3673 = vpack.c.bf16 %v3633, %v3632
        %v3674 = vpack.c.bf16 %v3635, %v3634
        %v3675 = vpack.c.bf16 %v3637, %v3636
        %v3676 = vpack.c.bf16 %v3639, %v3638
        %v3677 = vpack.c.bf16 %v3641, %v3640
        %v3678 = vpack.c.bf16 %v3643, %v3642
        %v3679 = vpack.c.bf16 %v3645, %v3644
        %v3680 = vpack.c.bf16 %v3647, %v3646
        %v3681 = vpack.c.bf16 %v3649, %v3648
        %v3682 = vld [vmem:[%s9] sm:$0xf]
        %v3683 = vld [vmem:[%s9 + $0x4] sm:$0xf]
        %v3684 = vld [vmem:[%s9 + $0x8] sm:$0xf]
        %v3685 = vld [vmem:[%s9 + $0xc] sm:$0x1]
        %v3686 = vld [vmem:[%s10] sm:$0x1]
        %v3688 = vlaneseq
        %v3689 = vshrl.u32 %v3688, 7
        %v3690 = vsub.s32 0, %v3689
        %v3691 = vrot.slane %v3686, %v3690
        %v3697 = vunpack.c.l.b16 %v3682
        %v3698 = vunpack.c.l.b16 %v3683
        %v3699 = vunpack.c.l.b16 %v3684
        %v3700 = vunpack.c.l.b16 %v3685
        %v3701 = vpack.c.b16 %v3698, %v3697
        %v3702 = vpack.c.b16 %v3700, %v3699
        %v3705 = vsel %vm562, %v3650, 0
        %v3708 = vsel %vm562, %v3651, 0
        %v3711 = vsel %vm562, %v3652, 0
        %v3714 = vsel %vm562, %v3653, 0
        %v3717 = vsel %vm562, %v3654, 0
        %v3720 = vsel %vm562, %v3655, 0
        %v3723 = vsel %vm562, %v3656, 0
        %v3726 = vsel %vm562, %v3657, 0
        %v3729 = vsel %vm562, %v3658, 0
        %v3732 = vsel %vm562, %v3659, 0
        %v3735 = vsel %vm562, %v3660, 0
        %v3738 = vsel %vm562, %v3661, 0
        %v3741 = vsel %vm562, %v3662, 0
        %v3744 = vsel %vm562, %v3663, 0
        %v3747 = vsel %vm562, %v3664, 0
        %v3750 = vsel %vm562, %v3665, 0
        %v3753 = vsel %vm562, %v3666, 0
        %v3756 = vsel %vm562, %v3667, 0
        %v3759 = vsel %vm562, %v3668, 0
        %v3762 = vsel %vm562, %v3669, 0
        %v3765 = vsel %vm562, %v3670, 0
        %v3768 = vsel %vm562, %v3671, 0
        %v3771 = vsel %vm562, %v3672, 0
        %v3774 = vsel %vm562, %v3673, 0
        %v3777 = vsel %vm562, %v3674, 0
        %v3780 = vsel %vm562, %v3675, 0
        %v3783 = vsel %vm562, %v3676, 0
        %v3786 = vsel %vm562, %v3677, 0
        %v3789 = vsel %vm562, %v3678, 0
        %v3792 = vsel %vm562, %v3679, 0
        %v3795 = vsel %vm562, %v3680, 0
        %v3798 = vsel %vm562, %v3681, 0
        %v3801 = vsel %vm659, %v3702, 0
        %3803 = vmatprep.subr.bf16.mxu0 0
        %3804 = vmatpush1.bf16.msra.mxu0 0
        %3805 = vmatprep.subr.bf16.mxu0 0
        %3806 = vmatpush1.bf16.msra.mxu0 0
        %3807 = vmatprep.subr.bf16.mxu0 0
        %3808 = vmatpush1.bf16.msra.mxu0 0
        %3809 = vmatprep.subr.bf16.mxu0 0
        %3810 = vmatpush1.bf16.msra.mxu0 0
        %3811 = vmatprep.subr.bf16.mxu0 0
        %3812 = vmatpush1.bf16.msra.mxu0 0
        %3813 = vmatprep.subr.bf16.mxu0 0
        %3814 = vmatpush1.bf16.msra.mxu0 0
        %3815 = vmatprep.subr.bf16.mxu0 0
        %3816 = vmatpush1.bf16.msra.mxu0 %v3801
        %3817 = vmatprep.subr.bf16.mxu0 0
        %3818 = vmatpush1.bf16.msra.mxu0 %v3701
        %3819 = vmatprep.subr.bf16.mxu0 0
        %3820 = vmatpush2.bf16.msra.mxu0 0
        %3821 = vmatprep.subr.bf16.mxu0 0
        %3822 = vmatpush2.bf16.msra.mxu0 0
        %3823 = vmatprep.subr.bf16.mxu0 0
        %3824 = vmatpush2.bf16.msra.mxu0 0
        %3825 = vmatprep.subr.bf16.mxu0 0
        %3826 = vmatpush2.bf16.msra.mxu0 0
        %3827 = vmatprep.subr.bf16.mxu0 0
        %3828 = vmatpush2.bf16.msra.mxu0 0
        %3829 = vmatprep.subr.bf16.mxu0 0
        %3830 = vmatpush2.bf16.msra.mxu0 0
        %3831 = vmatprep.subr.bf16.mxu0 0
        %3832 = vmatpush2.bf16.msra.mxu0 0
        %3833 = vmatprep.subr.bf16.mxu0 0
        %3834 = vmatpush2.bf16.msra.mxu0 0
        %3835 = vmatprep.mubr.bf16.mxu0 0
        %3836 = vmatmul.mubr.bf16.gmra.mxu0 %v3705
        %v3837 = vpop.f32.mrf.mxu0
        %v3838 = vadd.f32 %v3691, %v3837
        %v3839 = vpop.f32.mrf.mxu0
        %v3840 = vpop.f32.mrf.mxu0
        %v3841 = vadd.f32 %v3691, %v3840
        %v3842 = vpop.f32.mrf.mxu0
        %3843 = vmatprep.mubr.bf16.mxu0 0
        %3844 = vmatmul.mubr.bf16.gmra.mxu0 %v3708
        %v3845 = vpop.f32.mrf.mxu0
        %v3846 = vadd.f32 %v3691, %v3845
        %v3847 = vpop.f32.mrf.mxu0
        %v3848 = vpop.f32.mrf.mxu0
        %v3849 = vadd.f32 %v3691, %v3848
        %v3850 = vpop.f32.mrf.mxu0
        %3851 = vmatprep.mubr.bf16.mxu0 0
        %3852 = vmatmul.mubr.bf16.gmra.mxu0 %v3711
        %v3853 = vpop.f32.mrf.mxu0
        %v3854 = vadd.f32 %v3691, %v3853
        %v3855 = vpop.f32.mrf.mxu0
        %v3856 = vpop.f32.mrf.mxu0
        %v3857 = vadd.f32 %v3691, %v3856
        %v3858 = vpop.f32.mrf.mxu0
        %3859 = vmatprep.mubr.bf16.mxu0 0
        %3860 = vmatmul.mubr.bf16.gmra.mxu0 %v3714
        %v3861 = vpop.f32.mrf.mxu0
        %v3862 = vadd.f32 %v3691, %v3861
        %v3863 = vpop.f32.mrf.mxu0
        %v3864 = vpop.f32.mrf.mxu0
        %v3865 = vadd.f32 %v3691, %v3864
        %v3866 = vpop.f32.mrf.mxu0
        %3867 = vmatprep.mubr.bf16.mxu0 0
        %3868 = vmatmul.mubr.bf16.gmra.mxu0 %v3717
        %v3869 = vpop.f32.mrf.mxu0
        %v3870 = vadd.f32 %v3691, %v3869
        %v3871 = vpop.f32.mrf.mxu0
        %v3872 = vpop.f32.mrf.mxu0
        %v3873 = vadd.f32 %v3691, %v3872
        %v3874 = vpop.f32.mrf.mxu0
        %3875 = vmatprep.mubr.bf16.mxu0 0
        %3876 = vmatmul.mubr.bf16.gmra.mxu0 %v3720
        %v3877 = vpop.f32.mrf.mxu0
        %v3878 = vadd.f32 %v3691, %v3877
        %v3879 = vpop.f32.mrf.mxu0
        %v3880 = vpop.f32.mrf.mxu0
        %v3881 = vadd.f32 %v3691, %v3880
        %v3882 = vpop.f32.mrf.mxu0
        %3883 = vmatprep.mubr.bf16.mxu0 0
        %3884 = vmatmul.mubr.bf16.gmra.mxu0 %v3723
        %v3885 = vpop.f32.mrf.mxu0
        %v3886 = vadd.f32 %v3691, %v3885
        %v3887 = vpop.f32.mrf.mxu0
        %v3888 = vpop.f32.mrf.mxu0
        %v3889 = vadd.f32 %v3691, %v3888
        %v3890 = vpop.f32.mrf.mxu0
        %3891 = vmatprep.mubr.bf16.mxu0 0
        %3892 = vmatmul.mubr.bf16.gmra.mxu0 %v3726
        %v3893 = vpop.f32.mrf.mxu0
        %v3894 = vadd.f32 %v3691, %v3893
        %v3895 = vpop.f32.mrf.mxu0
        %v3896 = vpop.f32.mrf.mxu0
        %v3897 = vadd.f32 %v3691, %v3896
        %v3898 = vpop.f32.mrf.mxu0
        %3899 = vmatprep.mubr.bf16.mxu0 0
        %3900 = vmatmul.mubr.bf16.gmra.mxu0 %v3729
        %v3901 = vpop.f32.mrf.mxu0
        %v3902 = vadd.f32 %v3691, %v3901
        %v3903 = vpop.f32.mrf.mxu0
        %v3904 = vpop.f32.mrf.mxu0
        %v3905 = vadd.f32 %v3691, %v3904
        %v3906 = vpop.f32.mrf.mxu0
        %3907 = vmatprep.mubr.bf16.mxu0 0
        %3908 = vmatmul.mubr.bf16.gmra.mxu0 %v3732
        %v3909 = vpop.f32.mrf.mxu0
        %v3910 = vadd.f32 %v3691, %v3909
        %v3911 = vpop.f32.mrf.mxu0
        %v3912 = vpop.f32.mrf.mxu0
        %v3913 = vadd.f32 %v3691, %v3912
        %v3914 = vpop.f32.mrf.mxu0
        %3915 = vmatprep.mubr.bf16.mxu0 0
        %3916 = vmatmul.mubr.bf16.gmra.mxu0 %v3735
        %v3917 = vpop.f32.mrf.mxu0
        %v3918 = vadd.f32 %v3691, %v3917
        %v3919 = vpop.f32.mrf.mxu0
        %v3920 = vpop.f32.mrf.mxu0
        %v3921 = vadd.f32 %v3691, %v3920
        %v3922 = vpop.f32.mrf.mxu0
        %3923 = vmatprep.mubr.bf16.mxu0 0
        %3924 = vmatmul.mubr.bf16.gmra.mxu0 %v3738
        %v3925 = vpop.f32.mrf.mxu0
        %v3926 = vadd.f32 %v3691, %v3925
        %v3927 = vpop.f32.mrf.mxu0
        %v3928 = vpop.f32.mrf.mxu0
        %v3929 = vadd.f32 %v3691, %v3928
        %v3930 = vpop.f32.mrf.mxu0
        %3931 = vmatprep.mubr.bf16.mxu0 0
        %3932 = vmatmul.mubr.bf16.gmra.mxu0 %v3741
        %v3933 = vpop.f32.mrf.mxu0
        %v3934 = vadd.f32 %v3691, %v3933
        %v3935 = vpop.f32.mrf.mxu0
        %v3936 = vpop.f32.mrf.mxu0
        %v3937 = vadd.f32 %v3691, %v3936
        %v3938 = vpop.f32.mrf.mxu0
        %3939 = vmatprep.mubr.bf16.mxu0 0
        %3940 = vmatmul.mubr.bf16.gmra.mxu0 %v3744
        %v3941 = vpop.f32.mrf.mxu0
        %v3942 = vadd.f32 %v3691, %v3941
        %v3943 = vpop.f32.mrf.mxu0
        %v3944 = vpop.f32.mrf.mxu0
        %v3945 = vadd.f32 %v3691, %v3944
        %v3946 = vpop.f32.mrf.mxu0
        %3947 = vmatprep.mubr.bf16.mxu0 0
        %3948 = vmatmul.mubr.bf16.gmra.mxu0 %v3747
        %v3949 = vpop.f32.mrf.mxu0
        %v3950 = vadd.f32 %v3691, %v3949
        %v3951 = vpop.f32.mrf.mxu0
        %v3952 = vpop.f32.mrf.mxu0
        %v3953 = vadd.f32 %v3691, %v3952
        %v3954 = vpop.f32.mrf.mxu0
        %3955 = vmatprep.mubr.bf16.mxu0 0
        %3956 = vmatmul.mubr.bf16.gmra.mxu0 %v3750
        %v3957 = vpop.f32.mrf.mxu0
        %v3958 = vadd.f32 %v3691, %v3957
        %v3959 = vpop.f32.mrf.mxu0
        %v3960 = vpop.f32.mrf.mxu0
        %v3961 = vadd.f32 %v3691, %v3960
        %v3962 = vpop.f32.mrf.mxu0
        %3963 = vmatprep.mubr.bf16.mxu0 0
        %3964 = vmatmul.mubr.bf16.gmra.mxu0 %v3753
        %v3965 = vpop.f32.mrf.mxu0
        %v3966 = vadd.f32 %v3691, %v3965
        %v3967 = vpop.f32.mrf.mxu0
        %v3968 = vpop.f32.mrf.mxu0
        %v3969 = vadd.f32 %v3691, %v3968
        %v3970 = vpop.f32.mrf.mxu0
        %3971 = vmatprep.mubr.bf16.mxu0 0
        %3972 = vmatmul.mubr.bf16.gmra.mxu0 %v3756
        %v3973 = vpop.f32.mrf.mxu0
        %v3974 = vadd.f32 %v3691, %v3973
        %v3975 = vpop.f32.mrf.mxu0
        %v3976 = vpop.f32.mrf.mxu0
        %v3977 = vadd.f32 %v3691, %v3976
        %v3978 = vpop.f32.mrf.mxu0
        %3979 = vmatprep.mubr.bf16.mxu0 0
        %3980 = vmatmul.mubr.bf16.gmra.mxu0 %v3759
        %v3981 = vpop.f32.mrf.mxu0
        %v3982 = vadd.f32 %v3691, %v3981
        %v3983 = vpop.f32.mrf.mxu0
        %v3984 = vpop.f32.mrf.mxu0
        %v3985 = vadd.f32 %v3691, %v3984
        %v3986 = vpop.f32.mrf.mxu0
        %3987 = vmatprep.mubr.bf16.mxu0 0
        %3988 = vmatmul.mubr.bf16.gmra.mxu0 %v3762
        %v3989 = vpop.f32.mrf.mxu0
        %v3990 = vadd.f32 %v3691, %v3989
        %v3991 = vpop.f32.mrf.mxu0
        %v3992 = vpop.f32.mrf.mxu0
        %v3993 = vadd.f32 %v3691, %v3992
        %v3994 = vpop.f32.mrf.mxu0
        %3995 = vmatprep.mubr.bf16.mxu0 0
        %3996 = vmatmul.mubr.bf16.gmra.mxu0 %v3765
        %v3997 = vpop.f32.mrf.mxu0
        %v3998 = vadd.f32 %v3691, %v3997
        %v3999 = vpop.f32.mrf.mxu0
        %v4000 = vpop.f32.mrf.mxu0
        %v4001 = vadd.f32 %v3691, %v4000
        %v4002 = vpop.f32.mrf.mxu0
        %4003 = vmatprep.mubr.bf16.mxu0 0
        %4004 = vmatmul.mubr.bf16.gmra.mxu0 %v3768
        %v4005 = vpop.f32.mrf.mxu0
        %v4006 = vadd.f32 %v3691, %v4005
        %v4007 = vpop.f32.mrf.mxu0
        %v4008 = vpop.f32.mrf.mxu0
        %v4009 = vadd.f32 %v3691, %v4008
        %v4010 = vpop.f32.mrf.mxu0
        %4011 = vmatprep.mubr.bf16.mxu0 0
        %4012 = vmatmul.mubr.bf16.gmra.mxu0 %v3771
        %v4013 = vpop.f32.mrf.mxu0
        %v4014 = vadd.f32 %v3691, %v4013
        %v4015 = vpop.f32.mrf.mxu0
        %v4016 = vpop.f32.mrf.mxu0
        %v4017 = vadd.f32 %v3691, %v4016
        %v4018 = vpop.f32.mrf.mxu0
        %4019 = vmatprep.mubr.bf16.mxu0 0
        %4020 = vmatmul.mubr.bf16.gmra.mxu0 %v3774
        %v4021 = vpop.f32.mrf.mxu0
        %v4022 = vadd.f32 %v3691, %v4021
        %v4023 = vpop.f32.mrf.mxu0
        %v4024 = vpop.f32.mrf.mxu0
        %v4025 = vadd.f32 %v3691, %v4024
        %v4026 = vpop.f32.mrf.mxu0
        %4027 = vmatprep.mubr.bf16.mxu0 0
        %4028 = vmatmul.mubr.bf16.gmra.mxu0 %v3777
        %v4029 = vpop.f32.mrf.mxu0
        %v4030 = vadd.f32 %v3691, %v4029
        %v4031 = vpop.f32.mrf.mxu0
        %v4032 = vpop.f32.mrf.mxu0
        %v4033 = vadd.f32 %v3691, %v4032
        %v4034 = vpop.f32.mrf.mxu0
        %4035 = vmatprep.mubr.bf16.mxu0 0
        %4036 = vmatmul.mubr.bf16.gmra.mxu0 %v3780
        %v4037 = vpop.f32.mrf.mxu0
        %v4038 = vadd.f32 %v3691, %v4037
        %v4039 = vpop.f32.mrf.mxu0
        %v4040 = vpop.f32.mrf.mxu0
        %v4041 = vadd.f32 %v3691, %v4040
        %v4042 = vpop.f32.mrf.mxu0
        %4043 = vmatprep.mubr.bf16.mxu0 0
        %4044 = vmatmul.mubr.bf16.gmra.mxu0 %v3783
        %v4045 = vpop.f32.mrf.mxu0
        %v4046 = vadd.f32 %v3691, %v4045
        %v4047 = vpop.f32.mrf.mxu0
        %v4048 = vpop.f32.mrf.mxu0
        %v4049 = vadd.f32 %v3691, %v4048
        %v4050 = vpop.f32.mrf.mxu0
        %4051 = vmatprep.mubr.bf16.mxu0 0
        %4052 = vmatmul.mubr.bf16.gmra.mxu0 %v3786
        %v4053 = vpop.f32.mrf.mxu0
        %v4054 = vadd.f32 %v3691, %v4053
        %v4055 = vpop.f32.mrf.mxu0
        %v4056 = vpop.f32.mrf.mxu0
        %v4057 = vadd.f32 %v3691, %v4056
        %v4058 = vpop.f32.mrf.mxu0
        %4059 = vmatprep.mubr.bf16.mxu0 0
        %4060 = vmatmul.mubr.bf16.gmra.mxu0 %v3789
        %v4061 = vpop.f32.mrf.mxu0
        %v4062 = vadd.f32 %v3691, %v4061
        %v4063 = vpop.f32.mrf.mxu0
        %v4064 = vpop.f32.mrf.mxu0
        %v4065 = vadd.f32 %v3691, %v4064
        %v4066 = vpop.f32.mrf.mxu0
        %4067 = vmatprep.mubr.bf16.mxu0 0
        %4068 = vmatmul.mubr.bf16.gmra.mxu0 %v3792
        %v4069 = vpop.f32.mrf.mxu0
        %v4070 = vadd.f32 %v3691, %v4069
        %v4071 = vpop.f32.mrf.mxu0
        %v4072 = vpop.f32.mrf.mxu0
        %v4073 = vadd.f32 %v3691, %v4072
        %v4074 = vpop.f32.mrf.mxu0
        %4075 = vmatprep.mubr.bf16.mxu0 0
        %4076 = vmatmul.mubr.bf16.gmra.mxu0 %v3795
        %v4077 = vpop.f32.mrf.mxu0
        %v4078 = vadd.f32 %v3691, %v4077
        %v4079 = vpop.f32.mrf.mxu0
        %v4080 = vpop.f32.mrf.mxu0
        %v4081 = vadd.f32 %v3691, %v4080
        %v4082 = vpop.f32.mrf.mxu0
        %4083 = vmatprep.mubr.bf16.mxu0 0
        %4084 = vmatmul.mubr.bf16.gmra.mxu0 %v3798
        %v4085 = vpop.f32.mrf.mxu0
        %v4086 = vadd.f32 %v3691, %v4085
        %v4087 = vpop.f32.mrf.mxu0
        %v4088 = vpop.f32.mrf.mxu0
        %v4089 = vadd.f32 %v3691, %v4088
        %v4090 = vpop.f32.mrf.mxu0
        %4091 = vdwg.mxu0
        %v4092 = vmul.f32 %v3838, 1.442695
        %v4093 = vpow.pop %v4092
        %v4094 = vmul.f32 %v3841, 1.442695
        %v4095 = vpow.pop %v4094
        %v4096 = vmul.f32 %v3846, 1.442695
        %v4097 = vpow.pop %v4096
        %v4098 = vmul.f32 %v3849, 1.442695
        %v4099 = vpow.pop %v4098
        %v4100 = vmul.f32 %v3854, 1.442695
        %v4101 = vpow.pop %v4100
        %v4102 = vmul.f32 %v3857, 1.442695
        %v4103 = vpow.pop %v4102
        %v4104 = vmul.f32 %v3862, 1.442695
        %v4105 = vpow.pop %v4104
        %v4106 = vmul.f32 %v3865, 1.442695
        %v4107 = vpow.pop %v4106
        %v4108 = vmul.f32 %v3870, 1.442695
        %v4109 = vpow.pop %v4108
        %v4110 = vmul.f32 %v3873, 1.442695
        %v4111 = vpow.pop %v4110
        %v4112 = vmul.f32 %v3878, 1.442695
        %v4113 = vpow.pop %v4112
        %v4114 = vmul.f32 %v3881, 1.442695
        %v4115 = vpow.pop %v4114
        %v4116 = vmul.f32 %v3886, 1.442695
        %v4117 = vpow.pop %v4116
        %v4118 = vmul.f32 %v3889, 1.442695
        %v4119 = vpow.pop %v4118
        %v4120 = vmul.f32 %v3894, 1.442695
        %v4121 = vpow.pop %v4120
        %v4122 = vmul.f32 %v3897, 1.442695
        %v4123 = vpow.pop %v4122
        %v4124 = vmul.f32 %v3902, 1.442695
        %v4125 = vpow.pop %v4124
        %v4126 = vmul.f32 %v3905, 1.442695
        %v4127 = vpow.pop %v4126
        %v4128 = vmul.f32 %v3910, 1.442695
        %v4129 = vpow.pop %v4128
        %v4130 = vmul.f32 %v3913, 1.442695
        %v4131 = vpow.pop %v4130
        %v4132 = vmul.f32 %v3918, 1.442695
        %v4133 = vpow.pop %v4132
        %v4134 = vmul.f32 %v3921, 1.442695
        %v4135 = vpow.pop %v4134
        %v4136 = vmul.f32 %v3926, 1.442695
        %v4137 = vpow.pop %v4136
        %v4138 = vmul.f32 %v3929, 1.442695
        %v4139 = vpow.pop %v4138
        %v4140 = vmul.f32 %v3934, 1.442695
        %v4141 = vpow.pop %v4140
        %v4142 = vmul.f32 %v3937, 1.442695
        %v4143 = vpow.pop %v4142
        %v4144 = vmul.f32 %v3942, 1.442695
        %v4145 = vpow.pop %v4144
        %v4146 = vmul.f32 %v3945, 1.442695
        %v4147 = vpow.pop %v4146
        %v4148 = vmul.f32 %v3950, 1.442695
        %v4149 = vpow.pop %v4148
        %v4150 = vmul.f32 %v3953, 1.442695
        %v4151 = vpow.pop %v4150
        %v4152 = vmul.f32 %v3958, 1.442695
        %v4153 = vpow.pop %v4152
        %v4154 = vmul.f32 %v3961, 1.442695
        %v4155 = vpow.pop %v4154
        %v4156 = vmul.f32 %v3966, 1.442695
        %v4157 = vpow.pop %v4156
        %v4158 = vmul.f32 %v3969, 1.442695
        %v4159 = vpow.pop %v4158
        %v4160 = vmul.f32 %v3974, 1.442695
        %v4161 = vpow.pop %v4160
        %v4162 = vmul.f32 %v3977, 1.442695
        %v4163 = vpow.pop %v4162
        %v4164 = vmul.f32 %v3982, 1.442695
        %v4165 = vpow.pop %v4164
        %v4166 = vmul.f32 %v3985, 1.442695
        %v4167 = vpow.pop %v4166
        %v4168 = vmul.f32 %v3990, 1.442695
        %v4169 = vpow.pop %v4168
        %v4170 = vmul.f32 %v3993, 1.442695
        %v4171 = vpow.pop %v4170
        %v4172 = vmul.f32 %v3998, 1.442695
        %v4173 = vpow.pop %v4172
        %v4174 = vmul.f32 %v4001, 1.442695
        %v4175 = vpow.pop %v4174
        %v4176 = vmul.f32 %v4006, 1.442695
        %v4177 = vpow.pop %v4176
        %v4178 = vmul.f32 %v4009, 1.442695
        %v4179 = vpow.pop %v4178
        %v4180 = vmul.f32 %v4014, 1.442695
        %v4181 = vpow.pop %v4180
        %v4182 = vmul.f32 %v4017, 1.442695
        %v4183 = vpow.pop %v4182
        %v4184 = vmul.f32 %v4022, 1.442695
        %v4185 = vpow.pop %v4184
        %v4186 = vmul.f32 %v4025, 1.442695
        %v4187 = vpow.pop %v4186
        %v4188 = vmul.f32 %v4030, 1.442695
        %v4189 = vpow.pop %v4188
        %v4190 = vmul.f32 %v4033, 1.442695
        %v4191 = vpow.pop %v4190
        %v4192 = vmul.f32 %v4038, 1.442695
        %v4193 = vpow.pop %v4192
        %v4194 = vmul.f32 %v4041, 1.442695
        %v4195 = vpow.pop %v4194
        %v4196 = vmul.f32 %v4046, 1.442695
        %v4197 = vpow.pop %v4196
        %v4198 = vmul.f32 %v4049, 1.442695
        %v4199 = vpow.pop %v4198
        %v4200 = vmul.f32 %v4054, 1.442695
        %v4201 = vpow.pop %v4200
        %v4202 = vmul.f32 %v4057, 1.442695
        %v4203 = vpow.pop %v4202
        %v4204 = vmul.f32 %v4062, 1.442695
        %v4205 = vpow.pop %v4204
        %v4206 = vmul.f32 %v4065, 1.442695
        %v4207 = vpow.pop %v4206
        %v4208 = vmul.f32 %v4070, 1.442695
        %v4209 = vpow.pop %v4208
        %v4210 = vmul.f32 %v4073, 1.442695
        %v4211 = vpow.pop %v4210
        %v4212 = vmul.f32 %v4078, 1.442695
        %v4213 = vpow.pop %v4212
        %v4214 = vmul.f32 %v4081, 1.442695
        %v4215 = vpow.pop %v4214
        %v4216 = vmul.f32 %v4086, 1.442695
        %v4217 = vpow.pop %v4216
        %v4218 = vmul.f32 %v4089, 1.442695
        %v4219 = vpow.pop %v4218
        %v4220 = vadd.f32 %v4093, 2.0
        %v4221 = vadd.f32 %v4095, 2.0
        %v4222 = vadd.f32 %v4097, 2.0
        %v4223 = vadd.f32 %v4099, 2.0
        %v4224 = vadd.f32 %v4101, 2.0
        %v4225 = vadd.f32 %v4103, 2.0
        %v4226 = vadd.f32 %v4105, 2.0
        %v4227 = vadd.f32 %v4107, 2.0
        %v4228 = vadd.f32 %v4109, 2.0
        %v4229 = vadd.f32 %v4111, 2.0
        %v4230 = vadd.f32 %v4113, 2.0
        %v4231 = vadd.f32 %v4115, 2.0
        %v4232 = vadd.f32 %v4117, 2.0
        %v4233 = vadd.f32 %v4119, 2.0
        %v4234 = vadd.f32 %v4121, 2.0
        %v4235 = vadd.f32 %v4123, 2.0
        %v4236 = vadd.f32 %v4125, 2.0
        %v4237 = vadd.f32 %v4127, 2.0
        %v4238 = vadd.f32 %v4129, 2.0
        %v4239 = vadd.f32 %v4131, 2.0
        %v4240 = vadd.f32 %v4133, 2.0
        %v4241 = vadd.f32 %v4135, 2.0
        %v4242 = vadd.f32 %v4137, 2.0
        %v4243 = vadd.f32 %v4139, 2.0
        %v4244 = vadd.f32 %v4141, 2.0
        %v4245 = vadd.f32 %v4143, 2.0
        %v4246 = vadd.f32 %v4145, 2.0
        %v4247 = vadd.f32 %v4147, 2.0
        %v4248 = vadd.f32 %v4149, 2.0
        %v4249 = vadd.f32 %v4151, 2.0
        %v4250 = vadd.f32 %v4153, 2.0
        %v4251 = vadd.f32 %v4155, 2.0
        %v4252 = vadd.f32 %v4157, 2.0
        %v4253 = vadd.f32 %v4159, 2.0
        %v4254 = vadd.f32 %v4161, 2.0
        %v4255 = vadd.f32 %v4163, 2.0
        %v4256 = vadd.f32 %v4165, 2.0
        %v4257 = vadd.f32 %v4167, 2.0
        %v4258 = vadd.f32 %v4169, 2.0
        %v4259 = vadd.f32 %v4171, 2.0
        %v4260 = vadd.f32 %v4173, 2.0
        %v4261 = vadd.f32 %v4175, 2.0
        %v4262 = vadd.f32 %v4177, 2.0
        %v4263 = vadd.f32 %v4179, 2.0
        %v4264 = vadd.f32 %v4181, 2.0
        %v4265 = vadd.f32 %v4183, 2.0
        %v4266 = vadd.f32 %v4185, 2.0
        %v4267 = vadd.f32 %v4187, 2.0
        %v4268 = vadd.f32 %v4189, 2.0
        %v4269 = vadd.f32 %v4191, 2.0
        %v4270 = vadd.f32 %v4193, 2.0
        %v4271 = vadd.f32 %v4195, 2.0
        %v4272 = vadd.f32 %v4197, 2.0
        %v4273 = vadd.f32 %v4199, 2.0
        %v4274 = vadd.f32 %v4201, 2.0
        %v4275 = vadd.f32 %v4203, 2.0
        %v4276 = vadd.f32 %v4205, 2.0
        %v4277 = vadd.f32 %v4207, 2.0
        %v4278 = vadd.f32 %v4209, 2.0
        %v4279 = vadd.f32 %v4211, 2.0
        %v4280 = vadd.f32 %v4213, 2.0
        %v4281 = vadd.f32 %v4215, 2.0
        %v4282 = vadd.f32 %v4217, 2.0
        %v4283 = vadd.f32 %v4219, 2.0
        %v4284 = vmul.f32 %v4093, %v4220
        %v4285 = vmul.f32 %v4095, %v4221
        %v4286 = vmul.f32 %v4097, %v4222
        %v4287 = vmul.f32 %v4099, %v4223
        %v4288 = vmul.f32 %v4101, %v4224
        %v4289 = vmul.f32 %v4103, %v4225
        %v4290 = vmul.f32 %v4105, %v4226
        %v4291 = vmul.f32 %v4107, %v4227
        %v4292 = vmul.f32 %v4109, %v4228
        %v4293 = vmul.f32 %v4111, %v4229
        %v4294 = vmul.f32 %v4113, %v4230
        %v4295 = vmul.f32 %v4115, %v4231
        %v4296 = vmul.f32 %v4117, %v4232
        %v4297 = vmul.f32 %v4119, %v4233
        %v4298 = vmul.f32 %v4121, %v4234
        %v4299 = vmul.f32 %v4123, %v4235
        %v4300 = vmul.f32 %v4125, %v4236
        %v4301 = vmul.f32 %v4127, %v4237
        %v4302 = vmul.f32 %v4129, %v4238
        %v4303 = vmul.f32 %v4131, %v4239
        %v4304 = vmul.f32 %v4133, %v4240
        %v4305 = vmul.f32 %v4135, %v4241
        %v4306 = vmul.f32 %v4137, %v4242
        %v4307 = vmul.f32 %v4139, %v4243
        %v4308 = vmul.f32 %v4141, %v4244
        %v4309 = vmul.f32 %v4143, %v4245
        %v4310 = vmul.f32 %v4145, %v4246
        %v4311 = vmul.f32 %v4147, %v4247
        %v4312 = vmul.f32 %v4149, %v4248
        %v4313 = vmul.f32 %v4151, %v4249
        %v4314 = vmul.f32 %v4153, %v4250
        %v4315 = vmul.f32 %v4155, %v4251
        %v4316 = vmul.f32 %v4157, %v4252
        %v4317 = vmul.f32 %v4159, %v4253
        %v4318 = vmul.f32 %v4161, %v4254
        %v4319 = vmul.f32 %v4163, %v4255
        %v4320 = vmul.f32 %v4165, %v4256
        %v4321 = vmul.f32 %v4167, %v4257
        %v4322 = vmul.f32 %v4169, %v4258
        %v4323 = vmul.f32 %v4171, %v4259
        %v4324 = vmul.f32 %v4173, %v4260
        %v4325 = vmul.f32 %v4175, %v4261
        %v4326 = vmul.f32 %v4177, %v4262
        %v4327 = vmul.f32 %v4179, %v4263
        %v4328 = vmul.f32 %v4181, %v4264
        %v4329 = vmul.f32 %v4183, %v4265
        %v4330 = vmul.f32 %v4185, %v4266
        %v4331 = vmul.f32 %v4187, %v4267
        %v4332 = vmul.f32 %v4189, %v4268
        %v4333 = vmul.f32 %v4191, %v4269
        %v4334 = vmul.f32 %v4193, %v4270
        %v4335 = vmul.f32 %v4195, %v4271
        %v4336 = vmul.f32 %v4197, %v4272
        %v4337 = vmul.f32 %v4199, %v4273
        %v4338 = vmul.f32 %v4201, %v4274
        %v4339 = vmul.f32 %v4203, %v4275
        %v4340 = vmul.f32 %v4205, %v4276
        %v4341 = vmul.f32 %v4207, %v4277
        %v4342 = vmul.f32 %v4209, %v4278
        %v4343 = vmul.f32 %v4211, %v4279
        %v4344 = vmul.f32 %v4213, %v4280
        %v4345 = vmul.f32 %v4215, %v4281
        %v4346 = vmul.f32 %v4217, %v4282
        %v4347 = vmul.f32 %v4219, %v4283
        %v4348 = vmul.f32 %v3838, %v4284
        %v4349 = vmul.f32 %v3841, %v4285
        %v4350 = vmul.f32 %v3846, %v4286
        %v4351 = vmul.f32 %v3849, %v4287
        %v4352 = vmul.f32 %v3854, %v4288
        %v4353 = vmul.f32 %v3857, %v4289
        %v4354 = vmul.f32 %v3862, %v4290
        %v4355 = vmul.f32 %v3865, %v4291
        %v4356 = vmul.f32 %v3870, %v4292
        %v4357 = vmul.f32 %v3873, %v4293
        %v4358 = vmul.f32 %v3878, %v4294
        %v4359 = vmul.f32 %v3881, %v4295
        %v4360 = vmul.f32 %v3886, %v4296
        %v4361 = vmul.f32 %v3889, %v4297
        %v4362 = vmul.f32 %v3894, %v4298
        %v4363 = vmul.f32 %v3897, %v4299
        %v4364 = vmul.f32 %v3902, %v4300
        %v4365 = vmul.f32 %v3905, %v4301
        %v4366 = vmul.f32 %v3910, %v4302
        %v4367 = vmul.f32 %v3913, %v4303
        %v4368 = vmul.f32 %v3918, %v4304
        %v4369 = vmul.f32 %v3921, %v4305
        %v4370 = vmul.f32 %v3926, %v4306
        %v4371 = vmul.f32 %v3929, %v4307
        %v4372 = vmul.f32 %v3934, %v4308
        %v4373 = vmul.f32 %v3937, %v4309
        %v4374 = vmul.f32 %v3942, %v4310
        %v4375 = vmul.f32 %v3945, %v4311
        %v4376 = vmul.f32 %v3950, %v4312
        %v4377 = vmul.f32 %v3953, %v4313
        %v4378 = vmul.f32 %v3958, %v4314
        %v4379 = vmul.f32 %v3961, %v4315
        %v4380 = vmul.f32 %v3966, %v4316
        %v4381 = vmul.f32 %v3969, %v4317
        %v4382 = vmul.f32 %v3974, %v4318
        %v4383 = vmul.f32 %v3977, %v4319
        %v4384 = vmul.f32 %v3982, %v4320
        %v4385 = vmul.f32 %v3985, %v4321
        %v4386 = vmul.f32 %v3990, %v4322
        %v4387 = vmul.f32 %v3993, %v4323
        %v4388 = vmul.f32 %v3998, %v4324
        %v4389 = vmul.f32 %v4001, %v4325
        %v4390 = vmul.f32 %v4006, %v4326
        %v4391 = vmul.f32 %v4009, %v4327
        %v4392 = vmul.f32 %v4014, %v4328
        %v4393 = vmul.f32 %v4017, %v4329
        %v4394 = vmul.f32 %v4022, %v4330
        %v4395 = vmul.f32 %v4025, %v4331
        %v4396 = vmul.f32 %v4030, %v4332
        %v4397 = vmul.f32 %v4033, %v4333
        %v4398 = vmul.f32 %v4038, %v4334
        %v4399 = vmul.f32 %v4041, %v4335
        %v4400 = vmul.f32 %v4046, %v4336
        %v4401 = vmul.f32 %v4049, %v4337
        %v4402 = vmul.f32 %v4054, %v4338
        %v4403 = vmul.f32 %v4057, %v4339
        %v4404 = vmul.f32 %v4062, %v4340
        %v4405 = vmul.f32 %v4065, %v4341
        %v4406 = vmul.f32 %v4070, %v4342
        %v4407 = vmul.f32 %v4073, %v4343
        %v4408 = vmul.f32 %v4078, %v4344
        %v4409 = vmul.f32 %v4081, %v4345
        %v4410 = vmul.f32 %v4086, %v4346
        %v4411 = vmul.f32 %v4089, %v4347
        %v4412 = vadd.f32 %v4284, 2.0
        %v4413 = vadd.f32 %v4285, 2.0
        %v4414 = vadd.f32 %v4286, 2.0
        %v4415 = vadd.f32 %v4287, 2.0
        %v4416 = vadd.f32 %v4288, 2.0
        %v4417 = vadd.f32 %v4289, 2.0
        %v4418 = vadd.f32 %v4290, 2.0
        %v4419 = vadd.f32 %v4291, 2.0
        %v4420 = vadd.f32 %v4292, 2.0
        %v4421 = vadd.f32 %v4293, 2.0
        %v4422 = vadd.f32 %v4294, 2.0
        %v4423 = vadd.f32 %v4295, 2.0
        %v4424 = vadd.f32 %v4296, 2.0
        %v4425 = vadd.f32 %v4297, 2.0
        %v4426 = vadd.f32 %v4298, 2.0
        %v4427 = vadd.f32 %v4299, 2.0
        %v4428 = vadd.f32 %v4300, 2.0
        %v4429 = vadd.f32 %v4301, 2.0
        %v4430 = vadd.f32 %v4302, 2.0
        %v4431 = vadd.f32 %v4303, 2.0
        %v4432 = vadd.f32 %v4304, 2.0
        %v4433 = vadd.f32 %v4305, 2.0
        %v4434 = vadd.f32 %v4306, 2.0
        %v4435 = vadd.f32 %v4307, 2.0
        %v4436 = vadd.f32 %v4308, 2.0
        %v4437 = vadd.f32 %v4309, 2.0
        %v4438 = vadd.f32 %v4310, 2.0
        %v4439 = vadd.f32 %v4311, 2.0
        %v4440 = vadd.f32 %v4312, 2.0
        %v4441 = vadd.f32 %v4313, 2.0
        %v4442 = vadd.f32 %v4314, 2.0
        %v4443 = vadd.f32 %v4315, 2.0
        %v4444 = vadd.f32 %v4316, 2.0
        %v4445 = vadd.f32 %v4317, 2.0
        %v4446 = vadd.f32 %v4318, 2.0
        %v4447 = vadd.f32 %v4319, 2.0
        %v4448 = vadd.f32 %v4320, 2.0
        %v4449 = vadd.f32 %v4321, 2.0
        %v4450 = vadd.f32 %v4322, 2.0
        %v4451 = vadd.f32 %v4323, 2.0
        %v4452 = vadd.f32 %v4324, 2.0
        %v4453 = vadd.f32 %v4325, 2.0
        %v4454 = vadd.f32 %v4326, 2.0
        %v4455 = vadd.f32 %v4327, 2.0
        %v4456 = vadd.f32 %v4328, 2.0
        %v4457 = vadd.f32 %v4329, 2.0
        %v4458 = vadd.f32 %v4330, 2.0
        %v4459 = vadd.f32 %v4331, 2.0
        %v4460 = vadd.f32 %v4332, 2.0
        %v4461 = vadd.f32 %v4333, 2.0
        %v4462 = vadd.f32 %v4334, 2.0
        %v4463 = vadd.f32 %v4335, 2.0
        %v4464 = vadd.f32 %v4336, 2.0
        %v4465 = vadd.f32 %v4337, 2.0
        %v4466 = vadd.f32 %v4338, 2.0
        %v4467 = vadd.f32 %v4339, 2.0
        %v4468 = vadd.f32 %v4340, 2.0
        %v4469 = vadd.f32 %v4341, 2.0
        %v4470 = vadd.f32 %v4342, 2.0
        %v4471 = vadd.f32 %v4343, 2.0
        %v4472 = vadd.f32 %v4344, 2.0
        %v4473 = vadd.f32 %v4345, 2.0
        %v4474 = vadd.f32 %v4346, 2.0
        %v4475 = vadd.f32 %v4347, 2.0
        %v4476 = vrcp.pop %v4412
        %v4477 = vrcp.pop %v4413
        %v4478 = vrcp.pop %v4414
        %v4479 = vrcp.pop %v4415
        %v4480 = vrcp.pop %v4416
        %v4481 = vrcp.pop %v4417
        %v4482 = vrcp.pop %v4418
        %v4483 = vrcp.pop %v4419
        %v4484 = vrcp.pop %v4420
        %v4485 = vrcp.pop %v4421
        %v4486 = vrcp.pop %v4422
        %v4487 = vrcp.pop %v4423
        %v4488 = vrcp.pop %v4424
        %v4489 = vrcp.pop %v4425
        %v4490 = vrcp.pop %v4426
        %v4491 = vrcp.pop %v4427
        %v4492 = vrcp.pop %v4428
        %v4493 = vrcp.pop %v4429
        %v4494 = vrcp.pop %v4430
        %v4495 = vrcp.pop %v4431
        %v4496 = vrcp.pop %v4432
        %v4497 = vrcp.pop %v4433
        %v4498 = vrcp.pop %v4434
        %v4499 = vrcp.pop %v4435
        %v4500 = vrcp.pop %v4436
        %v4501 = vrcp.pop %v4437
        %v4502 = vrcp.pop %v4438
        %v4503 = vrcp.pop %v4439
        %v4504 = vrcp.pop %v4440
        %v4505 = vrcp.pop %v4441
        %v4506 = vrcp.pop %v4442
        %v4507 = vrcp.pop %v4443
        %v4508 = vrcp.pop %v4444
        %v4509 = vrcp.pop %v4445
        %v4510 = vrcp.pop %v4446
        %v4511 = vrcp.pop %v4447
        %v4512 = vrcp.pop %v4448
        %v4513 = vrcp.pop %v4449
        %v4514 = vrcp.pop %v4450
        %v4515 = vrcp.pop %v4451
        %v4516 = vrcp.pop %v4452
        %v4517 = vrcp.pop %v4453
        %v4518 = vrcp.pop %v4454
        %v4519 = vrcp.pop %v4455
        %v4520 = vrcp.pop %v4456
        %v4521 = vrcp.pop %v4457
        %v4522 = vrcp.pop %v4458
        %v4523 = vrcp.pop %v4459
        %v4524 = vrcp.pop %v4460
        %v4525 = vrcp.pop %v4461
        %v4526 = vrcp.pop %v4462
        %v4527 = vrcp.pop %v4463
        %v4528 = vrcp.pop %v4464
        %v4529 = vrcp.pop %v4465
        %v4530 = vrcp.pop %v4466
        %v4531 = vrcp.pop %v4467
        %v4532 = vrcp.pop %v4468
        %v4533 = vrcp.pop %v4469
        %v4534 = vrcp.pop %v4470
        %v4535 = vrcp.pop %v4471
        %v4536 = vrcp.pop %v4472
        %v4537 = vrcp.pop %v4473
        %v4538 = vrcp.pop %v4474
        %v4539 = vrcp.pop %v4475
        %v4540 = vmul.f32 %v4348, %v4476
        %v4541 = vmul.f32 %v4349, %v4477
        %v4542 = vmul.f32 %v4350, %v4478
        %v4543 = vmul.f32 %v4351, %v4479
        %v4544 = vmul.f32 %v4352, %v4480
        %v4545 = vmul.f32 %v4353, %v4481
        %v4546 = vmul.f32 %v4354, %v4482
        %v4547 = vmul.f32 %v4355, %v4483
        %v4548 = vmul.f32 %v4356, %v4484
        %v4549 = vmul.f32 %v4357, %v4485
        %v4550 = vmul.f32 %v4358, %v4486
        %v4551 = vmul.f32 %v4359, %v4487
        %v4552 = vmul.f32 %v4360, %v4488
        %v4553 = vmul.f32 %v4361, %v4489
        %v4554 = vmul.f32 %v4362, %v4490
        %v4555 = vmul.f32 %v4363, %v4491
        %v4556 = vmul.f32 %v4364, %v4492
        %v4557 = vmul.f32 %v4365, %v4493
        %v4558 = vmul.f32 %v4366, %v4494
        %v4559 = vmul.f32 %v4367, %v4495
        %v4560 = vmul.f32 %v4368, %v4496
        %v4561 = vmul.f32 %v4369, %v4497
        %v4562 = vmul.f32 %v4370, %v4498
        %v4563 = vmul.f32 %v4371, %v4499
        %v4564 = vmul.f32 %v4372, %v4500
        %v4565 = vmul.f32 %v4373, %v4501
        %v4566 = vmul.f32 %v4374, %v4502
        %v4567 = vmul.f32 %v4375, %v4503
        %v4568 = vmul.f32 %v4376, %v4504
        %v4569 = vmul.f32 %v4377, %v4505
        %v4570 = vmul.f32 %v4378, %v4506
        %v4571 = vmul.f32 %v4379, %v4507
        %v4572 = vmul.f32 %v4380, %v4508
        %v4573 = vmul.f32 %v4381, %v4509
        %v4574 = vmul.f32 %v4382, %v4510
        %v4575 = vmul.f32 %v4383, %v4511
        %v4576 = vmul.f32 %v4384, %v4512
        %v4577 = vmul.f32 %v4385, %v4513
        %v4578 = vmul.f32 %v4386, %v4514
        %v4579 = vmul.f32 %v4387, %v4515
        %v4580 = vmul.f32 %v4388, %v4516
        %v4581 = vmul.f32 %v4389, %v4517
        %v4582 = vmul.f32 %v4390, %v4518
        %v4583 = vmul.f32 %v4391, %v4519
        %v4584 = vmul.f32 %v4392, %v4520
        %v4585 = vmul.f32 %v4393, %v4521
        %v4586 = vmul.f32 %v4394, %v4522
        %v4587 = vmul.f32 %v4395, %v4523
        %v4588 = vmul.f32 %v4396, %v4524
        %v4589 = vmul.f32 %v4397, %v4525
        %v4590 = vmul.f32 %v4398, %v4526
        %v4591 = vmul.f32 %v4399, %v4527
        %v4592 = vmul.f32 %v4400, %v4528
        %v4593 = vmul.f32 %v4401, %v4529
        %v4594 = vmul.f32 %v4402, %v4530
        %v4595 = vmul.f32 %v4403, %v4531
        %v4596 = vmul.f32 %v4404, %v4532
        %v4597 = vmul.f32 %v4405, %v4533
        %v4598 = vmul.f32 %v4406, %v4534
        %v4599 = vmul.f32 %v4407, %v4535
        %v4600 = vmul.f32 %v4408, %v4536
        %v4601 = vmul.f32 %v4409, %v4537
        %v4602 = vmul.f32 %v4410, %v4538
        %v4603 = vmul.f32 %v4411, %v4539
        %vm4604 = vcmp.gt.f32.partialorder %v3838, 20.0
        %vm4605 = vcmp.gt.f32.partialorder %v3841, 20.0
        %vm4606 = vcmp.gt.f32.partialorder %v3846, 20.0
        %vm4607 = vcmp.gt.f32.partialorder %v3849, 20.0
        %vm4608 = vcmp.gt.f32.partialorder %v3854, 20.0
        %vm4609 = vcmp.gt.f32.partialorder %v3857, 20.0
        %vm4610 = vcmp.gt.f32.partialorder %v3862, 20.0
        %vm4611 = vcmp.gt.f32.partialorder %v3865, 20.0
        %vm4612 = vcmp.gt.f32.partialorder %v3870, 20.0
        %vm4613 = vcmp.gt.f32.partialorder %v3873, 20.0
        %vm4614 = vcmp.gt.f32.partialorder %v3878, 20.0
        %vm4615 = vcmp.gt.f32.partialorder %v3881, 20.0
        %vm4616 = vcmp.gt.f32.partialorder %v3886, 20.0
        %vm4617 = vcmp.gt.f32.partialorder %v3889, 20.0
        %vm4618 = vcmp.gt.f32.partialorder %v3894, 20.0
        %vm4619 = vcmp.gt.f32.partialorder %v3897, 20.0
        %vm4620 = vcmp.gt.f32.partialorder %v3902, 20.0
        %vm4621 = vcmp.gt.f32.partialorder %v3905, 20.0
        %vm4622 = vcmp.gt.f32.partialorder %v3910, 20.0
        %vm4623 = vcmp.gt.f32.partialorder %v3913, 20.0
        %vm4624 = vcmp.gt.f32.partialorder %v3918, 20.0
        %vm4625 = vcmp.gt.f32.partialorder %v3921, 20.0
        %vm4626 = vcmp.gt.f32.partialorder %v3926, 20.0
        %vm4627 = vcmp.gt.f32.partialorder %v3929, 20.0
        %vm4628 = vcmp.gt.f32.partialorder %v3934, 20.0
        %vm4629 = vcmp.gt.f32.partialorder %v3937, 20.0
        %vm4630 = vcmp.gt.f32.partialorder %v3942, 20.0
        %vm4631 = vcmp.gt.f32.partialorder %v3945, 20.0
        %vm4632 = vcmp.gt.f32.partialorder %v3950, 20.0
        %vm4633 = vcmp.gt.f32.partialorder %v3953, 20.0
        %vm4634 = vcmp.gt.f32.partialorder %v3958, 20.0
        %vm4635 = vcmp.gt.f32.partialorder %v3961, 20.0
        %vm4636 = vcmp.gt.f32.partialorder %v3966, 20.0
        %vm4637 = vcmp.gt.f32.partialorder %v3969, 20.0
        %vm4638 = vcmp.gt.f32.partialorder %v3974, 20.0
        %vm4639 = vcmp.gt.f32.partialorder %v3977, 20.0
        %vm4640 = vcmp.gt.f32.partialorder %v3982, 20.0
        %vm4641 = vcmp.gt.f32.partialorder %v3985, 20.0
        %vm4642 = vcmp.gt.f32.partialorder %v3990, 20.0
        %vm4643 = vcmp.gt.f32.partialorder %v3993, 20.0
        %vm4644 = vcmp.gt.f32.partialorder %v3998, 20.0
        %vm4645 = vcmp.gt.f32.partialorder %v4001, 20.0
        %vm4646 = vcmp.gt.f32.partialorder %v4006, 20.0
        %vm4647 = vcmp.gt.f32.partialorder %v4009, 20.0
        %vm4648 = vcmp.gt.f32.partialorder %v4014, 20.0
        %vm4649 = vcmp.gt.f32.partialorder %v4017, 20.0
        %vm4650 = vcmp.gt.f32.partialorder %v4022, 20.0
        %vm4651 = vcmp.gt.f32.partialorder %v4025, 20.0
        %vm4652 = vcmp.gt.f32.partialorder %v4030, 20.0
        %vm4653 = vcmp.gt.f32.partialorder %v4033, 20.0
        %vm4654 = vcmp.gt.f32.partialorder %v4038, 20.0
        %vm4655 = vcmp.gt.f32.partialorder %v4041, 20.0
        %vm4656 = vcmp.gt.f32.partialorder %v4046, 20.0
        %vm4657 = vcmp.gt.f32.partialorder %v4049, 20.0
        %vm4658 = vcmp.gt.f32.partialorder %v4054, 20.0
        %vm4659 = vcmp.gt.f32.partialorder %v4057, 20.0
        %vm4660 = vcmp.gt.f32.partialorder %v4062, 20.0
        %vm4661 = vcmp.gt.f32.partialorder %v4065, 20.0
        %vm4662 = vcmp.gt.f32.partialorder %v4070, 20.0
        %vm4663 = vcmp.gt.f32.partialorder %v4073, 20.0
        %vm4664 = vcmp.gt.f32.partialorder %v4078, 20.0
        %vm4665 = vcmp.gt.f32.partialorder %v4081, 20.0
        %vm4666 = vcmp.gt.f32.partialorder %v4086, 20.0
        %vm4667 = vcmp.gt.f32.partialorder %v4089, 20.0
        %v4668 = vsel %vm4604, %v3838, %v4540
        %v4669 = vsel %vm4605, %v3841, %v4541
        %v4670 = vsel %vm4606, %v3846, %v4542
        %v4671 = vsel %vm4607, %v3849, %v4543
        %v4672 = vsel %vm4608, %v3854, %v4544
        %v4673 = vsel %vm4609, %v3857, %v4545
        %v4674 = vsel %vm4610, %v3862, %v4546
        %v4675 = vsel %vm4611, %v3865, %v4547
        %v4676 = vsel %vm4612, %v3870, %v4548
        %v4677 = vsel %vm4613, %v3873, %v4549
        %v4678 = vsel %vm4614, %v3878, %v4550
        %v4679 = vsel %vm4615, %v3881, %v4551
        %v4680 = vsel %vm4616, %v3886, %v4552
        %v4681 = vsel %vm4617, %v3889, %v4553
        %v4682 = vsel %vm4618, %v3894, %v4554
        %v4683 = vsel %vm4619, %v3897, %v4555
        %v4684 = vsel %vm4620, %v3902, %v4556
        %v4685 = vsel %vm4621, %v3905, %v4557
        %v4686 = vsel %vm4622, %v3910, %v4558
        %v4687 = vsel %vm4623, %v3913, %v4559
        %v4688 = vsel %vm4624, %v3918, %v4560
        %v4689 = vsel %vm4625, %v3921, %v4561
        %v4690 = vsel %vm4626, %v3926, %v4562
        %v4691 = vsel %vm4627, %v3929, %v4563
        %v4692 = vsel %vm4628, %v3934, %v4564
        %v4693 = vsel %vm4629, %v3937, %v4565
        %v4694 = vsel %vm4630, %v3942, %v4566
        %v4695 = vsel %vm4631, %v3945, %v4567
        %v4696 = vsel %vm4632, %v3950, %v4568
        %v4697 = vsel %vm4633, %v3953, %v4569
        %v4698 = vsel %vm4634, %v3958, %v4570
        %v4699 = vsel %vm4635, %v3961, %v4571
        %v4700 = vsel %vm4636, %v3966, %v4572
        %v4701 = vsel %vm4637, %v3969, %v4573
        %v4702 = vsel %vm4638, %v3974, %v4574
        %v4703 = vsel %vm4639, %v3977, %v4575
        %v4704 = vsel %vm4640, %v3982, %v4576
        %v4705 = vsel %vm4641, %v3985, %v4577
        %v4706 = vsel %vm4642, %v3990, %v4578
        %v4707 = vsel %vm4643, %v3993, %v4579
        %v4708 = vsel %vm4644, %v3998, %v4580
        %v4709 = vsel %vm4645, %v4001, %v4581
        %v4710 = vsel %vm4646, %v4006, %v4582
        %v4711 = vsel %vm4647, %v4009, %v4583
        %v4712 = vsel %vm4648, %v4014, %v4584
        %v4713 = vsel %vm4649, %v4017, %v4585
        %v4714 = vsel %vm4650, %v4022, %v4586
        %v4715 = vsel %vm4651, %v4025, %v4587
        %v4716 = vsel %vm4652, %v4030, %v4588
        %v4717 = vsel %vm4653, %v4033, %v4589
        %v4718 = vsel %vm4654, %v4038, %v4590
        %v4719 = vsel %vm4655, %v4041, %v4591
        %v4720 = vsel %vm4656, %v4046, %v4592
        %v4721 = vsel %vm4657, %v4049, %v4593
        %v4722 = vsel %vm4658, %v4054, %v4594
        %v4723 = vsel %vm4659, %v4057, %v4595
        %v4724 = vsel %vm4660, %v4062, %v4596
        %v4725 = vsel %vm4661, %v4065, %v4597
        %v4726 = vsel %vm4662, %v4070, %v4598
        %v4727 = vsel %vm4663, %v4073, %v4599
        %v4728 = vsel %vm4664, %v4078, %v4600
        %v4729 = vsel %vm4665, %v4081, %v4601
        %v4730 = vsel %vm4666, %v4086, %v4602
        %v4731 = vsel %vm4667, %v4089, %v4603
        %4732 = vxpose.xlu0.b32.start [1/16] %v4668, 128
        %4733 = vxpose.xlu0.b32.cont [2/16] %v4669, 128
        %4734 = vxpose.xlu0.b32.cont [3/16] %v4670, 128
        %4735 = vxpose.xlu0.b32.cont [4/16] %v4671, 128
        %4736 = vxpose.xlu0.b32.cont [5/16] %v4672, 128
        %4737 = vxpose.xlu0.b32.cont [6/16] %v4673, 128
        %4738 = vxpose.xlu0.b32.cont [7/16] %v4674, 128
        %4739 = vxpose.xlu0.b32.cont [8/16] %v4675, 128
        %4740 = vxpose.xlu0.b32.cont [9/16] %v4676, 128
        %4741 = vxpose.xlu0.b32.cont [10/16] %v4677, 128
        %4742 = vxpose.xlu0.b32.cont [11/16] %v4678, 128
        %4743 = vxpose.xlu0.b32.cont [12/16] %v4679, 128
        %4744 = vxpose.xlu0.b32.cont [13/16] %v4680, 128
        %4745 = vxpose.xlu0.b32.cont [14/16] %v4681, 128
        %4746 = vxpose.xlu0.b32.cont [15/16] %v4682, 128
        %4747 = vxpose.xlu0.b32.end [16/16] %v4683, 128
        %v4748 = vpop.trf.xlu0
        %v4749 = vpop.trf.xlu0
        %v4750 = vpop.trf.xlu0
        %v4751 = vpop.trf.xlu0
        %v4752 = vpop.trf.xlu0
        %v4753 = vpop.trf.xlu0
        %v4754 = vpop.trf.xlu0
        %v4755 = vpop.trf.xlu0
        %v4756 = vpop.trf.xlu0
        %v4757 = vpop.trf.xlu0
        %v4758 = vpop.trf.xlu0
        %v4759 = vpop.trf.xlu0
        %v4760 = vpop.trf.xlu0
        %v4761 = vpop.trf.xlu0
        %v4762 = vpop.trf.xlu0
        %v4763 = vpop.trf.xlu0
        %4764 = vxpose.xlu0.b32.start [1/16] %v4684, 128
        %4765 = vxpose.xlu0.b32.cont [2/16] %v4685, 128
        %4766 = vxpose.xlu0.b32.cont [3/16] %v4686, 128
        %4767 = vxpose.xlu0.b32.cont [4/16] %v4687, 128
        %4768 = vxpose.xlu0.b32.cont [5/16] %v4688, 128
        %4769 = vxpose.xlu0.b32.cont [6/16] %v4689, 128
        %4770 = vxpose.xlu0.b32.cont [7/16] %v4690, 128
        %4771 = vxpose.xlu0.b32.cont [8/16] %v4691, 128
        %4772 = vxpose.xlu0.b32.cont [9/16] %v4692, 128
        %4773 = vxpose.xlu0.b32.cont [10/16] %v4693, 128
        %4774 = vxpose.xlu0.b32.cont [11/16] %v4694, 128
        %4775 = vxpose.xlu0.b32.cont [12/16] %v4695, 128
        %4776 = vxpose.xlu0.b32.cont [13/16] %v4696, 128
        %4777 = vxpose.xlu0.b32.cont [14/16] %v4697, 128
        %4778 = vxpose.xlu0.b32.cont [15/16] %v4698, 128
        %4779 = vxpose.xlu0.b32.end [16/16] %v4699, 128
        %v4780 = vpop.trf.xlu0
        %v4781 = vpop.trf.xlu0
        %v4782 = vpop.trf.xlu0
        %v4783 = vpop.trf.xlu0
        %v4784 = vpop.trf.xlu0
        %v4785 = vpop.trf.xlu0
        %v4786 = vpop.trf.xlu0
        %v4787 = vpop.trf.xlu0
        %v4788 = vpop.trf.xlu0
        %v4789 = vpop.trf.xlu0
        %v4790 = vpop.trf.xlu0
        %v4791 = vpop.trf.xlu0
        %v4792 = vpop.trf.xlu0
        %v4793 = vpop.trf.xlu0
        %v4794 = vpop.trf.xlu0
        %v4795 = vpop.trf.xlu0
        %4796 = vxpose.xlu0.b32.start [1/16] %v4700, 128
        %4797 = vxpose.xlu0.b32.cont [2/16] %v4701, 128
        %4798 = vxpose.xlu0.b32.cont [3/16] %v4702, 128
        %4799 = vxpose.xlu0.b32.cont [4/16] %v4703, 128
        %4800 = vxpose.xlu0.b32.cont [5/16] %v4704, 128
        %4801 = vxpose.xlu0.b32.cont [6/16] %v4705, 128
        %4802 = vxpose.xlu0.b32.cont [7/16] %v4706, 128
        %4803 = vxpose.xlu0.b32.cont [8/16] %v4707, 128
        %4804 = vxpose.xlu0.b32.cont [9/16] %v4708, 128
        %4805 = vxpose.xlu0.b32.cont [10/16] %v4709, 128
        %4806 = vxpose.xlu0.b32.cont [11/16] %v4710, 128
        %4807 = vxpose.xlu0.b32.cont [12/16] %v4711, 128
        %4808 = vxpose.xlu0.b32.cont [13/16] %v4712, 128
        %4809 = vxpose.xlu0.b32.cont [14/16] %v4713, 128
        %4810 = vxpose.xlu0.b32.cont [15/16] %v4714, 128
        %4811 = vxpose.xlu0.b32.end [16/16] %v4715, 128
        %v4812 = vpop.trf.xlu0
        %v4813 = vpop.trf.xlu0
        %v4814 = vpop.trf.xlu0
        %v4815 = vpop.trf.xlu0
        %v4816 = vpop.trf.xlu0
        %v4817 = vpop.trf.xlu0
        %v4818 = vpop.trf.xlu0
        %v4819 = vpop.trf.xlu0
        %v4820 = vpop.trf.xlu0
        %v4821 = vpop.trf.xlu0
        %v4822 = vpop.trf.xlu0
        %v4823 = vpop.trf.xlu0
        %v4824 = vpop.trf.xlu0
        %v4825 = vpop.trf.xlu0
        %v4826 = vpop.trf.xlu0
        %v4827 = vpop.trf.xlu0
        %4828 = vxpose.xlu0.b32.start [1/16] %v4716, 128
        %4829 = vxpose.xlu0.b32.cont [2/16] %v4717, 128
        %4830 = vxpose.xlu0.b32.cont [3/16] %v4718, 128
        %4831 = vxpose.xlu0.b32.cont [4/16] %v4719, 128
        %4832 = vxpose.xlu0.b32.cont [5/16] %v4720, 128
        %4833 = vxpose.xlu0.b32.cont [6/16] %v4721, 128
        %4834 = vxpose.xlu0.b32.cont [7/16] %v4722, 128
        %4835 = vxpose.xlu0.b32.cont [8/16] %v4723, 128
        %4836 = vxpose.xlu0.b32.cont [9/16] %v4724, 128
        %4837 = vxpose.xlu0.b32.cont [10/16] %v4725, 128
        %4838 = vxpose.xlu0.b32.cont [11/16] %v4726, 128
        %4839 = vxpose.xlu0.b32.cont [12/16] %v4727, 128
        %4840 = vxpose.xlu0.b32.cont [13/16] %v4728, 128
        %4841 = vxpose.xlu0.b32.cont [14/16] %v4729, 128
        %4842 = vxpose.xlu0.b32.cont [15/16] %v4730, 128
        %4843 = vxpose.xlu0.b32.end [16/16] %v4731, 128
        %v4844 = vpop.trf.xlu0
        %v4845 = vpop.trf.xlu0
        %v4846 = vpop.trf.xlu0
        %v4847 = vpop.trf.xlu0
        %v4848 = vpop.trf.xlu0
        %v4849 = vpop.trf.xlu0
        %v4850 = vpop.trf.xlu0
        %v4851 = vpop.trf.xlu0
        %v4852 = vpop.trf.xlu0
        %v4853 = vpop.trf.xlu0
        %v4854 = vpop.trf.xlu0
        %v4855 = vpop.trf.xlu0
        %v4856 = vpop.trf.xlu0
        %v4857 = vpop.trf.xlu0
        %v4858 = vpop.trf.xlu0
        %v4859 = vpop.trf.xlu0
        %v4860 = vld [vmem:[%s11] sm:$0xf]
        %v4861 = vld [vmem:[%s11 + $0x4] sm:$0xf]
        %v4862 = vunpack.c.l.bf16 %v4860
        %v4863 = vunpack.c.l.bf16 %v4861
        %4865 = vset.pattern.permute.xlu0 0
        %4866 = vperm.xlu0 %4865, %v4862
        %v4867 = vpop.permute.xlu0 %4866
        %4870 = vset.pattern.permute.xlu0 0
        %4871 = vperm.xlu0 %4870, %v4863
        %v4872 = vpop.permute.xlu0 %4871
        %v4874 = vmul.f32 %v4748, %v4867
        %v4875 = vmul.f32 %v4780, %v4867
        %v4876 = vmul.f32 %v4812, %v4867
        %v4877 = vmul.f32 %v4844, %v4867
        %v4878 = vmul.f32 %v4749, %v4872
        %v4879 = vmul.f32 %v4781, %v4872
        %v4880 = vmul.f32 %v4813, %v4872
        %v4881 = vmul.f32 %v4845, %v4872
        %v4882 = vadd.f32 %v4874, %v4878
        %v4883 = vrot.slane %v4882, 4
        %v4884 = vadd.f32 %v4882, %v4883
        %v4885 = vrot.slane %v4884, 2
        %v4886 = vadd.f32 %v4884, %v4885
        %v4887 = vrot.slane %v4886, 1
        %v4888 = vadd.f32 %v4886, %v4887
        %v4889 = vadd.f32 %v4875, %v4879
        %v4890 = vrot.slane %v4889, 4
        %v4891 = vadd.f32 %v4889, %v4890
        %v4892 = vrot.slane %v4891, 2
        %v4893 = vadd.f32 %v4891, %v4892
        %v4894 = vrot.slane %v4893, 1
        %v4895 = vadd.f32 %v4893, %v4894
        %v4896 = vadd.f32 %v4876, %v4880
        %v4897 = vrot.slane %v4896, 4
        %v4898 = vadd.f32 %v4896, %v4897
        %v4899 = vrot.slane %v4898, 2
        %v4900 = vadd.f32 %v4898, %v4899
        %v4901 = vrot.slane %v4900, 1
        %v4902 = vadd.f32 %v4900, %v4901
        %v4903 = vadd.f32 %v4877, %v4881
        %v4904 = vrot.slane %v4903, 4
        %v4905 = vadd.f32 %v4903, %v4904
        %v4906 = vrot.slane %v4905, 2
        %v4907 = vadd.f32 %v4905, %v4906
        %v4908 = vrot.slane %v4907, 1
        %v4909 = vadd.f32 %v4907, %v4908
        %v4910 = vld [vmem:[#allocation2] sm:$0x1]
        %4912 = vset.pattern.permute.xlu0 0
        %4913 = vperm.xlu0 %4912, %v4910
        %v4914 = vpop.permute.xlu0 %4913
        %v4916 = vlaneseq
        %v4917 = vshrl.u32 %v4916, 7
        %v4918 = vsub.s32 0, %v4917
        %v4919 = vrot.slane %v4914, %v4918
        %v4920 = vadd.f32 %v4888, %v4919
        %v4921 = vadd.f32 %v4895, %v4919
        %v4922 = vadd.f32 %v4902, %v4919
        %v4923 = vadd.f32 %v4909, %v4919
        %v4928 = vcombine.low %v4920, %v4921
        %v4929 = vcombine.low %v4922, %v4923
        %v4931 = vunpack.c.l.s4 1966171168
        %v4932 = vunpack.c.0.s8 %v4931
        %v4933 = vlaneseq
        %v4934 = vshrl.u32 %v4933, 7
        %v4935 = vsub.s32 %v4932, %v4934
        %v4936 = vrot.slane %v4928, %v4935
        %v4938 = vunpack.c.l.s4 1966171168
        %v4939 = vunpack.c.0.s8 %v4938
        %v4940 = vlaneseq
        %v4941 = vshrl.u32 %v4940, 7
        %v4942 = vsub.s32 %v4939, %v4941
        %v4943 = vrot.slane %v4929, %v4942
        %v4944 = vcombine.low %v4936, %v4943
        %v4946 = vunpack.c.l.s4 1966171168
        %v4947 = vunpack.c.0.s8 %v4946
        %v4948 = vlaneseq
        %v4949 = vshrl.u32 %v4948, 7
        %v4950 = vsub.s32 %v4947, %v4949
        %v4951 = vrot.slane %v4944, %v4950
        %v4953 = vlaneseq
        %vm4954 = vcmp.ge.s32.totalorder %v4953, 0
        %vm4955 = vcmp.lt.s32.totalorder %v4953, 512
        %vm4956 = vmand %vm4954, %vm4955
        %4957 = vst.msk [vmem:[%s436] sm:$0xf] %vm4956, %v4951
        %s4958 = sand.u32 %s315, 1
        %s4959 = scalar_lea.sflag [#allocation4], %s4958
        %s4960 = sand.u32 %s315, 1
        %s4961 = smul.addr %s4960, 4
        %s4962 = scalar_lea.vmem [#allocation3], %s4961
        // Predicated region
        $region73: #{tpu_custom_call.1} parent=71 // pred_check
          %p4963 = pneg %p325
        $region74: #{tpu_custom_call.1} parent=71 // pred_check_branch
          %4965 = sbr.rel (%p4963) target = $region76
        $region75: #{tpu_custom_call.1} parent=71 // pred_region
          %s4967 = ssub.s32 64, 64
          %4968 = vsyncadd %s4959, %s4967
          %s4969 = smul.addr %s29, 4
          %s4970 = smul.addr %s4969, 16
          %s4971 = scalar_lea.hbm %s13, %s4970
          %s4973 = sshll.u32 %s4962, 4
          %s4974 = int_to_ptr.vmem [resolvable:$true] %s4973
          %4976 = dma.vmem_to_hbm [thread:$0]  %s4974, 64, %s4971, %s4959
        $region76: #{tpu_custom_call.1} parent=71 // pred_fallthru
          _
      $region72: #{tpu_custom_call.1} parent=5 // pred_fallthru
        _
      %p4977 = scmp.le.s32.totalorder 2, %s24
      // Predicated region
      $region77: #{tpu_custom_call.1} parent=5 // pred_check
        %p4978 = pneg %p4977
      $region78: #{tpu_custom_call.1} parent=5 // pred_check_branch
        %4980 = sbr.rel (%p4978) target = $region80
      $region79: #{tpu_custom_call.1} parent=5 // pred_region
        %s4981 = ssub.s32 %s24, 2
        // Predicated region
        $region81: #{tpu_custom_call.1} parent=79 // pred_check
          %p4982 = pneg %p331
        $region82: #{tpu_custom_call.1} parent=79 // pred_check_branch
          %4984 = sbr.rel (%p4982) target = $region84
        $region83: #{tpu_custom_call.1} parent=79 // pred_region
          %s4985 = sand.u32 %s316, 1
          %s4986 = scalar_lea.sflag [#allocation4], %s4985
          %s4987 = sand.u32 %s316, 1
          %s4988 = smul.addr %s4987, 4
          %s4989 = scalar_lea.vmem [#allocation3], %s4988
          %4990 = dma.done %s4986, 64
        $region84: #{tpu_custom_call.1} parent=79 // pred_fallthru
          _
      $region80: #{tpu_custom_call.1} parent=5 // pred_fallthru
        _
    $region6: #{tpu_custom_call.1} parent=1 // loop_footer
      %s28 = sadd.s32 1, %s24
    $region7: #{tpu_custom_call.1} parent=1 // loop_footer_branch
      %23 = sbr.rel target = $region3
    $region8: #{tpu_custom_call.1} parent=1 // loop_exit
      _
    %4991 = vsyncpa [#allocation4], 1
    %s4992 = scalar_lea.sflag [#allocation4], 1
    %4993 = vsyncpa %s4992, 1

</llo_original>
